<compile_context>
chip_gen: v6e
topology: v6e:2x2x1
jax: 0.10.0
libtpu: 0.0.40
codegen_flags: <defaults>
</compile_context>

<pallas_src>
import functools

import jax
import jax.numpy as jnp
from jax.experimental import pallas as pl
from jax.experimental.pallas import tpu as pltpu


def _round_up(a, b):
    return (a + b - 1) // b * b


def _cdiv(a, b):
    return -(-a // b)


def _pick_batch_tile(batch):
    """Batch tile: big (MXU M-utilization) but capped (vreg/VMEM comfort);
    >=2 tiles when possible so v7x's two TensorCores both get work."""
    if batch <= 8:
        return 8
    return min(128, _round_up(_cdiv(batch, 2), 8))


# ----------------------------------------------------------------------------
# Kernel
# ----------------------------------------------------------------------------

def chord_kernel(T, B, F, H1, H2, OUTP, offs,
                 x_ref, w_ref, b_ref, out_ref,
                 gx1_ref, ys1_ref, ys2_ref, ys3_ref):
    f32, bf16 = jnp.float32, jnp.bfloat16

    # ---- unpack the packed parameter slabs (static slices) ------------------
    w1_ih = w_ref[pl.ds(offs["w1_ih"], F), pl.ds(0, 4 * H1)]     # (F, 4H1) bf16
    w1_hh = w_ref[pl.ds(offs["w1_hh"], H1), pl.ds(0, 4 * H1)]    # (H1, 4H1)
    w2 = w_ref[pl.ds(offs["w2"], H1 + H2), pl.ds(0, 4 * H2)]     # (H1+H2, 4H2)
    w3 = w_ref[pl.ds(offs["w3"], H2 + H1), pl.ds(0, 4 * H1)]     # (H2+H1, 4H1)
    w_hd = w_ref[pl.ds(offs["w_hd"], H1), pl.ds(0, OUTP)]        # (H1, OUTP)
    b1 = b_ref[pl.ds(0, 1), pl.ds(0, 4 * H1)]                    # (1, 4H1) f32
    b2 = b_ref[pl.ds(1, 1), pl.ds(0, 4 * H2)]
    b3 = b_ref[pl.ds(2, 1), pl.ds(0, 4 * H1)]
    b_hd = b_ref[pl.ds(3, 1), pl.ds(0, OUTP)]

    def cell(gates, c, H):
        # gate order is (i, f, o, g): one sigmoid over 3H lanes + one tanh.
        sig = jax.nn.sigmoid(gates[:, :3 * H])
        i_g = sig[:, :H]
        f_g = sig[:, H:2 * H]
        o_g = sig[:, 2 * H:3 * H]
        g_g = jnp.tanh(gates[:, 3 * H:])
        c_new = f_g * c + i_g * g_g
        h_new = o_g * jnp.tanh(c_new)
        return h_new, c_new

    # ---- layer-1 input projection hoisted out of the recurrence --------------
    x_flat = x_ref[...].reshape(T * B, F)                         # bf16, time-major
    gx1 = jnp.dot(x_flat, w1_ih, preferred_element_type=f32) + b1
    gx1_ref[...] = gx1.reshape(T, B, 4 * H1)

    h1 = jnp.zeros((B, H1), f32); c1 = jnp.zeros((B, H1), f32)
    h2 = jnp.zeros((B, H2), f32); c2 = jnp.zeros((B, H2), f32)
    h3 = jnp.zeros((B, H1), f32); c3 = jnp.zeros((B, H1), f32)

    # ---- wavefront over the three stacked recurrences ------------------------
    # step s: layer1 t=s, layer2 t=s-1, layer3 t=s-2.  The three blocks in one
    # step have no data dependencies on each other, so the LLO scheduler can
    # overlap their MXU pushes / EUP sigmoids.  T is small and static -> fully
    # unrolled; handoffs go through the (T, B, H) VMEM scratches (leading-dim
    # indexing, bounded liveness).
    for s in range(T + 2):
        if s < T:                                   # layer 1, t = s
            g1 = gx1_ref[s] + jnp.dot(h1.astype(bf16), w1_hh,
                                      preferred_element_type=f32)
            h1, c1 = cell(g1, c1, H1)
            ys1_ref[s] = h1                          # dropout1 = identity
        if 1 <= s < T + 1:                          # layer 2, t = s - 1
            t = s - 1
            xin = jnp.concatenate([ys1_ref[t], h2], axis=-1).astype(bf16)
            g2 = jnp.dot(xin, w2, preferred_element_type=f32) + b2
            h2, c2 = cell(g2, c2, H2)
            ys2_ref[t] = h2                          # dropout2 = identity
        if 2 <= s < T + 2:                          # layer 3, t = s - 2
            t = s - 2
            xin = jnp.concatenate([ys2_ref[t], h3], axis=-1).astype(bf16)
            g3 = jnp.dot(xin, w3, preferred_element_type=f32) + b3
            h3, c3 = cell(g3, c3, H1)
            ys3_ref[t] = h3

    # ---- fused dense head: dense2(dropout3(dense1(.))) composed offline ------
    flat3 = ys3_ref[...].reshape(T * B, H1).astype(bf16)
    out = jnp.dot(flat3, w_hd, preferred_element_type=f32) + b_hd
    out_ref[...] = out.reshape(T, B, OUTP).astype(out_ref.dtype)


# ----------------------------------------------------------------------------
# Wrapper
# ----------------------------------------------------------------------------

def chord_forward(x, w_slab, b_slab, offs, hidden_dim1, hidden_dim2, output_dim):
    B, T, F = x.shape
    outp = _round_up(output_dim, 128)
    b_tile = _pick_batch_tile(B)
    b_pad = _round_up(B, b_tile)

    # Time-major + batch padding.  bf16 halves the copy / DMA bytes; padding is
    # a plain jnp.pad (no zeros + .at[].set round trip).
    xt = jnp.transpose(x.astype(jnp.bfloat16), (1, 0, 2))         # (T, B, F)
    if b_pad != B:
        xt = jnp.pad(xt, ((0, 0), (0, b_pad - B), (0, 0)))

    kernel = functools.partial(chord_kernel, T, b_tile, F,
                               hidden_dim1, hidden_dim2, outp, offs)
    out = pl.pallas_call(
        kernel,
        out_shape=jax.ShapeDtypeStruct((T, b_pad, outp), jnp.float32),
        grid_spec=pltpu.PrefetchScalarGridSpec(
            num_scalar_prefetch=0,
            grid=(b_pad // b_tile,),
            in_specs=[
                pl.BlockSpec((T, b_tile, F), lambda i: (0, i, 0)),
                pl.BlockSpec(w_slab.shape, lambda i: (0, 0)),   # resident weights
                pl.BlockSpec(b_slab.shape, lambda i: (0, 0)),   # resident biases
            ],
            out_specs=pl.BlockSpec((T, b_tile, outp), lambda i: (0, i, 0)),
            scratch_shapes=[
                pltpu.VMEM((T, b_tile, 4 * hidden_dim1), jnp.float32),  # gx1
                pltpu.VMEM((T, b_tile, hidden_dim1), jnp.float32),      # ys1
                pltpu.VMEM((T, b_tile, hidden_dim2), jnp.float32),      # ys2
                pltpu.VMEM((T, b_tile, hidden_dim1), jnp.float32),      # ys3
            ]),
        compiler_params=pltpu.CompilerParams(
            dimension_semantics=("parallel",)),
    )(xt, w_slab, b_slab)
    # back to batch-major, drop batch / output-lane padding
    return jnp.transpose(out, (1, 0, 2))[:B, :, :output_dim]


# ----------------------------------------------------------------------------
# Parameters: PyTorch layout / init, plus conversion to packed kernel slabs.
# ----------------------------------------------------------------------------

def init_torch_params(key, input_dim, h1, h2, output_dim):
    """PyTorch-layout, PyTorch-style uniform init (LSTM gate order i, f, g, o)."""
    def uni(k, shape, bound):
        return jax.random.uniform(k, shape, jnp.float32, -bound, bound)

    def lstm(k, in_dim, hid):
        k0, k1, k2, k3 = jax.random.split(k, 4)
        bd = 1.0 / float(hid) ** 0.5
        return (uni(k0, (4 * hid, in_dim), bd),   # weight_ih_l0
                uni(k1, (4 * hid, hid), bd),      # weight_hh_l0
                uni(k2, (4 * hid,), bd),          # bias_ih_l0
                uni(k3, (4 * hid,), bd))          # bias_hh_l0

    kl1, kl2, kl3, kd1, kd2 = jax.random.split(key, 5)
    l1 = lstm(kl1, input_dim, h1)
    l2 = lstm(kl2, h1, h2)
    l3 = lstm(kl3, h2, h1)
    kd1a, kd1b = jax.random.split(kd1)
    kd2a, kd2b = jax.random.split(kd2)
    bd1 = 1.0 / float(h1) ** 0.5
    bd2 = 1.0 / float(256) ** 0.5
    wd1 = uni(kd1a, (256, h1), bd1)
    b1 = uni(kd1b, (256,), bd1)
    wd2 = uni(kd2a, (output_dim, 256), bd2)
    b2 = uni(kd2b, (output_dim,), bd2)
    return (*l1, *l2, *l3, wd1, b1, wd2, b2)


def _gates_ifgo_to_ifog(a):
    """Permute last-axis gate blocks from (i, f, g, o) to (i, f, o, g)."""
    i, f, g, o = jnp.split(a, 4, axis=-1)
    return jnp.concatenate([i, f, o, g], axis=-1)


def to_kernel_params(tp, input_dim, h1, h2, output_dim):
    """Transpose / permute gates / fold biases, fuse [W_ih; W_hh] for layers
    2-3, compose dense2*dense1 in f32, and pack everything into one bf16
    weight slab + one f32 bias slab (static offsets -> 3 input DMAs total)."""
    (w_ih1, w_hh1, b_ih1, b_hh1,
     w_ih2, w_hh2, b_ih2, b_hh2,
     w_ih3, w_hh3, b_ih3, b_hh3,
     wd1, bd1, wd2, bd2) = [jnp.asarray(p, jnp.float32) for p in tp]

    def lstm(w_ih, w_hh, b_ih, b_hh):
        return (_gates_ifgo_to_ifog(w_ih.T),
                _gates_ifgo_to_ifog(w_hh.T),
                _gates_ifgo_to_ifog((b_ih + b_hh)[None, :]))

    w1i, w1h, b1 = lstm(w_ih1, w_hh1, b_ih1, b_hh1)
    w2i, w2h, b2 = lstm(w_ih2, w_hh2, b_ih2, b_hh2)
    w3i, w3h, b3 = lstm(w_ih3, w_hh3, b_ih3, b_hh3)
    w2 = jnp.concatenate([w2i, w2h], axis=0)            # (h1+h2, 4*h2)
    w3 = jnp.concatenate([w3i, w3h], axis=0)            # (h2+h1, 4*h1)

    # dense2 o dense1 composed offline in f32 (no nonlinearity between them).
    w_hd = wd1.T @ wd2.T                                 # (h1, out)
    b_hd = bd1 @ wd2.T + bd2                             # (out,)
    outp = _round_up(output_dim, 128)
    w_hd = jnp.pad(w_hd, ((0, 0), (0, outp - output_dim)))
    b_hd = jnp.pad(b_hd, (0, outp - output_dim))[None, :]

    lanes = max(4 * h1, 4 * h2, outp)
    blocks = [("w1_ih", w1i), ("w1_hh", w1h), ("w2", w2), ("w3", w3),
              ("w_hd", w_hd)]
    offs, rows = {}, 0
    for name, w in blocks:
        offs[name] = rows
        rows += _round_up(w.shape[0], 8)                 # sublane-aligned rows
    w_slab = jnp.zeros((rows, lanes), jnp.float32)
    for name, w in blocks:
        w_slab = w_slab.at[offs[name]:offs[name] + w.shape[0],
                           :w.shape[1]].set(w)
    w_slab = w_slab.astype(jnp.bfloat16)

    b_slab = jnp.zeros((4, lanes), jnp.float32)
    for i, b in enumerate([b1, b2, b3, b_hd]):
        b_slab = b_slab.at[i, :b.shape[1]].set(b[0])

    return w_slab, b_slab, offs


# ----------------------------------------------------------------------------
# References
# ----------------------------------------------------------------------------

def reference_forward(x, tp, *, match_kernel_precision):
    """Canonical PyTorch LSTM semantics (gate order i, f, g, o) on the
    unpermuted torch-layout weights.

    match_kernel_precision=True : matmul operands cast to bf16 and the head
        uses the same f32-composed weights as the kernel -> tight comparison
        that catches gate-permutation / layout / indexing bugs.
    match_kernel_precision=False: full f32, dense1 and dense2 kept separate
        (closest to torch) -> coarse semantic sanity bound.
    """
    (w_ih1, w_hh1, b_ih1, b_hh1,
     w_ih2, w_hh2, b_ih2, b_hh2,
     w_ih3, w_hh3, b_ih3, b_hh3,
     wd1, bd1, wd2, bd2) = [jnp.asarray(p, jnp.float32) for p in tp]
    mm_dtype = jnp.bfloat16 if match_kernel_precision else jnp.float32

    def lstm(xseq, w_ih, w_hh, b_ih, b_hh):
        B, T, _ = xseq.shape
        H = w_hh.shape[1]
        w_ih_t = w_ih.T.astype(mm_dtype)
        w_hh_t = w_hh.T.astype(mm_dtype)
        b = b_ih + b_hh
        h = jnp.zeros((B, H), jnp.float32)
        c = jnp.zeros((B, H), jnp.float32)
        ys = []
        for t in range(T):
            g = (jnp.dot(xseq[:, t, :].astype(mm_dtype), w_ih_t,
                         preferred_element_type=jnp.float32)
                 + jnp.dot(h.astype(mm_dtype), w_hh_t,
                           preferred_element_type=jnp.float32) + b)
            i = jax.nn.sigmoid(g[:, 0 * H:1 * H])
            f = jax.nn.sigmoid(g[:, 1 * H:2 * H])
            gg = jnp.tanh(g[:, 2 * H:3 * H])
            o = jax.nn.sigmoid(g[:, 3 * H:4 * H])
            c = f * c + i * gg
            h = o * jnp.tanh(c)
            ys.append(h)
        return jnp.stack(ys, axis=1)

    o = lstm(x.astype(jnp.float32), w_ih1, w_hh1, b_ih1, b_hh1)
    o = lstm(o, w_ih2, w_hh2, b_ih2, b_hh2)
    o = lstm(o, w_ih3, w_hh3, b_ih3, b_hh3)
    B, T, H = o.shape
    flat = o.reshape(B * T, H)
    if match_kernel_precision:
        w_hd = (wd1.T @ wd2.T).astype(jnp.bfloat16)
        b_hd = bd1 @ wd2.T + bd2
        out = jnp.dot(flat.astype(jnp.bfloat16), w_hd,
                      preferred_element_type=jnp.float32) + b_hd
    else:
        d1 = flat @ wd1.T + bd1
        out = d1 @ wd2.T + bd2
    return out.reshape(B, T, -1)


if __name__ == "__main__":
    # Small shapes consistent with the module's forward pass.
    batch, seq = 2, 8
    input_dim, hidden_dim1, hidden_dim2, output_dim = 16, 32, 64, 24
    # dropout_prob only affects training; inference forward is identity.

    key = jax.random.PRNGKey(0)
    kx, kp = jax.random.split(key)
    x = jax.random.normal(kx, (batch, seq, input_dim), jnp.float32)

    torch_params = init_torch_params(kp, input_dim, hidden_dim1, hidden_dim2,
                                     output_dim)
    w_slab, b_slab, offs = to_kernel_params(
        torch_params, input_dim, hidden_dim1, hidden_dim2, output_dim)

    out = jax.block_until_ready(
        chord_forward(x, w_slab, b_slab, offs,
                      hidden_dim1, hidden_dim2, output_dim))
    assert out.shape == (batch, seq, output_dim), out.shape

    # Tight check: same bf16 operand quantization + same composed head weights.
    ref_tight = jax.block_until_ready(
        reference_forward(x, torch_params, match_kernel_precision=True))
    err_tight = float(jnp.max(jnp.abs(out - ref_tight)))
    assert jnp.allclose(out, ref_tight, atol=5e-3, rtol=5e-3), err_tight

    # Coarse semantic check vs. full-f32 torch-style math (separate Linears);
    # the gap is bf16 operand rounding accumulated over 3 LSTMs + the head.
    ref_f32 = jax.block_until_ready(
        reference_forward(x, torch_params, match_kernel_precision=False))
    err_f32 = float(jnp.max(jnp.abs(out - ref_f32)))
    assert jnp.allclose(out, ref_f32, atol=1e-1, rtol=1e-1), err_f32
    # TODO(synk): validate once against actual torch.nn.LSTM outputs (torch not
    # available in this self-contained script).
    print("KERNEL_OK")
</pallas_src>

<mosaic_0001>
module attributes {stable_mosaic.version = 11 : i64} {
  func.func @chord_kernel(%arg0: i32, %arg1: memref<8x8x16xbf16, #tpu.memory_space<vmem>>, %arg2: memref<272x256xbf16, #tpu.memory_space<vmem>>, %arg3: memref<4x256xf32, #tpu.memory_space<vmem>>, %arg4: memref<8x8x128xf32, #tpu.memory_space<vmem>>, %arg5: memref<8x8x128xf32, #tpu.memory_space<vmem>>, %arg6: memref<8x8x32xf32, #tpu.memory_space<vmem>>, %arg7: memref<8x8x64xf32, #tpu.memory_space<vmem>>, %arg8: memref<8x8x32xf32, #tpu.memory_space<vmem>>) attributes {dimension_semantics = [#tpu.dimension_semantics<parallel>], iteration_bounds = array<i64: 1>, scalar_prefetch = 0 : i64, scratch_operands = 4 : i64, tpu.core_type = #tpu.core_type<tc>, window_params = [{transform_indices = @transform_0, window_bounds = array<i64: 8, 8, 16>}, {pipeline_mode = #tpu.pipeline_mode<synchronous>, transform_indices = @transform_1, window_bounds = array<i64: 272, 256>}, {pipeline_mode = #tpu.pipeline_mode<synchronous>, transform_indices = @transform_2, window_bounds = array<i64: 4, 256>}, {transform_indices = @transform_3, window_bounds = array<i64: 8, 8, 128>}]} {
    %c0 = arith.constant 0 : index
    %c0_0 = arith.constant 0 : index
    %0 = vector.load %arg2[%c0, %c0_0] : memref<272x256xbf16, #tpu.memory_space<vmem>>, vector<16x128xbf16>
    %c16 = arith.constant 16 : index
    %c0_1 = arith.constant 0 : index
    %1 = vector.load %arg2[%c16, %c0_1] : memref<272x256xbf16, #tpu.memory_space<vmem>>, vector<32x128xbf16>
    %c48 = arith.constant 48 : index
    %c0_2 = arith.constant 0 : index
    %2 = vector.load %arg2[%c48, %c0_2] : memref<272x256xbf16, #tpu.memory_space<vmem>>, vector<96x256xbf16>
    %c144 = arith.constant 144 : index
    %c0_3 = arith.constant 0 : index
    %3 = vector.load %arg2[%c144, %c0_3] : memref<272x256xbf16, #tpu.memory_space<vmem>>, vector<96x128xbf16>
    %c240 = arith.constant 240 : index
    %c0_4 = arith.constant 0 : index
    %4 = vector.load %arg2[%c240, %c0_4] : memref<272x256xbf16, #tpu.memory_space<vmem>>, vector<32x128xbf16>
    %c0_5 = arith.constant 0 : index
    %c0_6 = arith.constant 0 : index
    %5 = vector.load %arg3[%c0_5, %c0_6] : memref<4x256xf32, #tpu.memory_space<vmem>>, vector<1x128xf32>
    %c1 = arith.constant 1 : index
    %c0_7 = arith.constant 0 : index
    %6 = vector.load %arg3[%c1, %c0_7] : memref<4x256xf32, #tpu.memory_space<vmem>>, vector<1x256xf32>
    %c2 = arith.constant 2 : index
    %c0_8 = arith.constant 0 : index
    %7 = vector.load %arg3[%c2, %c0_8] : memref<4x256xf32, #tpu.memory_space<vmem>>, vector<1x128xf32>
    %c3 = arith.constant 3 : index
    %c0_9 = arith.constant 0 : index
    %8 = vector.load %arg3[%c3, %c0_9] : memref<4x256xf32, #tpu.memory_space<vmem>>, vector<1x128xf32>
    %c0_10 = arith.constant 0 : index
    %c0_11 = arith.constant 0 : index
    %c0_12 = arith.constant 0 : index
    %9 = vector.load %arg1[%c0_10, %c0_11, %c0_12] : memref<8x8x16xbf16, #tpu.memory_space<vmem>>, vector<8x8x16xbf16>
    %10 = vector.shape_cast %9 : vector<8x8x16xbf16> to vector<64x16xbf16>
    %cst = arith.constant dense<0.000000e+00> : vector<64x128xf32>
    %11 = tpu.matmul %10, %0, %cst {dimension_numbers = #tpu.dot_dimension_numbers<[1], [0], [0], [1], [0, 0, 1, 1], [], []>} : vector<64x16xbf16>, vector<16x128xbf16>, vector<64x128xf32> -> vector<64x128xf32>
    %12 = vector.broadcast %5 : vector<1x128xf32> to vector<64x128xf32>
    %13 = arith.addf %11, %12 : vector<64x128xf32>
    %14 = vector.shape_cast %13 : vector<64x128xf32> to vector<8x8x128xf32>
    %c0_13 = arith.constant 0 : index
    %c0_14 = arith.constant 0 : index
    %c0_15 = arith.constant 0 : index
    %15 = vector.load %arg5[%c0_13, %c0_14, %c0_15] : memref<8x8x128xf32, #tpu.memory_space<vmem>>, vector<8x8x128xf32>
    tpu.vector_store %arg5[%c0_13, %c0_14, %c0_15], %14 {strides = array<i32>} : memref<8x8x128xf32, #tpu.memory_space<vmem>>, vector<8x8x128xf32>,
    %cst_16 = arith.constant 0.000000e+00 : f32
    %16 = vector.broadcast %cst_16 : f32 to vector<8x32xf32>
    %cst_17 = arith.constant 0.000000e+00 : f32
    %17 = vector.broadcast %cst_17 : f32 to vector<8x32xf32>
    %cst_18 = arith.constant 0.000000e+00 : f32
    %18 = vector.broadcast %cst_18 : f32 to vector<8x64xf32>
    %cst_19 = arith.constant 0.000000e+00 : f32
    %19 = vector.broadcast %cst_19 : f32 to vector<8x64xf32>
    %cst_20 = arith.constant 0.000000e+00 : f32
    %20 = vector.broadcast %cst_20 : f32 to vector<8x32xf32>
    %cst_21 = arith.constant 0.000000e+00 : f32
    %21 = vector.broadcast %cst_21 : f32 to vector<8x32xf32>
    %c0_22 = arith.constant 0 : index
    %c0_23 = arith.constant 0 : index
    %c0_24 = arith.constant 0 : index
    %22 = vector.load %arg5[%c0_22, %c0_23, %c0_24] : memref<8x8x128xf32, #tpu.memory_space<vmem>>, vector<1x8x128xf32>
    %23 = vector.shape_cast %22 : vector<1x8x128xf32> to vector<8x128xf32>
    %24 = arith.truncf %16 : vector<8x32xf32> to vector<8x32xbf16>
    %cst_25 = arith.constant dense<0.000000e+00> : vector<8x128xf32>
    %25 = tpu.matmul %24, %1, %cst_25 {dimension_numbers = #tpu.dot_dimension_numbers<[1], [0], [0], [1], [0, 0, 1, 1], [], []>} : vector<8x32xbf16>, vector<32x128xbf16>, vector<8x128xf32> -> vector<8x128xf32>
    %26 = arith.addf %23, %25 : vector<8x128xf32>
    %27 = vector.extract_strided_slice %26 {offsets = [0, 0], sizes = [8, 96], strides = [1, 1]} : vector<8x128xf32> to vector<8x96xf32>
    %28 = arith.negf %27 : vector<8x96xf32>
    %29 = math.exp %28 : vector<8x96xf32>
    %cst_26 = arith.constant 1.000000e+00 : f32
    %30 = vector.broadcast %cst_26 : f32 to vector<8x96xf32>
    %31 = arith.addf %30, %29 : vector<8x96xf32>
    %32 = arith.divf %30, %31 : vector<8x96xf32>
    %33 = vector.extract_strided_slice %32 {offsets = [0, 0], sizes = [8, 32], strides = [1, 1]} : vector<8x96xf32> to vector<8x32xf32>
    %34 = vector.extract_strided_slice %32 {offsets = [0, 32], sizes = [8, 32], strides = [1, 1]} : vector<8x96xf32> to vector<8x32xf32>
    %35 = vector.extract_strided_slice %32 {offsets = [0, 64], sizes = [8, 32], strides = [1, 1]} : vector<8x96xf32> to vector<8x32xf32>
    %36 = vector.extract_strided_slice %26 {offsets = [0, 96], sizes = [8, 32], strides = [1, 1]} : vector<8x128xf32> to vector<8x32xf32>
    %37 = math.tanh %36 : vector<8x32xf32>
    %38 = arith.mulf %34, %17 : vector<8x32xf32>
    %39 = arith.mulf %33, %37 : vector<8x32xf32>
    %40 = arith.addf %38, %39 : vector<8x32xf32>
    %41 = math.tanh %40 : vector<8x32xf32>
    %42 = arith.mulf %35, %41 : vector<8x32xf32>
    %c0_27 = arith.constant 0 : index
    %c0_28 = arith.constant 0 : index
    %c0_29 = arith.constant 0 : index
    %43 = vector.load %arg6[%c0_27, %c0_28, %c0_29] : memref<8x8x32xf32, #tpu.memory_space<vmem>>, vector<1x8x32xf32>
    %44 = vector.shape_cast %43 : vector<1x8x32xf32> to vector<8x32xf32>
    %45 = vector.shape_cast %42 : vector<8x32xf32> to vector<1x8x32xf32>
    tpu.vector_store %arg6[%c0_27, %c0_28, %c0_29], %45 {strides = array<i32>} : memref<8x8x32xf32, #tpu.memory_space<vmem>>, vector<1x8x32xf32>,
    %c1_30 = arith.constant 1 : index
    %c0_31 = arith.constant 0 : index
    %c0_32 = arith.constant 0 : index
    %46 = vector.load %arg5[%c1_30, %c0_31, %c0_32] : memref<8x8x128xf32, #tpu.memory_space<vmem>>, vector<1x8x128xf32>
    %47 = vector.shape_cast %46 : vector<1x8x128xf32> to vector<8x128xf32>
    %48 = arith.truncf %42 : vector<8x32xf32> to vector<8x32xbf16>
    %cst_33 = arith.constant dense<0.000000e+00> : vector<8x128xf32>
    %49 = tpu.matmul %48, %1, %cst_33 {dimension_numbers = #tpu.dot_dimension_numbers<[1], [0], [0], [1], [0, 0, 1, 1], [], []>} : vector<8x32xbf16>, vector<32x128xbf16>, vector<8x128xf32> -> vector<8x128xf32>
    %50 = arith.addf %47, %49 : vector<8x128xf32>
    %51 = vector.extract_strided_slice %50 {offsets = [0, 0], sizes = [8, 96], strides = [1, 1]} : vector<8x128xf32> to vector<8x96xf32>
    %52 = arith.negf %51 : vector<8x96xf32>
    %53 = math.exp %52 : vector<8x96xf32>
    %cst_34 = arith.constant 1.000000e+00 : f32
    %54 = vector.broadcast %cst_34 : f32 to vector<8x96xf32>
    %55 = arith.addf %54, %53 : vector<8x96xf32>
    %56 = arith.divf %54, %55 : vector<8x96xf32>
    %57 = vector.extract_strided_slice %56 {offsets = [0, 0], sizes = [8, 32], strides = [1, 1]} : vector<8x96xf32> to vector<8x32xf32>
    %58 = vector.extract_strided_slice %56 {offsets = [0, 32], sizes = [8, 32], strides = [1, 1]} : vector<8x96xf32> to vector<8x32xf32>
    %59 = vector.extract_strided_slice %56 {offsets = [0, 64], sizes = [8, 32], strides = [1, 1]} : vector<8x96xf32> to vector<8x32xf32>
    %60 = vector.extract_strided_slice %50 {offsets = [0, 96], sizes = [8, 32], strides = [1, 1]} : vector<8x128xf32> to vector<8x32xf32>
    %61 = math.tanh %60 : vector<8x32xf32>
    %62 = arith.mulf %58, %40 : vector<8x32xf32>
    %63 = arith.mulf %57, %61 : vector<8x32xf32>
    %64 = arith.addf %62, %63 : vector<8x32xf32>
    %65 = math.tanh %64 : vector<8x32xf32>
    %66 = arith.mulf %59, %65 : vector<8x32xf32>
    %c1_35 = arith.constant 1 : index
    %c0_36 = arith.constant 0 : index
    %c0_37 = arith.constant 0 : index
    %67 = vector.load %arg6[%c1_35, %c0_36, %c0_37] : memref<8x8x32xf32, #tpu.memory_space<vmem>>, vector<1x8x32xf32>
    %68 = vector.shape_cast %67 : vector<1x8x32xf32> to vector<8x32xf32>
    %69 = vector.shape_cast %66 : vector<8x32xf32> to vector<1x8x32xf32>
    tpu.vector_store %arg6[%c1_35, %c0_36, %c0_37], %69 {strides = array<i32>} : memref<8x8x32xf32, #tpu.memory_space<vmem>>, vector<1x8x32xf32>,
    %c0_38 = arith.constant 0 : index
    %c0_39 = arith.constant 0 : index
    %c0_40 = arith.constant 0 : index
    %70 = vector.load %arg6[%c0_38, %c0_39, %c0_40] : memref<8x8x32xf32, #tpu.memory_space<vmem>>, vector<1x8x32xf32>
    %71 = vector.shape_cast %70 : vector<1x8x32xf32> to vector<8x32xf32>
    %72 = tpu.concatenate %71, %18 in 1 : vector<8x32xf32>, vector<8x64xf32> -> vector<8x96xf32>
    %73 = arith.truncf %72 : vector<8x96xf32> to vector<8x96xbf16>
    %cst_41 = arith.constant dense<0.000000e+00> : vector<8x256xf32>
    %74 = tpu.matmul %73, %2, %cst_41 {dimension_numbers = #tpu.dot_dimension_numbers<[1], [0], [0], [1], [0, 0, 1, 1], [], []>} : vector<8x96xbf16>, vector<96x256xbf16>, vector<8x256xf32> -> vector<8x256xf32>
    %75 = vector.broadcast %6 : vector<1x256xf32> to vector<8x256xf32>
    %76 = arith.addf %74, %75 : vector<8x256xf32>
    %77 = vector.extract_strided_slice %76 {offsets = [0, 0], sizes = [8, 192], strides = [1, 1]} : vector<8x256xf32> to vector<8x192xf32>
    %78 = arith.negf %77 : vector<8x192xf32>
    %79 = math.exp %78 : vector<8x192xf32>
    %cst_42 = arith.constant 1.000000e+00 : f32
    %80 = vector.broadcast %cst_42 : f32 to vector<8x192xf32>
    %81 = arith.addf %80, %79 : vector<8x192xf32>
    %82 = arith.divf %80, %81 : vector<8x192xf32>
    %83 = vector.extract_strided_slice %82 {offsets = [0, 0], sizes = [8, 64], strides = [1, 1]} : vector<8x192xf32> to vector<8x64xf32>
    %84 = vector.extract_strided_slice %82 {offsets = [0, 64], sizes = [8, 64], strides = [1, 1]} : vector<8x192xf32> to vector<8x64xf32>
    %85 = vector.extract_strided_slice %82 {offsets = [0, 128], sizes = [8, 64], strides = [1, 1]} : vector<8x192xf32> to vector<8x64xf32>
    %86 = vector.extract_strided_slice %76 {offsets = [0, 192], sizes = [8, 64], strides = [1, 1]} : vector<8x256xf32> to vector<8x64xf32>
    %87 = math.tanh %86 : vector<8x64xf32>
    %88 = arith.mulf %84, %19 : vector<8x64xf32>
    %89 = arith.mulf %83, %87 : vector<8x64xf32>
    %90 = arith.addf %88, %89 : vector<8x64xf32>
    %91 = math.tanh %90 : vector<8x64xf32>
    %92 = arith.mulf %85, %91 : vector<8x64xf32>
    %c0_43 = arith.constant 0 : index
    %c0_44 = arith.constant 0 : index
    %c0_45 = arith.constant 0 : index
    %93 = vector.load %arg7[%c0_43, %c0_44, %c0_45] : memref<8x8x64xf32, #tpu.memory_space<vmem>>, vector<1x8x64xf32>
    %94 = vector.shape_cast %93 : vector<1x8x64xf32> to vector<8x64xf32>
    %95 = vector.shape_cast %92 : vector<8x64xf32> to vector<1x8x64xf32>
    tpu.vector_store %arg7[%c0_43, %c0_44, %c0_45], %95 {strides = array<i32>} : memref<8x8x64xf32, #tpu.memory_space<vmem>>, vector<1x8x64xf32>,
    %c2_46 = arith.constant 2 : index
    %c0_47 = arith.constant 0 : index
    %c0_48 = arith.constant 0 : index
    %96 = vector.load %arg5[%c2_46, %c0_47, %c0_48] : memref<8x8x128xf32, #tpu.memory_space<vmem>>, vector<1x8x128xf32>
    %97 = vector.shape_cast %96 : vector<1x8x128xf32> to vector<8x128xf32>
    %98 = arith.truncf %66 : vector<8x32xf32> to vector<8x32xbf16>
    %cst_49 = arith.constant dense<0.000000e+00> : vector<8x128xf32>
    %99 = tpu.matmul %98, %1, %cst_49 {dimension_numbers = #tpu.dot_dimension_numbers<[1], [0], [0], [1], [0, 0, 1, 1], [], []>} : vector<8x32xbf16>, vector<32x128xbf16>, vector<8x128xf32> -> vector<8x128xf32>
    %100 = arith.addf %97, %99 : vector<8x128xf32>
    %101 = vector.extract_strided_slice %100 {offsets = [0, 0], sizes = [8, 96], strides = [1, 1]} : vector<8x128xf32> to vector<8x96xf32>
    %102 = arith.negf %101 : vector<8x96xf32>
    %103 = math.exp %102 : vector<8x96xf32>
    %cst_50 = arith.constant 1.000000e+00 : f32
    %104 = vector.broadcast %cst_50 : f32 to vector<8x96xf32>
    %105 = arith.addf %104, %103 : vector<8x96xf32>
    %106 = arith.divf %104, %105 : vector<8x96xf32>
    %107 = vector.extract_strided_slice %106 {offsets = [0, 0], sizes = [8, 32], strides = [1, 1]} : vector<8x96xf32> to vector<8x32xf32>
    %108 = vector.extract_strided_slice %106 {offsets = [0, 32], sizes = [8, 32], strides = [1, 1]} : vector<8x96xf32> to vector<8x32xf32>
    %109 = vector.extract_strided_slice %106 {offsets = [0, 64], sizes = [8, 32], strides = [1, 1]} : vector<8x96xf32> to vector<8x32xf32>
    %110 = vector.extract_strided_slice %100 {offsets = [0, 96], sizes = [8, 32], strides = [1, 1]} : vector<8x128xf32> to vector<8x32xf32>
    %111 = math.tanh %110 : vector<8x32xf32>
    %112 = arith.mulf %108, %64 : vector<8x32xf32>
    %113 = arith.mulf %107, %111 : vector<8x32xf32>
    %114 = arith.addf %112, %113 : vector<8x32xf32>
    %115 = math.tanh %114 : vector<8x32xf32>
    %116 = arith.mulf %109, %115 : vector<8x32xf32>
    %c2_51 = arith.constant 2 : index
    %c0_52 = arith.constant 0 : index
    %c0_53 = arith.constant 0 : index
    %117 = vector.load %arg6[%c2_51, %c0_52, %c0_53] : memref<8x8x32xf32, #tpu.memory_space<vmem>>, vector<1x8x32xf32>
    %118 = vector.shape_cast %117 : vector<1x8x32xf32> to vector<8x32xf32>
    %119 = vector.shape_cast %116 : vector<8x32xf32> to vector<1x8x32xf32>
    tpu.vector_store %arg6[%c2_51, %c0_52, %c0_53], %119 {strides = array<i32>} : memref<8x8x32xf32, #tpu.memory_space<vmem>>, vector<1x8x32xf32>,
    %c1_54 = arith.constant 1 : index
    %c0_55 = arith.constant 0 : index
    %c0_56 = arith.constant 0 : index
    %120 = vector.load %arg6[%c1_54, %c0_55, %c0_56] : memref<8x8x32xf32, #tpu.memory_space<vmem>>, vector<1x8x32xf32>
    %121 = vector.shape_cast %120 : vector<1x8x32xf32> to vector<8x32xf32>
    %122 = tpu.concatenate %121, %92 in 1 : vector<8x32xf32>, vector<8x64xf32> -> vector<8x96xf32>
    %123 = arith.truncf %122 : vector<8x96xf32> to vector<8x96xbf16>
    %cst_57 = arith.constant dense<0.000000e+00> : vector<8x256xf32>
    %124 = tpu.matmul %123, %2, %cst_57 {dimension_numbers = #tpu.dot_dimension_numbers<[1], [0], [0], [1], [0, 0, 1, 1], [], []>} : vector<8x96xbf16>, vector<96x256xbf16>, vector<8x256xf32> -> vector<8x256xf32>
    %125 = vector.broadcast %6 : vector<1x256xf32> to vector<8x256xf32>
    %126 = arith.addf %124, %125 : vector<8x256xf32>
    %127 = vector.extract_strided_slice %126 {offsets = [0, 0], sizes = [8, 192], strides = [1, 1]} : vector<8x256xf32> to vector<8x192xf32>
    %128 = arith.negf %127 : vector<8x192xf32>
    %129 = math.exp %128 : vector<8x192xf32>
    %cst_58 = arith.constant 1.000000e+00 : f32
    %130 = vector.broadcast %cst_58 : f32 to vector<8x192xf32>
    %131 = arith.addf %130, %129 : vector<8x192xf32>
    %132 = arith.divf %130, %131 : vector<8x192xf32>
    %133 = vector.extract_strided_slice %132 {offsets = [0, 0], sizes = [8, 64], strides = [1, 1]} : vector<8x192xf32> to vector<8x64xf32>
    %134 = vector.extract_strided_slice %132 {offsets = [0, 64], sizes = [8, 64], strides = [1, 1]} : vector<8x192xf32> to vector<8x64xf32>
    %135 = vector.extract_strided_slice %132 {offsets = [0, 128], sizes = [8, 64], strides = [1, 1]} : vector<8x192xf32> to vector<8x64xf32>
    %136 = vector.extract_strided_slice %126 {offsets = [0, 192], sizes = [8, 64], strides = [1, 1]} : vector<8x256xf32> to vector<8x64xf32>
    %137 = math.tanh %136 : vector<8x64xf32>
    %138 = arith.mulf %134, %90 : vector<8x64xf32>
    %139 = arith.mulf %133, %137 : vector<8x64xf32>
    %140 = arith.addf %138, %139 : vector<8x64xf32>
    %141 = math.tanh %140 : vector<8x64xf32>
    %142 = arith.mulf %135, %141 : vector<8x64xf32>
    %c1_59 = arith.constant 1 : index
    %c0_60 = arith.constant 0 : index
    %c0_61 = arith.constant 0 : index
    %143 = vector.load %arg7[%c1_59, %c0_60, %c0_61] : memref<8x8x64xf32, #tpu.memory_space<vmem>>, vector<1x8x64xf32>
    %144 = vector.shape_cast %143 : vector<1x8x64xf32> to vector<8x64xf32>
    %145 = vector.shape_cast %142 : vector<8x64xf32> to vector<1x8x64xf32>
    tpu.vector_store %arg7[%c1_59, %c0_60, %c0_61], %145 {strides = array<i32>} : memref<8x8x64xf32, #tpu.memory_space<vmem>>, vector<1x8x64xf32>,
    %c0_62 = arith.constant 0 : index
    %c0_63 = arith.constant 0 : index
    %c0_64 = arith.constant 0 : index
    %146 = vector.load %arg7[%c0_62, %c0_63, %c0_64] : memref<8x8x64xf32, #tpu.memory_space<vmem>>, vector<1x8x64xf32>
    %147 = vector.shape_cast %146 : vector<1x8x64xf32> to vector<8x64xf32>
    %148 = tpu.concatenate %147, %20 in 1 : vector<8x64xf32>, vector<8x32xf32> -> vector<8x96xf32>
    %149 = arith.truncf %148 : vector<8x96xf32> to vector<8x96xbf16>
    %cst_65 = arith.constant dense<0.000000e+00> : vector<8x128xf32>
    %150 = tpu.matmul %149, %3, %cst_65 {dimension_numbers = #tpu.dot_dimension_numbers<[1], [0], [0], [1], [0, 0, 1, 1], [], []>} : vector<8x96xbf16>, vector<96x128xbf16>, vector<8x128xf32> -> vector<8x128xf32>
    %151 = vector.broadcast %7 : vector<1x128xf32> to vector<8x128xf32>
    %152 = arith.addf %150, %151 : vector<8x128xf32>
    %153 = vector.extract_strided_slice %152 {offsets = [0, 0], sizes = [8, 96], strides = [1, 1]} : vector<8x128xf32> to vector<8x96xf32>
    %154 = arith.negf %153 : vector<8x96xf32>
    %155 = math.exp %154 : vector<8x96xf32>
    %cst_66 = arith.constant 1.000000e+00 : f32
    %156 = vector.broadcast %cst_66 : f32 to vector<8x96xf32>
    %157 = arith.addf %156, %155 : vector<8x96xf32>
    %158 = arith.divf %156, %157 : vector<8x96xf32>
    %159 = vector.extract_strided_slice %158 {offsets = [0, 0], sizes = [8, 32], strides = [1, 1]} : vector<8x96xf32> to vector<8x32xf32>
    %160 = vector.extract_strided_slice %158 {offsets = [0, 32], sizes = [8, 32], strides = [1, 1]} : vector<8x96xf32> to vector<8x32xf32>
    %161 = vector.extract_strided_slice %158 {offsets = [0, 64], sizes = [8, 32], strides = [1, 1]} : vector<8x96xf32> to vector<8x32xf32>
    %162 = vector.extract_strided_slice %152 {offsets = [0, 96], sizes = [8, 32], strides = [1, 1]} : vector<8x128xf32> to vector<8x32xf32>
    %163 = math.tanh %162 : vector<8x32xf32>
    %164 = arith.mulf %160, %21 : vector<8x32xf32>
    %165 = arith.mulf %159, %163 : vector<8x32xf32>
    %166 = arith.addf %164, %165 : vector<8x32xf32>
    %167 = math.tanh %166 : vector<8x32xf32>
    %168 = arith.mulf %161, %167 : vector<8x32xf32>
    %c0_67 = arith.constant 0 : index
    %c0_68 = arith.constant 0 : index
    %c0_69 = arith.constant 0 : index
    %169 = vector.load %arg8[%c0_67, %c0_68, %c0_69] : memref<8x8x32xf32, #tpu.memory_space<vmem>>, vector<1x8x32xf32>
    %170 = vector.shape_cast %169 : vector<1x8x32xf32> to vector<8x32xf32>
    %171 = vector.shape_cast %168 : vector<8x32xf32> to vector<1x8x32xf32>
    tpu.vector_store %arg8[%c0_67, %c0_68, %c0_69], %171 {strides = array<i32>} : memref<8x8x32xf32, #tpu.memory_space<vmem>>, vector<1x8x32xf32>,
    %c3_70 = arith.constant 3 : index
    %c0_71 = arith.constant 0 : index
    %c0_72 = arith.constant 0 : index
    %172 = vector.load %arg5[%c3_70, %c0_71, %c0_72] : memref<8x8x128xf32, #tpu.memory_space<vmem>>, vector<1x8x128xf32>
    %173 = vector.shape_cast %172 : vector<1x8x128xf32> to vector<8x128xf32>
    %174 = arith.truncf %116 : vector<8x32xf32> to vector<8x32xbf16>
    %cst_73 = arith.constant dense<0.000000e+00> : vector<8x128xf32>
    %175 = tpu.matmul %174, %1, %cst_73 {dimension_numbers = #tpu.dot_dimension_numbers<[1], [0], [0], [1], [0, 0, 1, 1], [], []>} : vector<8x32xbf16>, vector<32x128xbf16>, vector<8x128xf32> -> vector<8x128xf32>
    %176 = arith.addf %173, %175 : vector<8x128xf32>
    %177 = vector.extract_strided_slice %176 {offsets = [0, 0], sizes = [8, 96], strides = [1, 1]} : vector<8x128xf32> to vector<8x96xf32>
    %178 = arith.negf %177 : vector<8x96xf32>
    %179 = math.exp %178 : vector<8x96xf32>
    %cst_74 = arith.constant 1.000000e+00 : f32
    %180 = vector.broadcast %cst_74 : f32 to vector<8x96xf32>
    %181 = arith.addf %180, %179 : vector<8x96xf32>
    %182 = arith.divf %180, %181 : vector<8x96xf32>
    %183 = vector.extract_strided_slice %182 {offsets = [0, 0], sizes = [8, 32], strides = [1, 1]} : vector<8x96xf32> to vector<8x32xf32>
    %184 = vector.extract_strided_slice %182 {offsets = [0, 32], sizes = [8, 32], strides = [1, 1]} : vector<8x96xf32> to vector<8x32xf32>
    %185 = vector.extract_strided_slice %182 {offsets = [0, 64], sizes = [8, 32], strides = [1, 1]} : vector<8x96xf32> to vector<8x32xf32>
    %186 = vector.extract_strided_slice %176 {offsets = [0, 96], sizes = [8, 32], strides = [1, 1]} : vector<8x128xf32> to vector<8x32xf32>
    %187 = math.tanh %186 : vector<8x32xf32>
    %188 = arith.mulf %184, %114 : vector<8x32xf32>
    %189 = arith.mulf %183, %187 : vector<8x32xf32>
    %190 = arith.addf %188, %189 : vector<8x32xf32>
    %191 = math.tanh %190 : vector<8x32xf32>
    %192 = arith.mulf %185, %191 : vector<8x32xf32>
    %c3_75 = arith.constant 3 : index
    %c0_76 = arith.constant 0 : index
    %c0_77 = arith.constant 0 : index
    %193 = vector.load %arg6[%c3_75, %c0_76, %c0_77] : memref<8x8x32xf32, #tpu.memory_space<vmem>>, vector<1x8x32xf32>
    %194 = vector.shape_cast %193 : vector<1x8x32xf32> to vector<8x32xf32>
    %195 = vector.shape_cast %192 : vector<8x32xf32> to vector<1x8x32xf32>
    tpu.vector_store %arg6[%c3_75, %c0_76, %c0_77], %195 {strides = array<i32>} : memref<8x8x32xf32, #tpu.memory_space<vmem>>, vector<1x8x32xf32>,
    %c2_78 = arith.constant 2 : index
    %c0_79 = arith.constant 0 : index
    %c0_80 = arith.constant 0 : index
    %196 = vector.load %arg6[%c2_78, %c0_79, %c0_80] : memref<8x8x32xf32, #tpu.memory_space<vmem>>, vector<1x8x32xf32>
    %197 = vector.shape_cast %196 : vector<1x8x32xf32> to vector<8x32xf32>
    %198 = tpu.concatenate %197, %142 in 1 : vector<8x32xf32>, vector<8x64xf32> -> vector<8x96xf32>
    %199 = arith.truncf %198 : vector<8x96xf32> to vector<8x96xbf16>
    %cst_81 = arith.constant dense<0.000000e+00> : vector<8x256xf32>
    %200 = tpu.matmul %199, %2, %cst_81 {dimension_numbers = #tpu.dot_dimension_numbers<[1], [0], [0], [1], [0, 0, 1, 1], [], []>} : vector<8x96xbf16>, vector<96x256xbf16>, vector<8x256xf32> -> vector<8x256xf32>
    %201 = vector.broadcast %6 : vector<1x256xf32> to vector<8x256xf32>
    %202 = arith.addf %200, %201 : vector<8x256xf32>
    %203 = vector.extract_strided_slice %202 {offsets = [0, 0], sizes = [8, 192], strides = [1, 1]} : vector<8x256xf32> to vector<8x192xf32>
    %204 = arith.negf %203 : vector<8x192xf32>
    %205 = math.exp %204 : vector<8x192xf32>
    %cst_82 = arith.constant 1.000000e+00 : f32
    %206 = vector.broadcast %cst_82 : f32 to vector<8x192xf32>
    %207 = arith.addf %206, %205 : vector<8x192xf32>
    %208 = arith.divf %206, %207 : vector<8x192xf32>
    %209 = vector.extract_strided_slice %208 {offsets = [0, 0], sizes = [8, 64], strides = [1, 1]} : vector<8x192xf32> to vector<8x64xf32>
    %210 = vector.extract_strided_slice %208 {offsets = [0, 64], sizes = [8, 64], strides = [1, 1]} : vector<8x192xf32> to vector<8x64xf32>
    %211 = vector.extract_strided_slice %208 {offsets = [0, 128], sizes = [8, 64], strides = [1, 1]} : vector<8x192xf32> to vector<8x64xf32>
    %212 = vector.extract_strided_slice %202 {offsets = [0, 192], sizes = [8, 64], strides = [1, 1]} : vector<8x256xf32> to vector<8x64xf32>
    %213 = math.tanh %212 : vector<8x64xf32>
    %214 = arith.mulf %210, %140 : vector<8x64xf32>
    %215 = arith.mulf %209, %213 : vector<8x64xf32>
    %216 = arith.addf %214, %215 : vector<8x64xf32>
    %217 = math.tanh %216 : vector<8x64xf32>
    %218 = arith.mulf %211, %217 : vector<8x64xf32>
    %c2_83 = arith.constant 2 : index
    %c0_84 = arith.constant 0 : index
    %c0_85 = arith.constant 0 : index
    %219 = vector.load %arg7[%c2_83, %c0_84, %c0_85] : memref<8x8x64xf32, #tpu.memory_space<vmem>>, vector<1x8x64xf32>
    %220 = vector.shape_cast %219 : vector<1x8x64xf32> to vector<8x64xf32>
    %221 = vector.shape_cast %218 : vector<8x64xf32> to vector<1x8x64xf32>
    tpu.vector_store %arg7[%c2_83, %c0_84, %c0_85], %221 {strides = array<i32>} : memref<8x8x64xf32, #tpu.memory_space<vmem>>, vector<1x8x64xf32>,
    %c1_86 = arith.constant 1 : index
    %c0_87 = arith.constant 0 : index
    %c0_88 = arith.constant 0 : index
    %222 = vector.load %arg7[%c1_86, %c0_87, %c0_88] : memref<8x8x64xf32, #tpu.memory_space<vmem>>, vector<1x8x64xf32>
    %223 = vector.shape_cast %222 : vector<1x8x64xf32> to vector<8x64xf32>
    %224 = tpu.concatenate %223, %168 in 1 : vector<8x64xf32>, vector<8x32xf32> -> vector<8x96xf32>
    %225 = arith.truncf %224 : vector<8x96xf32> to vector<8x96xbf16>
    %cst_89 = arith.constant dense<0.000000e+00> : vector<8x128xf32>
    %226 = tpu.matmul %225, %3, %cst_89 {dimension_numbers = #tpu.dot_dimension_numbers<[1], [0], [0], [1], [0, 0, 1, 1], [], []>} : vector<8x96xbf16>, vector<96x128xbf16>, vector<8x128xf32> -> vector<8x128xf32>
    %227 = vector.broadcast %7 : vector<1x128xf32> to vector<8x128xf32>
    %228 = arith.addf %226, %227 : vector<8x128xf32>
    %229 = vector.extract_strided_slice %228 {offsets = [0, 0], sizes = [8, 96], strides = [1, 1]} : vector<8x128xf32> to vector<8x96xf32>
    %230 = arith.negf %229 : vector<8x96xf32>
    %231 = math.exp %230 : vector<8x96xf32>
    %cst_90 = arith.constant 1.000000e+00 : f32
    %232 = vector.broadcast %cst_90 : f32 to vector<8x96xf32>
    %233 = arith.addf %232, %231 : vector<8x96xf32>
    %234 = arith.divf %232, %233 : vector<8x96xf32>
    %235 = vector.extract_strided_slice %234 {offsets = [0, 0], sizes = [8, 32], strides = [1, 1]} : vector<8x96xf32> to vector<8x32xf32>
    %236 = vector.extract_strided_slice %234 {offsets = [0, 32], sizes = [8, 32], strides = [1, 1]} : vector<8x96xf32> to vector<8x32xf32>
    %237 = vector.extract_strided_slice %234 {offsets = [0, 64], sizes = [8, 32], strides = [1, 1]} : vector<8x96xf32> to vector<8x32xf32>
    %238 = vector.extract_strided_slice %228 {offsets = [0, 96], sizes = [8, 32], strides = [1, 1]} : vector<8x128xf32> to vector<8x32xf32>
    %239 = math.tanh %238 : vector<8x32xf32>
    %240 = arith.mulf %236, %166 : vector<8x32xf32>
    %241 = arith.mulf %235, %239 : vector<8x32xf32>
    %242 = arith.addf %240, %241 : vector<8x32xf32>
    %243 = math.tanh %242 : vector<8x32xf32>
    %244 = arith.mulf %237, %243 : vector<8x32xf32>
    %c1_91 = arith.constant 1 : index
    %c0_92 = arith.constant 0 : index
    %c0_93 = arith.constant 0 : index
    %245 = vector.load %arg8[%c1_91, %c0_92, %c0_93] : memref<8x8x32xf32, #tpu.memory_space<vmem>>, vector<1x8x32xf32>
    %246 = vector.shape_cast %245 : vector<1x8x32xf32> to vector<8x32xf32>
    %247 = vector.shape_cast %244 : vector<8x32xf32> to vector<1x8x32xf32>
    tpu.vector_store %arg8[%c1_91, %c0_92, %c0_93], %247 {strides = array<i32>} : memref<8x8x32xf32, #tpu.memory_space<vmem>>, vector<1x8x32xf32>,
    %c4 = arith.constant 4 : index
    %c0_94 = arith.constant 0 : index
    %c0_95 = arith.constant 0 : index
    %248 = vector.load %arg5[%c4, %c0_94, %c0_95] : memref<8x8x128xf32, #tpu.memory_space<vmem>>, vector<1x8x128xf32>
    %249 = vector.shape_cast %248 : vector<1x8x128xf32> to vector<8x128xf32>
    %250 = arith.truncf %192 : vector<8x32xf32> to vector<8x32xbf16>
    %cst_96 = arith.constant dense<0.000000e+00> : vector<8x128xf32>
    %251 = tpu.matmul %250, %1, %cst_96 {dimension_numbers = #tpu.dot_dimension_numbers<[1], [0], [0], [1], [0, 0, 1, 1], [], []>} : vector<8x32xbf16>, vector<32x128xbf16>, vector<8x128xf32> -> vector<8x128xf32>
    %252 = arith.addf %249, %251 : vector<8x128xf32>
    %253 = vector.extract_strided_slice %252 {offsets = [0, 0], sizes = [8, 96], strides = [1, 1]} : vector<8x128xf32> to vector<8x96xf32>
    %254 = arith.negf %253 : vector<8x96xf32>
    %255 = math.exp %254 : vector<8x96xf32>
    %cst_97 = arith.constant 1.000000e+00 : f32
    %256 = vector.broadcast %cst_97 : f32 to vector<8x96xf32>
    %257 = arith.addf %256, %255 : vector<8x96xf32>
    %258 = arith.divf %256, %257 : vector<8x96xf32>
    %259 = vector.extract_strided_slice %258 {offsets = [0, 0], sizes = [8, 32], strides = [1, 1]} : vector<8x96xf32> to vector<8x32xf32>
    %260 = vector.extract_strided_slice %258 {offsets = [0, 32], sizes = [8, 32], strides = [1, 1]} : vector<8x96xf32> to vector<8x32xf32>
    %261 = vector.extract_strided_slice %258 {offsets = [0, 64], sizes = [8, 32], strides = [1, 1]} : vector<8x96xf32> to vector<8x32xf32>
    %262 = vector.extract_strided_slice %252 {offsets = [0, 96], sizes = [8, 32], strides = [1, 1]} : vector<8x128xf32> to vector<8x32xf32>
    %263 = math.tanh %262 : vector<8x32xf32>
    %264 = arith.mulf %260, %190 : vector<8x32xf32>
    %265 = arith.mulf %259, %263 : vector<8x32xf32>
    %266 = arith.addf %264, %265 : vector<8x32xf32>
    %267 = math.tanh %266 : vector<8x32xf32>
    %268 = arith.mulf %261, %267 : vector<8x32xf32>
    %c4_98 = arith.constant 4 : index
    %c0_99 = arith.constant 0 : index
    %c0_100 = arith.constant 0 : index
    %269 = vector.load %arg6[%c4_98, %c0_99, %c0_100] : memref<8x8x32xf32, #tpu.memory_space<vmem>>, vector<1x8x32xf32>
    %270 = vector.shape_cast %269 : vector<1x8x32xf32> to vector<8x32xf32>
    %271 = vector.shape_cast %268 : vector<8x32xf32> to vector<1x8x32xf32>
    tpu.vector_store %arg6[%c4_98, %c0_99, %c0_100], %271 {strides = array<i32>} : memref<8x8x32xf32, #tpu.memory_space<vmem>>, vector<1x8x32xf32>,
    %c3_101 = arith.constant 3 : index
    %c0_102 = arith.constant 0 : index
    %c0_103 = arith.constant 0 : index
    %272 = vector.load %arg6[%c3_101, %c0_102, %c0_103] : memref<8x8x32xf32, #tpu.memory_space<vmem>>, vector<1x8x32xf32>
    %273 = vector.shape_cast %272 : vector<1x8x32xf32> to vector<8x32xf32>
    %274 = tpu.concatenate %273, %218 in 1 : vector<8x32xf32>, vector<8x64xf32> -> vector<8x96xf32>
    %275 = arith.truncf %274 : vector<8x96xf32> to vector<8x96xbf16>
    %cst_104 = arith.constant dense<0.000000e+00> : vector<8x256xf32>
    %276 = tpu.matmul %275, %2, %cst_104 {dimension_numbers = #tpu.dot_dimension_numbers<[1], [0], [0], [1], [0, 0, 1, 1], [], []>} : vector<8x96xbf16>, vector<96x256xbf16>, vector<8x256xf32> -> vector<8x256xf32>
    %277 = vector.broadcast %6 : vector<1x256xf32> to vector<8x256xf32>
    %278 = arith.addf %276, %277 : vector<8x256xf32>
    %279 = vector.extract_strided_slice %278 {offsets = [0, 0], sizes = [8, 192], strides = [1, 1]} : vector<8x256xf32> to vector<8x192xf32>
    %280 = arith.negf %279 : vector<8x192xf32>
    %281 = math.exp %280 : vector<8x192xf32>
    %cst_105 = arith.constant 1.000000e+00 : f32
    %282 = vector.broadcast %cst_105 : f32 to vector<8x192xf32>
    %283 = arith.addf %282, %281 : vector<8x192xf32>
    %284 = arith.divf %282, %283 : vector<8x192xf32>
    %285 = vector.extract_strided_slice %284 {offsets = [0, 0], sizes = [8, 64], strides = [1, 1]} : vector<8x192xf32> to vector<8x64xf32>
    %286 = vector.extract_strided_slice %284 {offsets = [0, 64], sizes = [8, 64], strides = [1, 1]} : vector<8x192xf32> to vector<8x64xf32>
    %287 = vector.extract_strided_slice %284 {offsets = [0, 128], sizes = [8, 64], strides = [1, 1]} : vector<8x192xf32> to vector<8x64xf32>
    %288 = vector.extract_strided_slice %278 {offsets = [0, 192], sizes = [8, 64], strides = [1, 1]} : vector<8x256xf32> to vector<8x64xf32>
    %289 = math.tanh %288 : vector<8x64xf32>
    %290 = arith.mulf %286, %216 : vector<8x64xf32>
    %291 = arith.mulf %285, %289 : vector<8x64xf32>
    %292 = arith.addf %290, %291 : vector<8x64xf32>
    %293 = math.tanh %292 : vector<8x64xf32>
    %294 = arith.mulf %287, %293 : vector<8x64xf32>
    %c3_106 = arith.constant 3 : index
    %c0_107 = arith.constant 0 : index
    %c0_108 = arith.constant 0 : index
    %295 = vector.load %arg7[%c3_106, %c0_107, %c0_108] : memref<8x8x64xf32, #tpu.memory_space<vmem>>, vector<1x8x64xf32>
    %296 = vector.shape_cast %295 : vector<1x8x64xf32> to vector<8x64xf32>
    %297 = vector.shape_cast %294 : vector<8x64xf32> to vector<1x8x64xf32>
    tpu.vector_store %arg7[%c3_106, %c0_107, %c0_108], %297 {strides = array<i32>} : memref<8x8x64xf32, #tpu.memory_space<vmem>>, vector<1x8x64xf32>,
    %c2_109 = arith.constant 2 : index
    %c0_110 = arith.constant 0 : index
    %c0_111 = arith.constant 0 : index
    %298 = vector.load %arg7[%c2_109, %c0_110, %c0_111] : memref<8x8x64xf32, #tpu.memory_space<vmem>>, vector<1x8x64xf32>
    %299 = vector.shape_cast %298 : vector<1x8x64xf32> to vector<8x64xf32>
    %300 = tpu.concatenate %299, %244 in 1 : vector<8x64xf32>, vector<8x32xf32> -> vector<8x96xf32>
    %301 = arith.truncf %300 : vector<8x96xf32> to vector<8x96xbf16>
    %cst_112 = arith.constant dense<0.000000e+00> : vector<8x128xf32>
    %302 = tpu.matmul %301, %3, %cst_112 {dimension_numbers = #tpu.dot_dimension_numbers<[1], [0], [0], [1], [0, 0, 1, 1], [], []>} : vector<8x96xbf16>, vector<96x128xbf16>, vector<8x128xf32> -> vector<8x128xf32>
    %303 = vector.broadcast %7 : vector<1x128xf32> to vector<8x128xf32>
    %304 = arith.addf %302, %303 : vector<8x128xf32>
    %305 = vector.extract_strided_slice %304 {offsets = [0, 0], sizes = [8, 96], strides = [1, 1]} : vector<8x128xf32> to vector<8x96xf32>
    %306 = arith.negf %305 : vector<8x96xf32>
    %307 = math.exp %306 : vector<8x96xf32>
    %cst_113 = arith.constant 1.000000e+00 : f32
    %308 = vector.broadcast %cst_113 : f32 to vector<8x96xf32>
    %309 = arith.addf %308, %307 : vector<8x96xf32>
    %310 = arith.divf %308, %309 : vector<8x96xf32>
    %311 = vector.extract_strided_slice %310 {offsets = [0, 0], sizes = [8, 32], strides = [1, 1]} : vector<8x96xf32> to vector<8x32xf32>
    %312 = vector.extract_strided_slice %310 {offsets = [0, 32], sizes = [8, 32], strides = [1, 1]} : vector<8x96xf32> to vector<8x32xf32>
    %313 = vector.extract_strided_slice %310 {offsets = [0, 64], sizes = [8, 32], strides = [1, 1]} : vector<8x96xf32> to vector<8x32xf32>
    %314 = vector.extract_strided_slice %304 {offsets = [0, 96], sizes = [8, 32], strides = [1, 1]} : vector<8x128xf32> to vector<8x32xf32>
    %315 = math.tanh %314 : vector<8x32xf32>
    %316 = arith.mulf %312, %242 : vector<8x32xf32>
    %317 = arith.mulf %311, %315 : vector<8x32xf32>
    %318 = arith.addf %316, %317 : vector<8x32xf32>
    %319 = math.tanh %318 : vector<8x32xf32>
    %320 = arith.mulf %313, %319 : vector<8x32xf32>
    %c2_114 = arith.constant 2 : index
    %c0_115 = arith.constant 0 : index
    %c0_116 = arith.constant 0 : index
    %321 = vector.load %arg8[%c2_114, %c0_115, %c0_116] : memref<8x8x32xf32, #tpu.memory_space<vmem>>, vector<1x8x32xf32>
    %322 = vector.shape_cast %321 : vector<1x8x32xf32> to vector<8x32xf32>
    %323 = vector.shape_cast %320 : vector<8x32xf32> to vector<1x8x32xf32>
    tpu.vector_store %arg8[%c2_114, %c0_115, %c0_116], %323 {strides = array<i32>} : memref<8x8x32xf32, #tpu.memory_space<vmem>>, vector<1x8x32xf32>,
    %c5 = arith.constant 5 : index
    %c0_117 = arith.constant 0 : index
    %c0_118 = arith.constant 0 : index
    %324 = vector.load %arg5[%c5, %c0_117, %c0_118] : memref<8x8x128xf32, #tpu.memory_space<vmem>>, vector<1x8x128xf32>
    %325 = vector.shape_cast %324 : vector<1x8x128xf32> to vector<8x128xf32>
    %326 = arith.truncf %268 : vector<8x32xf32> to vector<8x32xbf16>
    %cst_119 = arith.constant dense<0.000000e+00> : vector<8x128xf32>
    %327 = tpu.matmul %326, %1, %cst_119 {dimension_numbers = #tpu.dot_dimension_numbers<[1], [0], [0], [1], [0, 0, 1, 1], [], []>} : vector<8x32xbf16>, vector<32x128xbf16>, vector<8x128xf32> -> vector<8x128xf32>
    %328 = arith.addf %325, %327 : vector<8x128xf32>
    %329 = vector.extract_strided_slice %328 {offsets = [0, 0], sizes = [8, 96], strides = [1, 1]} : vector<8x128xf32> to vector<8x96xf32>
    %330 = arith.negf %329 : vector<8x96xf32>
    %331 = math.exp %330 : vector<8x96xf32>
    %cst_120 = arith.constant 1.000000e+00 : f32
    %332 = vector.broadcast %cst_120 : f32 to vector<8x96xf32>
    %333 = arith.addf %332, %331 : vector<8x96xf32>
    %334 = arith.divf %332, %333 : vector<8x96xf32>
    %335 = vector.extract_strided_slice %334 {offsets = [0, 0], sizes = [8, 32], strides = [1, 1]} : vector<8x96xf32> to vector<8x32xf32>
    %336 = vector.extract_strided_slice %334 {offsets = [0, 32], sizes = [8, 32], strides = [1, 1]} : vector<8x96xf32> to vector<8x32xf32>
    %337 = vector.extract_strided_slice %334 {offsets = [0, 64], sizes = [8, 32], strides = [1, 1]} : vector<8x96xf32> to vector<8x32xf32>
    %338 = vector.extract_strided_slice %328 {offsets = [0, 96], sizes = [8, 32], strides = [1, 1]} : vector<8x128xf32> to vector<8x32xf32>
    %339 = math.tanh %338 : vector<8x32xf32>
    %340 = arith.mulf %336, %266 : vector<8x32xf32>
    %341 = arith.mulf %335, %339 : vector<8x32xf32>
    %342 = arith.addf %340, %341 : vector<8x32xf32>
    %343 = math.tanh %342 : vector<8x32xf32>
    %344 = arith.mulf %337, %343 : vector<8x32xf32>
    %c5_121 = arith.constant 5 : index
    %c0_122 = arith.constant 0 : index
    %c0_123 = arith.constant 0 : index
    %345 = vector.load %arg6[%c5_121, %c0_122, %c0_123] : memref<8x8x32xf32, #tpu.memory_space<vmem>>, vector<1x8x32xf32>
    %346 = vector.shape_cast %345 : vector<1x8x32xf32> to vector<8x32xf32>
    %347 = vector.shape_cast %344 : vector<8x32xf32> to vector<1x8x32xf32>
    tpu.vector_store %arg6[%c5_121, %c0_122, %c0_123], %347 {strides = array<i32>} : memref<8x8x32xf32, #tpu.memory_space<vmem>>, vector<1x8x32xf32>,
    %c4_124 = arith.constant 4 : index
    %c0_125 = arith.constant 0 : index
    %c0_126 = arith.constant 0 : index
    %348 = vector.load %arg6[%c4_124, %c0_125, %c0_126] : memref<8x8x32xf32, #tpu.memory_space<vmem>>, vector<1x8x32xf32>
    %349 = vector.shape_cast %348 : vector<1x8x32xf32> to vector<8x32xf32>
    %350 = tpu.concatenate %349, %294 in 1 : vector<8x32xf32>, vector<8x64xf32> -> vector<8x96xf32>
    %351 = arith.truncf %350 : vector<8x96xf32> to vector<8x96xbf16>
    %cst_127 = arith.constant dense<0.000000e+00> : vector<8x256xf32>
    %352 = tpu.matmul %351, %2, %cst_127 {dimension_numbers = #tpu.dot_dimension_numbers<[1], [0], [0], [1], [0, 0, 1, 1], [], []>} : vector<8x96xbf16>, vector<96x256xbf16>, vector<8x256xf32> -> vector<8x256xf32>
    %353 = vector.broadcast %6 : vector<1x256xf32> to vector<8x256xf32>
    %354 = arith.addf %352, %353 : vector<8x256xf32>
    %355 = vector.extract_strided_slice %354 {offsets = [0, 0], sizes = [8, 192], strides = [1, 1]} : vector<8x256xf32> to vector<8x192xf32>
    %356 = arith.negf %355 : vector<8x192xf32>
    %357 = math.exp %356 : vector<8x192xf32>
    %cst_128 = arith.constant 1.000000e+00 : f32
    %358 = vector.broadcast %cst_128 : f32 to vector<8x192xf32>
    %359 = arith.addf %358, %357 : vector<8x192xf32>
    %360 = arith.divf %358, %359 : vector<8x192xf32>
    %361 = vector.extract_strided_slice %360 {offsets = [0, 0], sizes = [8, 64], strides = [1, 1]} : vector<8x192xf32> to vector<8x64xf32>
    %362 = vector.extract_strided_slice %360 {offsets = [0, 64], sizes = [8, 64], strides = [1, 1]} : vector<8x192xf32> to vector<8x64xf32>
    %363 = vector.extract_strided_slice %360 {offsets = [0, 128], sizes = [8, 64], strides = [1, 1]} : vector<8x192xf32> to vector<8x64xf32>
    %364 = vector.extract_strided_slice %354 {offsets = [0, 192], sizes = [8, 64], strides = [1, 1]} : vector<8x256xf32> to vector<8x64xf32>
    %365 = math.tanh %364 : vector<8x64xf32>
    %366 = arith.mulf %362, %292 : vector<8x64xf32>
    %367 = arith.mulf %361, %365 : vector<8x64xf32>
    %368 = arith.addf %366, %367 : vector<8x64xf32>
    %369 = math.tanh %368 : vector<8x64xf32>
    %370 = arith.mulf %363, %369 : vector<8x64xf32>
    %c4_129 = arith.constant 4 : index
    %c0_130 = arith.constant 0 : index
    %c0_131 = arith.constant 0 : index
    %371 = vector.load %arg7[%c4_129, %c0_130, %c0_131] : memref<8x8x64xf32, #tpu.memory_space<vmem>>, vector<1x8x64xf32>
    %372 = vector.shape_cast %371 : vector<1x8x64xf32> to vector<8x64xf32>
    %373 = vector.shape_cast %370 : vector<8x64xf32> to vector<1x8x64xf32>
    tpu.vector_store %arg7[%c4_129, %c0_130, %c0_131], %373 {strides = array<i32>} : memref<8x8x64xf32, #tpu.memory_space<vmem>>, vector<1x8x64xf32>,
    %c3_132 = arith.constant 3 : index
    %c0_133 = arith.constant 0 : index
    %c0_134 = arith.constant 0 : index
    %374 = vector.load %arg7[%c3_132, %c0_133, %c0_134] : memref<8x8x64xf32, #tpu.memory_space<vmem>>, vector<1x8x64xf32>
    %375 = vector.shape_cast %374 : vector<1x8x64xf32> to vector<8x64xf32>
    %376 = tpu.concatenate %375, %320 in 1 : vector<8x64xf32>, vector<8x32xf32> -> vector<8x96xf32>
    %377 = arith.truncf %376 : vector<8x96xf32> to vector<8x96xbf16>
    %cst_135 = arith.constant dense<0.000000e+00> : vector<8x128xf32>
    %378 = tpu.matmul %377, %3, %cst_135 {dimension_numbers = #tpu.dot_dimension_numbers<[1], [0], [0], [1], [0, 0, 1, 1], [], []>} : vector<8x96xbf16>, vector<96x128xbf16>, vector<8x128xf32> -> vector<8x128xf32>
    %379 = vector.broadcast %7 : vector<1x128xf32> to vector<8x128xf32>
    %380 = arith.addf %378, %379 : vector<8x128xf32>
    %381 = vector.extract_strided_slice %380 {offsets = [0, 0], sizes = [8, 96], strides = [1, 1]} : vector<8x128xf32> to vector<8x96xf32>
    %382 = arith.negf %381 : vector<8x96xf32>
    %383 = math.exp %382 : vector<8x96xf32>
    %cst_136 = arith.constant 1.000000e+00 : f32
    %384 = vector.broadcast %cst_136 : f32 to vector<8x96xf32>
    %385 = arith.addf %384, %383 : vector<8x96xf32>
    %386 = arith.divf %384, %385 : vector<8x96xf32>
    %387 = vector.extract_strided_slice %386 {offsets = [0, 0], sizes = [8, 32], strides = [1, 1]} : vector<8x96xf32> to vector<8x32xf32>
    %388 = vector.extract_strided_slice %386 {offsets = [0, 32], sizes = [8, 32], strides = [1, 1]} : vector<8x96xf32> to vector<8x32xf32>
    %389 = vector.extract_strided_slice %386 {offsets = [0, 64], sizes = [8, 32], strides = [1, 1]} : vector<8x96xf32> to vector<8x32xf32>
    %390 = vector.extract_strided_slice %380 {offsets = [0, 96], sizes = [8, 32], strides = [1, 1]} : vector<8x128xf32> to vector<8x32xf32>
    %391 = math.tanh %390 : vector<8x32xf32>
    %392 = arith.mulf %388, %318 : vector<8x32xf32>
    %393 = arith.mulf %387, %391 : vector<8x32xf32>
    %394 = arith.addf %392, %393 : vector<8x32xf32>
    %395 = math.tanh %394 : vector<8x32xf32>
    %396 = arith.mulf %389, %395 : vector<8x32xf32>
    %c3_137 = arith.constant 3 : index
    %c0_138 = arith.constant 0 : index
    %c0_139 = arith.constant 0 : index
    %397 = vector.load %arg8[%c3_137, %c0_138, %c0_139] : memref<8x8x32xf32, #tpu.memory_space<vmem>>, vector<1x8x32xf32>
    %398 = vector.shape_cast %397 : vector<1x8x32xf32> to vector<8x32xf32>
    %399 = vector.shape_cast %396 : vector<8x32xf32> to vector<1x8x32xf32>
    tpu.vector_store %arg8[%c3_137, %c0_138, %c0_139], %399 {strides = array<i32>} : memref<8x8x32xf32, #tpu.memory_space<vmem>>, vector<1x8x32xf32>,
    %c6 = arith.constant 6 : index
    %c0_140 = arith.constant 0 : index
    %c0_141 = arith.constant 0 : index
    %400 = vector.load %arg5[%c6, %c0_140, %c0_141] : memref<8x8x128xf32, #tpu.memory_space<vmem>>, vector<1x8x128xf32>
    %401 = vector.shape_cast %400 : vector<1x8x128xf32> to vector<8x128xf32>
    %402 = arith.truncf %344 : vector<8x32xf32> to vector<8x32xbf16>
    %cst_142 = arith.constant dense<0.000000e+00> : vector<8x128xf32>
    %403 = tpu.matmul %402, %1, %cst_142 {dimension_numbers = #tpu.dot_dimension_numbers<[1], [0], [0], [1], [0, 0, 1, 1], [], []>} : vector<8x32xbf16>, vector<32x128xbf16>, vector<8x128xf32> -> vector<8x128xf32>
    %404 = arith.addf %401, %403 : vector<8x128xf32>
    %405 = vector.extract_strided_slice %404 {offsets = [0, 0], sizes = [8, 96], strides = [1, 1]} : vector<8x128xf32> to vector<8x96xf32>
    %406 = arith.negf %405 : vector<8x96xf32>
    %407 = math.exp %406 : vector<8x96xf32>
    %cst_143 = arith.constant 1.000000e+00 : f32
    %408 = vector.broadcast %cst_143 : f32 to vector<8x96xf32>
    %409 = arith.addf %408, %407 : vector<8x96xf32>
    %410 = arith.divf %408, %409 : vector<8x96xf32>
    %411 = vector.extract_strided_slice %410 {offsets = [0, 0], sizes = [8, 32], strides = [1, 1]} : vector<8x96xf32> to vector<8x32xf32>
    %412 = vector.extract_strided_slice %410 {offsets = [0, 32], sizes = [8, 32], strides = [1, 1]} : vector<8x96xf32> to vector<8x32xf32>
    %413 = vector.extract_strided_slice %410 {offsets = [0, 64], sizes = [8, 32], strides = [1, 1]} : vector<8x96xf32> to vector<8x32xf32>
    %414 = vector.extract_strided_slice %404 {offsets = [0, 96], sizes = [8, 32], strides = [1, 1]} : vector<8x128xf32> to vector<8x32xf32>
    %415 = math.tanh %414 : vector<8x32xf32>
    %416 = arith.mulf %412, %342 : vector<8x32xf32>
    %417 = arith.mulf %411, %415 : vector<8x32xf32>
    %418 = arith.addf %416, %417 : vector<8x32xf32>
    %419 = math.tanh %418 : vector<8x32xf32>
    %420 = arith.mulf %413, %419 : vector<8x32xf32>
    %c6_144 = arith.constant 6 : index
    %c0_145 = arith.constant 0 : index
    %c0_146 = arith.constant 0 : index
    %421 = vector.load %arg6[%c6_144, %c0_145, %c0_146] : memref<8x8x32xf32, #tpu.memory_space<vmem>>, vector<1x8x32xf32>
    %422 = vector.shape_cast %421 : vector<1x8x32xf32> to vector<8x32xf32>
    %423 = vector.shape_cast %420 : vector<8x32xf32> to vector<1x8x32xf32>
    tpu.vector_store %arg6[%c6_144, %c0_145, %c0_146], %423 {strides = array<i32>} : memref<8x8x32xf32, #tpu.memory_space<vmem>>, vector<1x8x32xf32>,
    %c5_147 = arith.constant 5 : index
    %c0_148 = arith.constant 0 : index
    %c0_149 = arith.constant 0 : index
    %424 = vector.load %arg6[%c5_147, %c0_148, %c0_149] : memref<8x8x32xf32, #tpu.memory_space<vmem>>, vector<1x8x32xf32>
    %425 = vector.shape_cast %424 : vector<1x8x32xf32> to vector<8x32xf32>
    %426 = tpu.concatenate %425, %370 in 1 : vector<8x32xf32>, vector<8x64xf32> -> vector<8x96xf32>
    %427 = arith.truncf %426 : vector<8x96xf32> to vector<8x96xbf16>
    %cst_150 = arith.constant dense<0.000000e+00> : vector<8x256xf32>
    %428 = tpu.matmul %427, %2, %cst_150 {dimension_numbers = #tpu.dot_dimension_numbers<[1], [0], [0], [1], [0, 0, 1, 1], [], []>} : vector<8x96xbf16>, vector<96x256xbf16>, vector<8x256xf32> -> vector<8x256xf32>
    %429 = vector.broadcast %6 : vector<1x256xf32> to vector<8x256xf32>
    %430 = arith.addf %428, %429 : vector<8x256xf32>
    %431 = vector.extract_strided_slice %430 {offsets = [0, 0], sizes = [8, 192], strides = [1, 1]} : vector<8x256xf32> to vector<8x192xf32>
    %432 = arith.negf %431 : vector<8x192xf32>
    %433 = math.exp %432 : vector<8x192xf32>
    %cst_151 = arith.constant 1.000000e+00 : f32
    %434 = vector.broadcast %cst_151 : f32 to vector<8x192xf32>
    %435 = arith.addf %434, %433 : vector<8x192xf32>
    %436 = arith.divf %434, %435 : vector<8x192xf32>
    %437 = vector.extract_strided_slice %436 {offsets = [0, 0], sizes = [8, 64], strides = [1, 1]} : vector<8x192xf32> to vector<8x64xf32>
    %438 = vector.extract_strided_slice %436 {offsets = [0, 64], sizes = [8, 64], strides = [1, 1]} : vector<8x192xf32> to vector<8x64xf32>
    %439 = vector.extract_strided_slice %436 {offsets = [0, 128], sizes = [8, 64], strides = [1, 1]} : vector<8x192xf32> to vector<8x64xf32>
    %440 = vector.extract_strided_slice %430 {offsets = [0, 192], sizes = [8, 64], strides = [1, 1]} : vector<8x256xf32> to vector<8x64xf32>
    %441 = math.tanh %440 : vector<8x64xf32>
    %442 = arith.mulf %438, %368 : vector<8x64xf32>
    %443 = arith.mulf %437, %441 : vector<8x64xf32>
    %444 = arith.addf %442, %443 : vector<8x64xf32>
    %445 = math.tanh %444 : vector<8x64xf32>
    %446 = arith.mulf %439, %445 : vector<8x64xf32>
    %c5_152 = arith.constant 5 : index
    %c0_153 = arith.constant 0 : index
    %c0_154 = arith.constant 0 : index
    %447 = vector.load %arg7[%c5_152, %c0_153, %c0_154] : memref<8x8x64xf32, #tpu.memory_space<vmem>>, vector<1x8x64xf32>
    %448 = vector.shape_cast %447 : vector<1x8x64xf32> to vector<8x64xf32>
    %449 = vector.shape_cast %446 : vector<8x64xf32> to vector<1x8x64xf32>
    tpu.vector_store %arg7[%c5_152, %c0_153, %c0_154], %449 {strides = array<i32>} : memref<8x8x64xf32, #tpu.memory_space<vmem>>, vector<1x8x64xf32>,
    %c4_155 = arith.constant 4 : index
    %c0_156 = arith.constant 0 : index
    %c0_157 = arith.constant 0 : index
    %450 = vector.load %arg7[%c4_155, %c0_156, %c0_157] : memref<8x8x64xf32, #tpu.memory_space<vmem>>, vector<1x8x64xf32>
    %451 = vector.shape_cast %450 : vector<1x8x64xf32> to vector<8x64xf32>
    %452 = tpu.concatenate %451, %396 in 1 : vector<8x64xf32>, vector<8x32xf32> -> vector<8x96xf32>
    %453 = arith.truncf %452 : vector<8x96xf32> to vector<8x96xbf16>
    %cst_158 = arith.constant dense<0.000000e+00> : vector<8x128xf32>
    %454 = tpu.matmul %453, %3, %cst_158 {dimension_numbers = #tpu.dot_dimension_numbers<[1], [0], [0], [1], [0, 0, 1, 1], [], []>} : vector<8x96xbf16>, vector<96x128xbf16>, vector<8x128xf32> -> vector<8x128xf32>
    %455 = vector.broadcast %7 : vector<1x128xf32> to vector<8x128xf32>
    %456 = arith.addf %454, %455 : vector<8x128xf32>
    %457 = vector.extract_strided_slice %456 {offsets = [0, 0], sizes = [8, 96], strides = [1, 1]} : vector<8x128xf32> to vector<8x96xf32>
    %458 = arith.negf %457 : vector<8x96xf32>
    %459 = math.exp %458 : vector<8x96xf32>
    %cst_159 = arith.constant 1.000000e+00 : f32
    %460 = vector.broadcast %cst_159 : f32 to vector<8x96xf32>
    %461 = arith.addf %460, %459 : vector<8x96xf32>
    %462 = arith.divf %460, %461 : vector<8x96xf32>
    %463 = vector.extract_strided_slice %462 {offsets = [0, 0], sizes = [8, 32], strides = [1, 1]} : vector<8x96xf32> to vector<8x32xf32>
    %464 = vector.extract_strided_slice %462 {offsets = [0, 32], sizes = [8, 32], strides = [1, 1]} : vector<8x96xf32> to vector<8x32xf32>
    %465 = vector.extract_strided_slice %462 {offsets = [0, 64], sizes = [8, 32], strides = [1, 1]} : vector<8x96xf32> to vector<8x32xf32>
    %466 = vector.extract_strided_slice %456 {offsets = [0, 96], sizes = [8, 32], strides = [1, 1]} : vector<8x128xf32> to vector<8x32xf32>
    %467 = math.tanh %466 : vector<8x32xf32>
    %468 = arith.mulf %464, %394 : vector<8x32xf32>
    %469 = arith.mulf %463, %467 : vector<8x32xf32>
    %470 = arith.addf %468, %469 : vector<8x32xf32>
    %471 = math.tanh %470 : vector<8x32xf32>
    %472 = arith.mulf %465, %471 : vector<8x32xf32>
    %c4_160 = arith.constant 4 : index
    %c0_161 = arith.constant 0 : index
    %c0_162 = arith.constant 0 : index
    %473 = vector.load %arg8[%c4_160, %c0_161, %c0_162] : memref<8x8x32xf32, #tpu.memory_space<vmem>>, vector<1x8x32xf32>
    %474 = vector.shape_cast %473 : vector<1x8x32xf32> to vector<8x32xf32>
    %475 = vector.shape_cast %472 : vector<8x32xf32> to vector<1x8x32xf32>
    tpu.vector_store %arg8[%c4_160, %c0_161, %c0_162], %475 {strides = array<i32>} : memref<8x8x32xf32, #tpu.memory_space<vmem>>, vector<1x8x32xf32>,
    %c7 = arith.constant 7 : index
    %c0_163 = arith.constant 0 : index
    %c0_164 = arith.constant 0 : index
    %476 = vector.load %arg5[%c7, %c0_163, %c0_164] : memref<8x8x128xf32, #tpu.memory_space<vmem>>, vector<1x8x128xf32>
    %477 = vector.shape_cast %476 : vector<1x8x128xf32> to vector<8x128xf32>
    %478 = arith.truncf %420 : vector<8x32xf32> to vector<8x32xbf16>
    %cst_165 = arith.constant dense<0.000000e+00> : vector<8x128xf32>
    %479 = tpu.matmul %478, %1, %cst_165 {dimension_numbers = #tpu.dot_dimension_numbers<[1], [0], [0], [1], [0, 0, 1, 1], [], []>} : vector<8x32xbf16>, vector<32x128xbf16>, vector<8x128xf32> -> vector<8x128xf32>
    %480 = arith.addf %477, %479 : vector<8x128xf32>
    %481 = vector.extract_strided_slice %480 {offsets = [0, 0], sizes = [8, 96], strides = [1, 1]} : vector<8x128xf32> to vector<8x96xf32>
    %482 = arith.negf %481 : vector<8x96xf32>
    %483 = math.exp %482 : vector<8x96xf32>
    %cst_166 = arith.constant 1.000000e+00 : f32
    %484 = vector.broadcast %cst_166 : f32 to vector<8x96xf32>
    %485 = arith.addf %484, %483 : vector<8x96xf32>
    %486 = arith.divf %484, %485 : vector<8x96xf32>
    %487 = vector.extract_strided_slice %486 {offsets = [0, 0], sizes = [8, 32], strides = [1, 1]} : vector<8x96xf32> to vector<8x32xf32>
    %488 = vector.extract_strided_slice %486 {offsets = [0, 32], sizes = [8, 32], strides = [1, 1]} : vector<8x96xf32> to vector<8x32xf32>
    %489 = vector.extract_strided_slice %486 {offsets = [0, 64], sizes = [8, 32], strides = [1, 1]} : vector<8x96xf32> to vector<8x32xf32>
    %490 = vector.extract_strided_slice %480 {offsets = [0, 96], sizes = [8, 32], strides = [1, 1]} : vector<8x128xf32> to vector<8x32xf32>
    %491 = math.tanh %490 : vector<8x32xf32>
    %492 = arith.mulf %488, %418 : vector<8x32xf32>
    %493 = arith.mulf %487, %491 : vector<8x32xf32>
    %494 = arith.addf %492, %493 : vector<8x32xf32>
    %495 = math.tanh %494 : vector<8x32xf32>
    %496 = arith.mulf %489, %495 : vector<8x32xf32>
    %c7_167 = arith.constant 7 : index
    %c0_168 = arith.constant 0 : index
    %c0_169 = arith.constant 0 : index
    %497 = vector.load %arg6[%c7_167, %c0_168, %c0_169] : memref<8x8x32xf32, #tpu.memory_space<vmem>>, vector<1x8x32xf32>
    %498 = vector.shape_cast %497 : vector<1x8x32xf32> to vector<8x32xf32>
    %499 = vector.shape_cast %496 : vector<8x32xf32> to vector<1x8x32xf32>
    tpu.vector_store %arg6[%c7_167, %c0_168, %c0_169], %499 {strides = array<i32>} : memref<8x8x32xf32, #tpu.memory_space<vmem>>, vector<1x8x32xf32>,
    %c6_170 = arith.constant 6 : index
    %c0_171 = arith.constant 0 : index
    %c0_172 = arith.constant 0 : index
    %500 = vector.load %arg6[%c6_170, %c0_171, %c0_172] : memref<8x8x32xf32, #tpu.memory_space<vmem>>, vector<1x8x32xf32>
    %501 = vector.shape_cast %500 : vector<1x8x32xf32> to vector<8x32xf32>
    %502 = tpu.concatenate %501, %446 in 1 : vector<8x32xf32>, vector<8x64xf32> -> vector<8x96xf32>
    %503 = arith.truncf %502 : vector<8x96xf32> to vector<8x96xbf16>
    %cst_173 = arith.constant dense<0.000000e+00> : vector<8x256xf32>
    %504 = tpu.matmul %503, %2, %cst_173 {dimension_numbers = #tpu.dot_dimension_numbers<[1], [0], [0], [1], [0, 0, 1, 1], [], []>} : vector<8x96xbf16>, vector<96x256xbf16>, vector<8x256xf32> -> vector<8x256xf32>
    %505 = vector.broadcast %6 : vector<1x256xf32> to vector<8x256xf32>
    %506 = arith.addf %504, %505 : vector<8x256xf32>
    %507 = vector.extract_strided_slice %506 {offsets = [0, 0], sizes = [8, 192], strides = [1, 1]} : vector<8x256xf32> to vector<8x192xf32>
    %508 = arith.negf %507 : vector<8x192xf32>
    %509 = math.exp %508 : vector<8x192xf32>
    %cst_174 = arith.constant 1.000000e+00 : f32
    %510 = vector.broadcast %cst_174 : f32 to vector<8x192xf32>
    %511 = arith.addf %510, %509 : vector<8x192xf32>
    %512 = arith.divf %510, %511 : vector<8x192xf32>
    %513 = vector.extract_strided_slice %512 {offsets = [0, 0], sizes = [8, 64], strides = [1, 1]} : vector<8x192xf32> to vector<8x64xf32>
    %514 = vector.extract_strided_slice %512 {offsets = [0, 64], sizes = [8, 64], strides = [1, 1]} : vector<8x192xf32> to vector<8x64xf32>
    %515 = vector.extract_strided_slice %512 {offsets = [0, 128], sizes = [8, 64], strides = [1, 1]} : vector<8x192xf32> to vector<8x64xf32>
    %516 = vector.extract_strided_slice %506 {offsets = [0, 192], sizes = [8, 64], strides = [1, 1]} : vector<8x256xf32> to vector<8x64xf32>
    %517 = math.tanh %516 : vector<8x64xf32>
    %518 = arith.mulf %514, %444 : vector<8x64xf32>
    %519 = arith.mulf %513, %517 : vector<8x64xf32>
    %520 = arith.addf %518, %519 : vector<8x64xf32>
    %521 = math.tanh %520 : vector<8x64xf32>
    %522 = arith.mulf %515, %521 : vector<8x64xf32>
    %c6_175 = arith.constant 6 : index
    %c0_176 = arith.constant 0 : index
    %c0_177 = arith.constant 0 : index
    %523 = vector.load %arg7[%c6_175, %c0_176, %c0_177] : memref<8x8x64xf32, #tpu.memory_space<vmem>>, vector<1x8x64xf32>
    %524 = vector.shape_cast %523 : vector<1x8x64xf32> to vector<8x64xf32>
    %525 = vector.shape_cast %522 : vector<8x64xf32> to vector<1x8x64xf32>
    tpu.vector_store %arg7[%c6_175, %c0_176, %c0_177], %525 {strides = array<i32>} : memref<8x8x64xf32, #tpu.memory_space<vmem>>, vector<1x8x64xf32>,
    %c5_178 = arith.constant 5 : index
    %c0_179 = arith.constant 0 : index
    %c0_180 = arith.constant 0 : index
    %526 = vector.load %arg7[%c5_178, %c0_179, %c0_180] : memref<8x8x64xf32, #tpu.memory_space<vmem>>, vector<1x8x64xf32>
    %527 = vector.shape_cast %526 : vector<1x8x64xf32> to vector<8x64xf32>
    %528 = tpu.concatenate %527, %472 in 1 : vector<8x64xf32>, vector<8x32xf32> -> vector<8x96xf32>
    %529 = arith.truncf %528 : vector<8x96xf32> to vector<8x96xbf16>
    %cst_181 = arith.constant dense<0.000000e+00> : vector<8x128xf32>
    %530 = tpu.matmul %529, %3, %cst_181 {dimension_numbers = #tpu.dot_dimension_numbers<[1], [0], [0], [1], [0, 0, 1, 1], [], []>} : vector<8x96xbf16>, vector<96x128xbf16>, vector<8x128xf32> -> vector<8x128xf32>
    %531 = vector.broadcast %7 : vector<1x128xf32> to vector<8x128xf32>
    %532 = arith.addf %530, %531 : vector<8x128xf32>
    %533 = vector.extract_strided_slice %532 {offsets = [0, 0], sizes = [8, 96], strides = [1, 1]} : vector<8x128xf32> to vector<8x96xf32>
    %534 = arith.negf %533 : vector<8x96xf32>
    %535 = math.exp %534 : vector<8x96xf32>
    %cst_182 = arith.constant 1.000000e+00 : f32
    %536 = vector.broadcast %cst_182 : f32 to vector<8x96xf32>
    %537 = arith.addf %536, %535 : vector<8x96xf32>
    %538 = arith.divf %536, %537 : vector<8x96xf32>
    %539 = vector.extract_strided_slice %538 {offsets = [0, 0], sizes = [8, 32], strides = [1, 1]} : vector<8x96xf32> to vector<8x32xf32>
    %540 = vector.extract_strided_slice %538 {offsets = [0, 32], sizes = [8, 32], strides = [1, 1]} : vector<8x96xf32> to vector<8x32xf32>
    %541 = vector.extract_strided_slice %538 {offsets = [0, 64], sizes = [8, 32], strides = [1, 1]} : vector<8x96xf32> to vector<8x32xf32>
    %542 = vector.extract_strided_slice %532 {offsets = [0, 96], sizes = [8, 32], strides = [1, 1]} : vector<8x128xf32> to vector<8x32xf32>
    %543 = math.tanh %542 : vector<8x32xf32>
    %544 = arith.mulf %540, %470 : vector<8x32xf32>
    %545 = arith.mulf %539, %543 : vector<8x32xf32>
    %546 = arith.addf %544, %545 : vector<8x32xf32>
    %547 = math.tanh %546 : vector<8x32xf32>
    %548 = arith.mulf %541, %547 : vector<8x32xf32>
    %c5_183 = arith.constant 5 : index
    %c0_184 = arith.constant 0 : index
    %c0_185 = arith.constant 0 : index
    %549 = vector.load %arg8[%c5_183, %c0_184, %c0_185] : memref<8x8x32xf32, #tpu.memory_space<vmem>>, vector<1x8x32xf32>
    %550 = vector.shape_cast %549 : vector<1x8x32xf32> to vector<8x32xf32>
    %551 = vector.shape_cast %548 : vector<8x32xf32> to vector<1x8x32xf32>
    tpu.vector_store %arg8[%c5_183, %c0_184, %c0_185], %551 {strides = array<i32>} : memref<8x8x32xf32, #tpu.memory_space<vmem>>, vector<1x8x32xf32>,
    %c7_186 = arith.constant 7 : index
    %c0_187 = arith.constant 0 : index
    %c0_188 = arith.constant 0 : index
    %552 = vector.load %arg6[%c7_186, %c0_187, %c0_188] : memref<8x8x32xf32, #tpu.memory_space<vmem>>, vector<1x8x32xf32>
    %553 = vector.shape_cast %552 : vector<1x8x32xf32> to vector<8x32xf32>
    %554 = tpu.concatenate %553, %522 in 1 : vector<8x32xf32>, vector<8x64xf32> -> vector<8x96xf32>
    %555 = arith.truncf %554 : vector<8x96xf32> to vector<8x96xbf16>
    %cst_189 = arith.constant dense<0.000000e+00> : vector<8x256xf32>
    %556 = tpu.matmul %555, %2, %cst_189 {dimension_numbers = #tpu.dot_dimension_numbers<[1], [0], [0], [1], [0, 0, 1, 1], [], []>} : vector<8x96xbf16>, vector<96x256xbf16>, vector<8x256xf32> -> vector<8x256xf32>
    %557 = vector.broadcast %6 : vector<1x256xf32> to vector<8x256xf32>
    %558 = arith.addf %556, %557 : vector<8x256xf32>
    %559 = vector.extract_strided_slice %558 {offsets = [0, 0], sizes = [8, 192], strides = [1, 1]} : vector<8x256xf32> to vector<8x192xf32>
    %560 = arith.negf %559 : vector<8x192xf32>
    %561 = math.exp %560 : vector<8x192xf32>
    %cst_190 = arith.constant 1.000000e+00 : f32
    %562 = vector.broadcast %cst_190 : f32 to vector<8x192xf32>
    %563 = arith.addf %562, %561 : vector<8x192xf32>
    %564 = arith.divf %562, %563 : vector<8x192xf32>
    %565 = vector.extract_strided_slice %564 {offsets = [0, 0], sizes = [8, 64], strides = [1, 1]} : vector<8x192xf32> to vector<8x64xf32>
    %566 = vector.extract_strided_slice %564 {offsets = [0, 64], sizes = [8, 64], strides = [1, 1]} : vector<8x192xf32> to vector<8x64xf32>
    %567 = vector.extract_strided_slice %564 {offsets = [0, 128], sizes = [8, 64], strides = [1, 1]} : vector<8x192xf32> to vector<8x64xf32>
    %568 = vector.extract_strided_slice %558 {offsets = [0, 192], sizes = [8, 64], strides = [1, 1]} : vector<8x256xf32> to vector<8x64xf32>
    %569 = math.tanh %568 : vector<8x64xf32>
    %570 = arith.mulf %566, %520 : vector<8x64xf32>
    %571 = arith.mulf %565, %569 : vector<8x64xf32>
    %572 = arith.addf %570, %571 : vector<8x64xf32>
    %573 = math.tanh %572 : vector<8x64xf32>
    %574 = arith.mulf %567, %573 : vector<8x64xf32>
    %c7_191 = arith.constant 7 : index
    %c0_192 = arith.constant 0 : index
    %c0_193 = arith.constant 0 : index
    %575 = vector.load %arg7[%c7_191, %c0_192, %c0_193] : memref<8x8x64xf32, #tpu.memory_space<vmem>>, vector<1x8x64xf32>
    %576 = vector.shape_cast %575 : vector<1x8x64xf32> to vector<8x64xf32>
    %577 = vector.shape_cast %574 : vector<8x64xf32> to vector<1x8x64xf32>
    tpu.vector_store %arg7[%c7_191, %c0_192, %c0_193], %577 {strides = array<i32>} : memref<8x8x64xf32, #tpu.memory_space<vmem>>, vector<1x8x64xf32>,
    %c6_194 = arith.constant 6 : index
    %c0_195 = arith.constant 0 : index
    %c0_196 = arith.constant 0 : index
    %578 = vector.load %arg7[%c6_194, %c0_195, %c0_196] : memref<8x8x64xf32, #tpu.memory_space<vmem>>, vector<1x8x64xf32>
    %579 = vector.shape_cast %578 : vector<1x8x64xf32> to vector<8x64xf32>
    %580 = tpu.concatenate %579, %548 in 1 : vector<8x64xf32>, vector<8x32xf32> -> vector<8x96xf32>
    %581 = arith.truncf %580 : vector<8x96xf32> to vector<8x96xbf16>
    %cst_197 = arith.constant dense<0.000000e+00> : vector<8x128xf32>
    %582 = tpu.matmul %581, %3, %cst_197 {dimension_numbers = #tpu.dot_dimension_numbers<[1], [0], [0], [1], [0, 0, 1, 1], [], []>} : vector<8x96xbf16>, vector<96x128xbf16>, vector<8x128xf32> -> vector<8x128xf32>
    %583 = vector.broadcast %7 : vector<1x128xf32> to vector<8x128xf32>
    %584 = arith.addf %582, %583 : vector<8x128xf32>
    %585 = vector.extract_strided_slice %584 {offsets = [0, 0], sizes = [8, 96], strides = [1, 1]} : vector<8x128xf32> to vector<8x96xf32>
    %586 = arith.negf %585 : vector<8x96xf32>
    %587 = math.exp %586 : vector<8x96xf32>
    %cst_198 = arith.constant 1.000000e+00 : f32
    %588 = vector.broadcast %cst_198 : f32 to vector<8x96xf32>
    %589 = arith.addf %588, %587 : vector<8x96xf32>
    %590 = arith.divf %588, %589 : vector<8x96xf32>
    %591 = vector.extract_strided_slice %590 {offsets = [0, 0], sizes = [8, 32], strides = [1, 1]} : vector<8x96xf32> to vector<8x32xf32>
    %592 = vector.extract_strided_slice %590 {offsets = [0, 32], sizes = [8, 32], strides = [1, 1]} : vector<8x96xf32> to vector<8x32xf32>
    %593 = vector.extract_strided_slice %590 {offsets = [0, 64], sizes = [8, 32], strides = [1, 1]} : vector<8x96xf32> to vector<8x32xf32>
    %594 = vector.extract_strided_slice %584 {offsets = [0, 96], sizes = [8, 32], strides = [1, 1]} : vector<8x128xf32> to vector<8x32xf32>
    %595 = math.tanh %594 : vector<8x32xf32>
    %596 = arith.mulf %592, %546 : vector<8x32xf32>
    %597 = arith.mulf %591, %595 : vector<8x32xf32>
    %598 = arith.addf %596, %597 : vector<8x32xf32>
    %599 = math.tanh %598 : vector<8x32xf32>
    %600 = arith.mulf %593, %599 : vector<8x32xf32>
    %c6_199 = arith.constant 6 : index
    %c0_200 = arith.constant 0 : index
    %c0_201 = arith.constant 0 : index
    %601 = vector.load %arg8[%c6_199, %c0_200, %c0_201] : memref<8x8x32xf32, #tpu.memory_space<vmem>>, vector<1x8x32xf32>
    %602 = vector.shape_cast %601 : vector<1x8x32xf32> to vector<8x32xf32>
    %603 = vector.shape_cast %600 : vector<8x32xf32> to vector<1x8x32xf32>
    tpu.vector_store %arg8[%c6_199, %c0_200, %c0_201], %603 {strides = array<i32>} : memref<8x8x32xf32, #tpu.memory_space<vmem>>, vector<1x8x32xf32>,
    %c7_202 = arith.constant 7 : index
    %c0_203 = arith.constant 0 : index
    %c0_204 = arith.constant 0 : index
    %604 = vector.load %arg7[%c7_202, %c0_203, %c0_204] : memref<8x8x64xf32, #tpu.memory_space<vmem>>, vector<1x8x64xf32>
    %605 = vector.shape_cast %604 : vector<1x8x64xf32> to vector<8x64xf32>
    %606 = tpu.concatenate %605, %600 in 1 : vector<8x64xf32>, vector<8x32xf32> -> vector<8x96xf32>
    %607 = arith.truncf %606 : vector<8x96xf32> to vector<8x96xbf16>
    %cst_205 = arith.constant dense<0.000000e+00> : vector<8x128xf32>
    %608 = tpu.matmul %607, %3, %cst_205 {dimension_numbers = #tpu.dot_dimension_numbers<[1], [0], [0], [1], [0, 0, 1, 1], [], []>} : vector<8x96xbf16>, vector<96x128xbf16>, vector<8x128xf32> -> vector<8x128xf32>
    %609 = vector.broadcast %7 : vector<1x128xf32> to vector<8x128xf32>
    %610 = arith.addf %608, %609 : vector<8x128xf32>
    %611 = vector.extract_strided_slice %610 {offsets = [0, 0], sizes = [8, 96], strides = [1, 1]} : vector<8x128xf32> to vector<8x96xf32>
    %612 = arith.negf %611 : vector<8x96xf32>
    %613 = math.exp %612 : vector<8x96xf32>
    %cst_206 = arith.constant 1.000000e+00 : f32
    %614 = vector.broadcast %cst_206 : f32 to vector<8x96xf32>
    %615 = arith.addf %614, %613 : vector<8x96xf32>
    %616 = arith.divf %614, %615 : vector<8x96xf32>
    %617 = vector.extract_strided_slice %616 {offsets = [0, 0], sizes = [8, 32], strides = [1, 1]} : vector<8x96xf32> to vector<8x32xf32>
    %618 = vector.extract_strided_slice %616 {offsets = [0, 32], sizes = [8, 32], strides = [1, 1]} : vector<8x96xf32> to vector<8x32xf32>
    %619 = vector.extract_strided_slice %616 {offsets = [0, 64], sizes = [8, 32], strides = [1, 1]} : vector<8x96xf32> to vector<8x32xf32>
    %620 = vector.extract_strided_slice %610 {offsets = [0, 96], sizes = [8, 32], strides = [1, 1]} : vector<8x128xf32> to vector<8x32xf32>
    %621 = math.tanh %620 : vector<8x32xf32>
    %622 = arith.mulf %618, %598 : vector<8x32xf32>
    %623 = arith.mulf %617, %621 : vector<8x32xf32>
    %624 = arith.addf %622, %623 : vector<8x32xf32>
    %625 = math.tanh %624 : vector<8x32xf32>
    %626 = arith.mulf %619, %625 : vector<8x32xf32>
    %c7_207 = arith.constant 7 : index
    %c0_208 = arith.constant 0 : index
    %c0_209 = arith.constant 0 : index
    %627 = vector.load %arg8[%c7_207, %c0_208, %c0_209] : memref<8x8x32xf32, #tpu.memory_space<vmem>>, vector<1x8x32xf32>
    %628 = vector.shape_cast %627 : vector<1x8x32xf32> to vector<8x32xf32>
    %629 = vector.shape_cast %626 : vector<8x32xf32> to vector<1x8x32xf32>
    tpu.vector_store %arg8[%c7_207, %c0_208, %c0_209], %629 {strides = array<i32>} : memref<8x8x32xf32, #tpu.memory_space<vmem>>, vector<1x8x32xf32>,
    %c0_210 = arith.constant 0 : index
    %c0_211 = arith.constant 0 : index
    %c0_212 = arith.constant 0 : index
    %630 = vector.load %arg8[%c0_210, %c0_211, %c0_212] : memref<8x8x32xf32, #tpu.memory_space<vmem>>, vector<8x8x32xf32>
    %631 = vector.shape_cast %630 : vector<8x8x32xf32> to vector<64x32xf32>
    %632 = arith.truncf %631 : vector<64x32xf32> to vector<64x32xbf16>
    %cst_213 = arith.constant dense<0.000000e+00> : vector<64x128xf32>
    %633 = tpu.matmul %632, %4, %cst_213 {dimension_numbers = #tpu.dot_dimension_numbers<[1], [0], [0], [1], [0, 0, 1, 1], [], []>} : vector<64x32xbf16>, vector<32x128xbf16>, vector<64x128xf32> -> vector<64x128xf32>
    %634 = vector.broadcast %8 : vector<1x128xf32> to vector<64x128xf32>
    %635 = arith.addf %633, %634 : vector<64x128xf32>
    %636 = vector.shape_cast %635 : vector<64x128xf32> to vector<8x8x128xf32>
    %c0_214 = arith.constant 0 : index
    %c0_215 = arith.constant 0 : index
    %c0_216 = arith.constant 0 : index
    %637 = vector.load %arg4[%c0_214, %c0_215, %c0_216] : memref<8x8x128xf32, #tpu.memory_space<vmem>>, vector<8x8x128xf32>
    tpu.vector_store %arg4[%c0_214, %c0_215, %c0_216], %636 {strides = array<i32>} : memref<8x8x128xf32, #tpu.memory_space<vmem>>, vector<8x8x128xf32>,
    return
  }
  func.func @transform_0(%arg0: i32) -> (i32, i32, i32) {
    %c0_i32 = arith.constant 0 : i32
    %c0_i32_0 = arith.constant 0 : i32
    %c0_i32_1 = arith.constant 0 : i32
    return %c0_i32, %arg0, %c0_i32_0 : i32, i32, i32
  }
  func.func @transform_1(%arg0: i32) -> (i32, i32) {
    %c0_i32 = arith.constant 0 : i32
    %c0_i32_0 = arith.constant 0 : i32
    %c0_i32_1 = arith.constant 0 : i32
    return %c0_i32, %c0_i32_0 : i32, i32
  }
  func.func @transform_2(%arg0: i32) -> (i32, i32) {
    %c0_i32 = arith.constant 0 : i32
    %c0_i32_0 = arith.constant 0 : i32
    %c0_i32_1 = arith.constant 0 : i32
    return %c0_i32, %c0_i32_0 : i32, i32
  }
  func.func @transform_3(%arg0: i32) -> (i32, i32, i32) {
    %c0_i32 = arith.constant 0 : i32
    %c0_i32_0 = arith.constant 0 : i32
    %c0_i32_1 = arith.constant 0 : i32
    return %c0_i32, %arg0, %c0_i32_0 : i32, i32, i32
  }
}

</mosaic_0001>

<llo_original>
// kernel: tpu_custom_call.1
$region0: #{tpu_custom_call.1}
  #allocation0 [shape = 'u32[]', space=smem, size = 0x4, offset = 0x4, fixed_abs, tag = 'smem constant byte address 0x4 - core index']
  #allocation1 [shape = 'u32[144,128]{1,0:T(1,128)}', space=vmem, size = 0x12000, scoped, tag = 'internal scratch']
  #allocation2 [shape = 'f32[8,8,128]{2,1,0:T(8,128)}', space=vmem, size = 0x8000, scoped, tag = 'scratch operand']
  #allocation3 [shape = 'f32[8,8,32]{2,1,0:T(8,128)}', space=vmem, size = 0x8000, scoped, tag = 'scratch operand']
  #allocation4 [shape = 'f32[8,8,64]{2,1,0:T(8,128)}', space=vmem, size = 0x8000, scoped, tag = 'scratch operand']
  #allocation5 [shape = 'f32[8,8,32]{2,1,0:T(8,128)}', space=vmem, size = 0x8000, scoped, tag = 'scratch operand']
  %s0 = inlined_call_operand.hbm [shape: bf16[8,8,16], index: 0, kind: input, shape index: {}]
  %s1 = inlined_call_operand.hbm [shape: bf16[272,256], index: 1, kind: input, shape index: {}]
  %s2 = inlined_call_operand.hbm [shape: f32[4,256], index: 2, kind: input, shape index: {}]
  %s3 = inlined_call_operand.hbm [shape: f32[8,8,128], index: 3, kind: output, shape index: {}]
  %s4 = sld [smem:[#allocation0]]
  $region34: #{tpu_custom_call.1} parent=0
    _
  %s6 = ssub.s32 1, %s4
  %s7 = scalar_select 0, %s6, %s4
  $region1: #{tpu_custom_call.1} parent=0
    #allocation6 [shape = 'u8[16384]{0}', space=vmem, size = 0x4000, scoped, tag = 'input window, operand 0, single buffered']
    #allocation7 [shape = 's32[1]{0}', space=sflag, size = 0x4, scoped, tag = 'scoped memory for tpu_custom_call.1']
    #allocation8 [shape = 's32[1]{0}', space=sflag, size = 0x4, scoped, tag = 'scoped memory for tpu_custom_call.1']
    #allocation9 [shape = 'u8[139264]{0}', space=vmem, size = 0x22000, scoped, tag = 'input window, operand 1, single buffered']
    #allocation10 [shape = 's32[1]{0}', space=sflag, size = 0x4, scoped, tag = 'scoped memory for tpu_custom_call.1']
    #allocation11 [shape = 'u8[4096]{0}', space=vmem, size = 0x1000, scoped, tag = 'input window, operand 2, single buffered']
    #allocation12 [shape = 'u8[32768]{0}', space=vmem, size = 0x8000, scoped, tag = 'output window, operand 0, single buffered']
    %8 = vsyncpa [#allocation7], 0
    %9 = vsyncpa [#allocation10], 0
    %10 = vsyncpa [#allocation8], 0
    // Predicated region
    $region2: #{tpu_custom_call.1} parent=1 // pred_check
      _
    $region3: #{tpu_custom_call.1} parent=1 // pred_check_branch
      %12 = sbr.rel (0) target = $region5
    $region4: #{tpu_custom_call.1} parent=1 // pred_region
      %s14 = ssub.s32 512, 512
      %15 = vsyncadd [#allocation7], %s14
      %s16 = sshll.u32 [#allocation6], 4
      %s17 = int_to_ptr.vmem [resolvable:$true] %s16
      %22 = dma.hbm_to_vmem [thread:$0]  %s0, 512, %s17, [#allocation7], 64, 64, 4
    $region5: #{tpu_custom_call.1} parent=1 // pred_fallthru
      _
    // Predicated region
    $region6: #{tpu_custom_call.1} parent=1 // pred_check
      _
    $region7: #{tpu_custom_call.1} parent=1 // pred_check_branch
      %24 = sbr.rel (0) target = $region9
    $region8: #{tpu_custom_call.1} parent=1 // pred_region
      %s26 = ssub.s32 4352, 4352
      %27 = vsyncadd [#allocation10], %s26
      %s28 = sshll.u32 [#allocation9], 4
      %s29 = int_to_ptr.vmem [resolvable:$true] %s28
      %34 = dma.hbm_to_vmem [thread:$0]  %s1, 4352, %s29, [#allocation10], 128, 128, 8
    $region9: #{tpu_custom_call.1} parent=1 // pred_fallthru
      _
    // Predicated region
    $region10: #{tpu_custom_call.1} parent=1 // pred_check
      _
    $region11: #{tpu_custom_call.1} parent=1 // pred_check_branch
      %36 = sbr.rel (0) target = $region13
    $region12: #{tpu_custom_call.1} parent=1 // pred_region
      %s38 = ssub.s32 128, 128
      %39 = vsyncadd [#allocation10], %s38
      %s41 = sshll.u32 [#allocation11], 4
      %s42 = int_to_ptr.vmem [resolvable:$true] %s41
      %44 = dma.hbm_to_vmem [thread:$0]  %s2, 128, %s42, [#allocation10]
    $region13: #{tpu_custom_call.1} parent=1 // pred_fallthru
      _
    // Predicated region
    $region14: #{tpu_custom_call.1} parent=1 // pred_check
      _
    $region15: #{tpu_custom_call.1} parent=1 // pred_check_branch
      %46 = sbr.rel (0) target = $region17
    $region16: #{tpu_custom_call.1} parent=1 // pred_region
      %47 = dma.done [#allocation7], 512
    $region17: #{tpu_custom_call.1} parent=1 // pred_fallthru
      _
    // Predicated region
    $region18: #{tpu_custom_call.1} parent=1 // pred_check
      _
    $region19: #{tpu_custom_call.1} parent=1 // pred_check_branch
      %49 = sbr.rel (0) target = $region21
    $region20: #{tpu_custom_call.1} parent=1 // pred_region
      %50 = dma.done [#allocation10], 4352
    $region21: #{tpu_custom_call.1} parent=1 // pred_fallthru
      _
    // Predicated region
    $region22: #{tpu_custom_call.1} parent=1 // pred_check
      _
    $region23: #{tpu_custom_call.1} parent=1 // pred_check_branch
      %52 = sbr.rel (0) target = $region25
    $region24: #{tpu_custom_call.1} parent=1 // pred_region
      %53 = dma.done [#allocation10], 128
    $region25: #{tpu_custom_call.1} parent=1 // pred_fallthru
      _
    %v55 = vld [vmem:[#allocation9] sm:$0xf]
    %v56 = vld [vmem:[#allocation9 + $0x8] sm:$0xf]
    %v57 = vld [vmem:[#allocation9 + $0x10] sm:$0xf]
    %v58 = vld [vmem:[#allocation9 + $0x18] sm:$0xf]
    %v59 = vld [vmem:[#allocation9 + $0x20] sm:$0xf]
    %v60 = vld [vmem:[#allocation9 + $0x28] sm:$0xf]
    %v61 = vld [vmem:[#allocation9 + $0x30] sm:$0xff]
    %v62 = vld [vmem:[#allocation9 + $0x38] sm:$0xff]
    %v63 = vld [vmem:[#allocation9 + $0x40] sm:$0xff]
    %v64 = vld [vmem:[#allocation9 + $0x48] sm:$0xff]
    %v65 = vld [vmem:[#allocation9 + $0x50] sm:$0xff]
    %v66 = vld [vmem:[#allocation9 + $0x58] sm:$0xff]
    %v67 = vld [vmem:[#allocation9 + $0x60] sm:$0xff]
    %v68 = vld [vmem:[#allocation9 + $0x68] sm:$0xff]
    %v69 = vld [vmem:[#allocation9 + $0x70] sm:$0xff]
    %v70 = vld [vmem:[#allocation9 + $0x78] sm:$0xff]
    %v71 = vld [vmem:[#allocation9 + $0x80] sm:$0xff]
    %v72 = vld [vmem:[#allocation9 + $0x88] sm:$0xff]
    %v73 = vld [vmem:[#allocation9 + $0x90] sm:$0xf]
    %v74 = vld [vmem:[#allocation9 + $0x98] sm:$0xf]
    %v75 = vld [vmem:[#allocation9 + $0xa0] sm:$0xf]
    %v76 = vld [vmem:[#allocation9 + $0xa8] sm:$0xf]
    %v77 = vld [vmem:[#allocation9 + $0xb0] sm:$0xf]
    %v78 = vld [vmem:[#allocation9 + $0xb8] sm:$0xf]
    %v79 = vld [vmem:[#allocation9 + $0xc0] sm:$0xf]
    %v80 = vld [vmem:[#allocation9 + $0xc8] sm:$0xf]
    %v81 = vld [vmem:[#allocation9 + $0xd0] sm:$0xf]
    %v82 = vld [vmem:[#allocation9 + $0xd8] sm:$0xf]
    %v83 = vld [vmem:[#allocation9 + $0xe0] sm:$0xf]
    %v84 = vld [vmem:[#allocation9 + $0xe8] sm:$0xf]
    %v85 = vld [vmem:[#allocation9 + $0xf0] sm:$0xf]
    %v86 = vld [vmem:[#allocation9 + $0xf8] sm:$0xf]
    %v87 = vld [vmem:[#allocation9 + $0x100] sm:$0xf]
    %v88 = vld [vmem:[#allocation9 + $0x108] sm:$0xf]
    %v89 = vld [vmem:[#allocation11] sm:$0x1]
    %s90 = scalar_lea.vmem [#allocation11], 1
    %v91 = vld [vmem:[%s90] ss:$4 sm:$0x3]
    %v92 = vld [vmem:[#allocation11 + $0x2] sm:$0x1]
    %v93 = vld [vmem:[#allocation11 + $0x3] sm:$0x1]
    %v94 = vld [vmem:[#allocation6] sm:$0xf]
    %v95 = vld [vmem:[#allocation6 + $0x4] sm:$0xf]
    %v96 = vld [vmem:[#allocation6 + $0x8] sm:$0xf]
    %v97 = vld [vmem:[#allocation6 + $0xc] sm:$0xf]
    %v98 = vld [vmem:[#allocation6 + $0x10] sm:$0xf]
    %v99 = vld [vmem:[#allocation6 + $0x14] sm:$0xf]
    %v100 = vld [vmem:[#allocation6 + $0x18] sm:$0xf]
    %v101 = vld [vmem:[#allocation6 + $0x1c] sm:$0xf]
    %v102 = vlaneseq
    %v103 = vshrl.u32 %v102, 7
    %v104 = vsub.s32 0, %v103
    %v105 = vrot.slane %v89, %v104
    %v114 = vunpack.c.l.b16 %v94
    %v115 = vunpack.c.l.b16 %v95
    %v116 = vunpack.c.l.b16 %v96
    %v117 = vunpack.c.l.b16 %v97
    %v118 = vunpack.c.l.b16 %v98
    %v119 = vunpack.c.l.b16 %v99
    %v120 = vunpack.c.l.b16 %v100
    %v121 = vunpack.c.l.b16 %v101
    %v122 = vpack.c.b16 %v115, %v114
    %v123 = vpack.c.b16 %v117, %v116
    %v124 = vpack.c.b16 %v119, %v118
    %v125 = vpack.c.b16 %v121, %v120
    %v128 = vunpack.c.l.b16 %v55
    %v129 = vunpack.c.l.b16 %v56
    %v130 = vpack.c.b16 %v129, %v128
    %vm132 = vcmask 130048
    %v134 = vsel %vm132, %v122, 0
    %v137 = vsel %vm132, %v123, 0
    %v140 = vsel %vm132, %v124, 0
    %v143 = vsel %vm132, %v125, 0
    %145 = vmatprep.subr.bf16.mxu0 0
    %146 = vmatpush1.bf16.msra.mxu0 0
    %147 = vmatprep.subr.bf16.mxu0 0
    %148 = vmatpush1.bf16.msra.mxu0 0
    %149 = vmatprep.subr.bf16.mxu0 0
    %150 = vmatpush1.bf16.msra.mxu0 0
    %151 = vmatprep.subr.bf16.mxu0 0
    %152 = vmatpush1.bf16.msra.mxu0 0
    %153 = vmatprep.subr.bf16.mxu0 0
    %154 = vmatpush1.bf16.msra.mxu0 0
    %155 = vmatprep.subr.bf16.mxu0 0
    %156 = vmatpush1.bf16.msra.mxu0 0
    %157 = vmatprep.subr.bf16.mxu0 0
    %158 = vmatpush1.bf16.msra.mxu0 0
    %159 = vmatprep.subr.bf16.mxu0 0
    %160 = vmatpush1.bf16.msra.mxu0 %v130
    %161 = vmatprep.subr.bf16.mxu0 0
    %162 = vmatpush2.bf16.msra.mxu0 0
    %163 = vmatprep.subr.bf16.mxu0 0
    %164 = vmatpush2.bf16.msra.mxu0 0
    %165 = vmatprep.subr.bf16.mxu0 0
    %166 = vmatpush2.bf16.msra.mxu0 0
    %167 = vmatprep.subr.bf16.mxu0 0
    %168 = vmatpush2.bf16.msra.mxu0 0
    %169 = vmatprep.subr.bf16.mxu0 0
    %170 = vmatpush2.bf16.msra.mxu0 0
    %171 = vmatprep.subr.bf16.mxu0 0
    %172 = vmatpush2.bf16.msra.mxu0 0
    %173 = vmatprep.subr.bf16.mxu0 0
    %174 = vmatpush2.bf16.msra.mxu0 0
    %175 = vmatprep.subr.bf16.mxu0 0
    %176 = vmatpush2.bf16.msra.mxu0 0
    %177 = vmatprep.mubr.bf16.mxu0 0
    %178 = vmatmul.mubr.bf16.gmra.mxu0 %v134
    %v179 = vpop.f32.mrf.mxu0
    %v180 = vadd.f32 %v105, %v179
    %v181 = vpop.f32.mrf.mxu0
    %v182 = vpop.f32.mrf.mxu0
    %v183 = vadd.f32 %v105, %v182
    %v184 = vpop.f32.mrf.mxu0
    %185 = vmatprep.mubr.bf16.mxu0 0
    %186 = vmatmul.mubr.bf16.gmra.mxu0 %v137
    %v187 = vpop.f32.mrf.mxu0
    %v188 = vadd.f32 %v105, %v187
    %v189 = vpop.f32.mrf.mxu0
    %v190 = vpop.f32.mrf.mxu0
    %v191 = vadd.f32 %v105, %v190
    %v192 = vpop.f32.mrf.mxu0
    %193 = vmatprep.mubr.bf16.mxu0 0
    %194 = vmatmul.mubr.bf16.gmra.mxu0 %v140
    %v195 = vpop.f32.mrf.mxu0
    %v196 = vadd.f32 %v105, %v195
    %v197 = vpop.f32.mrf.mxu0
    %v198 = vpop.f32.mrf.mxu0
    %v199 = vadd.f32 %v105, %v198
    %v200 = vpop.f32.mrf.mxu0
    %201 = vmatprep.mubr.bf16.mxu0 0
    %202 = vmatmul.mubr.bf16.gmra.mxu0 %v143
    %v203 = vpop.f32.mrf.mxu0
    %v204 = vadd.f32 %v105, %v203
    %v205 = vpop.f32.mrf.mxu0
    %v206 = vpop.f32.mrf.mxu0
    %v207 = vadd.f32 %v105, %v206
    %v208 = vpop.f32.mrf.mxu0
    %209 = vdwg.mxu0
    %210 = vst [vmem:[#allocation2] sm:$0xff] %v180
    %211 = vst [vmem:[#allocation2 + $0x8] sm:$0xff] %v183
    %212 = vst [vmem:[#allocation2 + $0x10] sm:$0xff] %v188
    %213 = vst [vmem:[#allocation2 + $0x18] sm:$0xff] %v191
    %214 = vst [vmem:[#allocation2 + $0x20] sm:$0xff] %v196
    %215 = vst [vmem:[#allocation2 + $0x28] sm:$0xff] %v199
    %216 = vst [vmem:[#allocation2 + $0x30] sm:$0xff] %v204
    %217 = vst [vmem:[#allocation2 + $0x38] sm:$0xff] %v207
    %v218 = vld [vmem:[#allocation2] sm:$0xff]
    %v223 = vunpack.c.l.b16 %v57
    %v224 = vunpack.c.l.b16 %v58
    %v225 = vunpack.c.l.b16 %v59
    %v226 = vunpack.c.l.b16 %v60
    %v227 = vpack.c.b16 %v224, %v223
    %v228 = vpack.c.b16 %v226, %v225
    %vm231 = vcmask 261120
    %v233 = vsel %vm231, 0, 0
    %235 = vmatprep.subr.bf16.mxu0 0
    %236 = vmatpush1.bf16.msra.mxu0 0
    %237 = vmatprep.subr.bf16.mxu0 0
    %238 = vmatpush1.bf16.msra.mxu0 0
    %239 = vmatprep.subr.bf16.mxu0 0
    %240 = vmatpush1.bf16.msra.mxu0 0
    %241 = vmatprep.subr.bf16.mxu0 0
    %242 = vmatpush1.bf16.msra.mxu0 0
    %243 = vmatprep.subr.bf16.mxu0 0
    %244 = vmatpush1.bf16.msra.mxu0 0
    %245 = vmatprep.subr.bf16.mxu0 0
    %246 = vmatpush1.bf16.msra.mxu0 0
    %247 = vmatprep.subr.bf16.mxu0 0
    %248 = vmatpush1.bf16.msra.mxu0 %v228
    %249 = vmatprep.subr.bf16.mxu0 0
    %250 = vmatpush1.bf16.msra.mxu0 %v227
    %251 = vmatprep.subr.bf16.mxu0 0
    %252 = vmatpush2.bf16.msra.mxu0 0
    %253 = vmatprep.subr.bf16.mxu0 0
    %254 = vmatpush2.bf16.msra.mxu0 0
    %255 = vmatprep.subr.bf16.mxu0 0
    %256 = vmatpush2.bf16.msra.mxu0 0
    %257 = vmatprep.subr.bf16.mxu0 0
    %258 = vmatpush2.bf16.msra.mxu0 0
    %259 = vmatprep.subr.bf16.mxu0 0
    %260 = vmatpush2.bf16.msra.mxu0 0
    %261 = vmatprep.subr.bf16.mxu0 0
    %262 = vmatpush2.bf16.msra.mxu0 0
    %263 = vmatprep.subr.bf16.mxu0 0
    %264 = vmatpush2.bf16.msra.mxu0 0
    %265 = vmatprep.subr.bf16.mxu0 0
    %266 = vmatpush2.bf16.msra.mxu0 0
    %267 = vmatprep.mubr.bf16.mxu0 0
    %268 = vmatmul.mubr.bf16.gmra.mxu0 %v233
    %v269 = vpop.f32.mrf.mxu0
    %v270 = vadd.f32 0.0, %v269
    %v271 = vpop.f32.mrf.mxu0
    %v272 = vpop.f32.mrf.mxu0
    %v273 = vpop.f32.mrf.mxu0
    %274 = vdwg.mxu0
    %v275 = vadd.f32 %v218, %v270
    %v276 = vxor.u32 %v275, 2147483648
    %v277 = vmul.f32 %v276, 1.442695
    %v278 = vpow.pop %v277
    %v279 = vadd.f32 %v278, 1.0
    %v280 = vrcp.pop %v279
    %v281 = vmul.f32 1.0, %v280
    %v282 = vtanh.pop %v275
    %v283 = vmul.f32 %v281, 0.0
    %285 = vrot.lane.b32.xlu0 %v282, 32
    %v286 = vpop.permute.xlu0 %285
    %v288 = vmul.f32 %v281, %v286
    %290 = vrot.lane.b32.xlu0 %v288, 32
    %v291 = vpop.permute.xlu0 %290
    %v293 = vadd.f32 %v283, %v291
    %v294 = vtanh.pop %v293
    %296 = vrot.lane.b32.xlu0 %v294, 32
    %v297 = vpop.permute.xlu0 %296
    %v299 = vmul.f32 %v281, %v297
    %301 = vrot.lane.b32.xlu0 %v299, 64
    %v302 = vpop.permute.xlu0 %301
    %304 = vst.msk [vmem:[#allocation3] sm:$0xff] %vm231, %v302
    %s305 = scalar_lea.vmem [#allocation2], 8
    %v306 = vld [vmem:[%s305] sm:$0xff]
    %v307 = vpack.c.bf16 %v299, %v299
    %309 = vrot.lane.b32.xlu0 %v307, 64
    %v310 = vpop.permute.xlu0 %309
    %v312 = vsel %vm231, %v310, 0
    %314 = vmatprep.subr.bf16.mxu0 0
    %315 = vmatpush1.bf16.msra.mxu0 0
    %316 = vmatprep.subr.bf16.mxu0 0
    %317 = vmatpush1.bf16.msra.mxu0 0
    %318 = vmatprep.subr.bf16.mxu0 0
    %319 = vmatpush1.bf16.msra.mxu0 0
    %320 = vmatprep.subr.bf16.mxu0 0
    %321 = vmatpush1.bf16.msra.mxu0 0
    %322 = vmatprep.subr.bf16.mxu0 0
    %323 = vmatpush1.bf16.msra.mxu0 0
    %324 = vmatprep.subr.bf16.mxu0 0
    %325 = vmatpush1.bf16.msra.mxu0 0
    %326 = vmatprep.subr.bf16.mxu0 0
    %327 = vmatpush1.bf16.msra.mxu0 %v228
    %328 = vmatprep.subr.bf16.mxu0 0
    %329 = vmatpush1.bf16.msra.mxu0 %v227
    %330 = vmatprep.subr.bf16.mxu0 0
    %331 = vmatpush2.bf16.msra.mxu0 0
    %332 = vmatprep.subr.bf16.mxu0 0
    %333 = vmatpush2.bf16.msra.mxu0 0
    %334 = vmatprep.subr.bf16.mxu0 0
    %335 = vmatpush2.bf16.msra.mxu0 0
    %336 = vmatprep.subr.bf16.mxu0 0
    %337 = vmatpush2.bf16.msra.mxu0 0
    %338 = vmatprep.subr.bf16.mxu0 0
    %339 = vmatpush2.bf16.msra.mxu0 0
    %340 = vmatprep.subr.bf16.mxu0 0
    %341 = vmatpush2.bf16.msra.mxu0 0
    %342 = vmatprep.subr.bf16.mxu0 0
    %343 = vmatpush2.bf16.msra.mxu0 0
    %344 = vmatprep.subr.bf16.mxu0 0
    %345 = vmatpush2.bf16.msra.mxu0 0
    %346 = vmatprep.mubr.bf16.mxu0 0
    %347 = vmatmul.mubr.bf16.gmra.mxu0 %v312
    %v348 = vpop.f32.mrf.mxu0
    %v349 = vadd.f32 0.0, %v348
    %v350 = vpop.f32.mrf.mxu0
    %v351 = vpop.f32.mrf.mxu0
    %v352 = vpop.f32.mrf.mxu0
    %353 = vdwg.mxu0
    %v354 = vadd.f32 %v306, %v349
    %v355 = vxor.u32 %v354, 2147483648
    %v356 = vmul.f32 %v355, 1.442695
    %v357 = vpow.pop %v356
    %v358 = vadd.f32 %v357, 1.0
    %v359 = vrcp.pop %v358
    %v360 = vmul.f32 1.0, %v359
    %v361 = vtanh.pop %v354
    %v362 = vmul.f32 %v360, %v293
    %364 = vrot.lane.b32.xlu0 %v361, 32
    %v365 = vpop.permute.xlu0 %364
    %v367 = vmul.f32 %v360, %v365
    %369 = vrot.lane.b32.xlu0 %v367, 32
    %v370 = vpop.permute.xlu0 %369
    %v372 = vadd.f32 %v362, %v370
    %v373 = vtanh.pop %v372
    %375 = vrot.lane.b32.xlu0 %v373, 32
    %v376 = vpop.permute.xlu0 %375
    %v378 = vmul.f32 %v360, %v376
    %380 = vrot.lane.b32.xlu0 %v378, 64
    %v381 = vpop.permute.xlu0 %380
    %s383 = scalar_lea.vmem [#allocation3], 8
    %384 = vst.msk [vmem:[%s383] sm:$0xff] %vm231, %v381
    %v385 = vld [vmem:[#allocation3] sm:$0xff]
    %v386 = vsel %vm231, %v385, 0.0
    %v387 = vpack.c.bf16 %v386, %v386
    %v389 = vlaneseq
    %v390 = vshrl.u32 %v389, 7
    %v391 = vsub.s32 0, %v390
    %v392 = vrot.slane %v91, %v391
    %v393 = vlaneseq
    %v394 = vshrl.u32 %v393, 7
    %v395 = vsub.s32 1, %v394
    %v396 = vrot.slane %v91, %v395
    %v411 = vunpack.c.l.b16 %v61
    %v412 = vunpack.c.h.b16 %v61
    %v413 = vunpack.c.l.b16 %v62
    %v414 = vunpack.c.h.b16 %v62
    %v415 = vunpack.c.l.b16 %v63
    %v416 = vunpack.c.h.b16 %v63
    %v417 = vunpack.c.l.b16 %v64
    %v418 = vunpack.c.h.b16 %v64
    %v419 = vunpack.c.l.b16 %v65
    %v420 = vunpack.c.h.b16 %v65
    %v421 = vunpack.c.l.b16 %v66
    %v422 = vunpack.c.h.b16 %v66
    %v423 = vunpack.c.l.b16 %v67
    %v424 = vunpack.c.h.b16 %v67
    %v425 = vunpack.c.l.b16 %v68
    %v426 = vunpack.c.h.b16 %v68
    %v427 = vunpack.c.l.b16 %v69
    %v428 = vunpack.c.h.b16 %v69
    %v429 = vunpack.c.l.b16 %v70
    %v430 = vunpack.c.h.b16 %v70
    %v431 = vunpack.c.l.b16 %v71
    %v432 = vunpack.c.h.b16 %v71
    %v433 = vunpack.c.l.b16 %v72
    %v434 = vunpack.c.h.b16 %v72
    %v435 = vpack.c.b16 %v413, %v411
    %v436 = vpack.c.b16 %v414, %v412
    %v437 = vpack.c.b16 %v417, %v415
    %v438 = vpack.c.b16 %v418, %v416
    %v439 = vpack.c.b16 %v421, %v419
    %v440 = vpack.c.b16 %v422, %v420
    %v441 = vpack.c.b16 %v425, %v423
    %v442 = vpack.c.b16 %v426, %v424
    %v443 = vpack.c.b16 %v429, %v427
    %v444 = vpack.c.b16 %v430, %v428
    %v445 = vpack.c.b16 %v433, %v431
    %v446 = vpack.c.b16 %v434, %v432
    %vm459 = vcmask 785408
    %v461 = vsel %vm459, %v387, 0
    %463 = vmatprep.subr.bf16.mxu0 0
    %464 = vmatpush1.bf16.msra.mxu0 0
    %465 = vmatprep.subr.bf16.mxu0 0
    %466 = vmatpush1.bf16.msra.mxu0 0
    %467 = vmatprep.subr.bf16.mxu0 %v446
    %468 = vmatpush1.bf16.msra.mxu0 %v445
    %469 = vmatprep.subr.bf16.mxu0 %v444
    %470 = vmatpush1.bf16.msra.mxu0 %v443
    %471 = vmatprep.subr.bf16.mxu0 %v442
    %472 = vmatpush1.bf16.msra.mxu0 %v441
    %473 = vmatprep.subr.bf16.mxu0 %v440
    %474 = vmatpush1.bf16.msra.mxu0 %v439
    %475 = vmatprep.subr.bf16.mxu0 %v438
    %476 = vmatpush1.bf16.msra.mxu0 %v437
    %477 = vmatprep.subr.bf16.mxu0 %v436
    %478 = vmatpush1.bf16.msra.mxu0 %v435
    %479 = vmatprep.subr.bf16.mxu0 0
    %480 = vmatpush2.bf16.msra.mxu0 0
    %481 = vmatprep.subr.bf16.mxu0 0
    %482 = vmatpush2.bf16.msra.mxu0 0
    %483 = vmatprep.subr.bf16.mxu0 0
    %484 = vmatpush2.bf16.msra.mxu0 0
    %485 = vmatprep.subr.bf16.mxu0 0
    %486 = vmatpush2.bf16.msra.mxu0 0
    %487 = vmatprep.subr.bf16.mxu0 0
    %488 = vmatpush2.bf16.msra.mxu0 0
    %489 = vmatprep.subr.bf16.mxu0 0
    %490 = vmatpush2.bf16.msra.mxu0 0
    %491 = vmatprep.subr.bf16.mxu0 0
    %492 = vmatpush2.bf16.msra.mxu0 0
    %493 = vmatprep.subr.bf16.mxu0 0
    %494 = vmatpush2.bf16.msra.mxu0 0
    %495 = vmatprep.mubr.bf16.mxu0 0
    %496 = vmatmul.mubr.bf16.gmra.mxu0 %v461
    %v497 = vpop.f32.mrf.mxu0
    %v498 = vadd.f32 %v392, %v497
    %v499 = vpop.f32.mrf.mxu0
    %v500 = vadd.f32 %v396, %v499
    %v501 = vpop.f32.mrf.mxu0
    %v502 = vpop.f32.mrf.mxu0
    %503 = vdwg.mxu0
    %v504 = vxor.u32 %v498, 2147483648
    %v505 = vxor.u32 %v500, 2147483648
    %v506 = vmul.f32 %v504, 1.442695
    %v507 = vpow.pop %v506
    %v508 = vmul.f32 %v505, 1.442695
    %v509 = vpow.pop %v508
    %v510 = vadd.f32 %v507, 1.0
    %v511 = vadd.f32 %v509, 1.0
    %v512 = vrcp.pop %v510
    %v513 = vmul.f32 1.0, %v512
    %v514 = vrcp.pop %v511
    %v515 = vmul.f32 1.0, %v514
    %v516 = vtanh.pop %v500
    %v517 = vmul.f32 %v513, 0.0
    %519 = vrot.lane.b32.xlu0 %v516, 64
    %v520 = vpop.permute.xlu0 %519
    %v522 = vmul.f32 %v513, %v520
    %524 = vrot.lane.b32.xlu0 %v522, 64
    %v525 = vpop.permute.xlu0 %524
    %v527 = vadd.f32 %v517, %v525
    %v528 = vtanh.pop %v527
    %530 = vrot.lane.b32.xlu0 %v528, 64
    %v531 = vpop.permute.xlu0 %530
    %v533 = vmul.f32 %v515, %v531
    %vm534 = vcmask 523264
    %535 = vst.msk [vmem:[#allocation4] sm:$0xff] %vm534, %v533
    %s536 = scalar_lea.vmem [#allocation2], 16
    %v537 = vld [vmem:[%s536] sm:$0xff]
    %v538 = vpack.c.bf16 %v378, %v378
    %540 = vrot.lane.b32.xlu0 %v538, 64
    %v541 = vpop.permute.xlu0 %540
    %v543 = vsel %vm231, %v541, 0
    %545 = vmatprep.subr.bf16.mxu0 0
    %546 = vmatpush1.bf16.msra.mxu0 0
    %547 = vmatprep.subr.bf16.mxu0 0
    %548 = vmatpush1.bf16.msra.mxu0 0
    %549 = vmatprep.subr.bf16.mxu0 0
    %550 = vmatpush1.bf16.msra.mxu0 0
    %551 = vmatprep.subr.bf16.mxu0 0
    %552 = vmatpush1.bf16.msra.mxu0 0
    %553 = vmatprep.subr.bf16.mxu0 0
    %554 = vmatpush1.bf16.msra.mxu0 0
    %555 = vmatprep.subr.bf16.mxu0 0
    %556 = vmatpush1.bf16.msra.mxu0 0
    %557 = vmatprep.subr.bf16.mxu0 0
    %558 = vmatpush1.bf16.msra.mxu0 %v228
    %559 = vmatprep.subr.bf16.mxu0 0
    %560 = vmatpush1.bf16.msra.mxu0 %v227
    %561 = vmatprep.subr.bf16.mxu0 0
    %562 = vmatpush2.bf16.msra.mxu0 0
    %563 = vmatprep.subr.bf16.mxu0 0
    %564 = vmatpush2.bf16.msra.mxu0 0
    %565 = vmatprep.subr.bf16.mxu0 0
    %566 = vmatpush2.bf16.msra.mxu0 0
    %567 = vmatprep.subr.bf16.mxu0 0
    %568 = vmatpush2.bf16.msra.mxu0 0
    %569 = vmatprep.subr.bf16.mxu0 0
    %570 = vmatpush2.bf16.msra.mxu0 0
    %571 = vmatprep.subr.bf16.mxu0 0
    %572 = vmatpush2.bf16.msra.mxu0 0
    %573 = vmatprep.subr.bf16.mxu0 0
    %574 = vmatpush2.bf16.msra.mxu0 0
    %575 = vmatprep.subr.bf16.mxu0 0
    %576 = vmatpush2.bf16.msra.mxu0 0
    %577 = vmatprep.mubr.bf16.mxu0 0
    %578 = vmatmul.mubr.bf16.gmra.mxu0 %v543
    %v579 = vpop.f32.mrf.mxu0
    %v580 = vadd.f32 0.0, %v579
    %v581 = vpop.f32.mrf.mxu0
    %v582 = vpop.f32.mrf.mxu0
    %v583 = vpop.f32.mrf.mxu0
    %584 = vdwg.mxu0
    %v585 = vadd.f32 %v537, %v580
    %v586 = vxor.u32 %v585, 2147483648
    %v587 = vmul.f32 %v586, 1.442695
    %v588 = vpow.pop %v587
    %v589 = vadd.f32 %v588, 1.0
    %v590 = vrcp.pop %v589
    %v591 = vmul.f32 1.0, %v590
    %v592 = vtanh.pop %v585
    %v593 = vmul.f32 %v591, %v372
    %595 = vrot.lane.b32.xlu0 %v592, 32
    %v596 = vpop.permute.xlu0 %595
    %v598 = vmul.f32 %v591, %v596
    %600 = vrot.lane.b32.xlu0 %v598, 32
    %v601 = vpop.permute.xlu0 %600
    %v603 = vadd.f32 %v593, %v601
    %v604 = vtanh.pop %v603
    %606 = vrot.lane.b32.xlu0 %v604, 32
    %v607 = vpop.permute.xlu0 %606
    %v609 = vmul.f32 %v591, %v607
    %611 = vrot.lane.b32.xlu0 %v609, 64
    %v612 = vpop.permute.xlu0 %611
    %s614 = scalar_lea.vmem [#allocation3], 16
    %615 = vst.msk [vmem:[%s614] sm:$0xff] %vm231, %v612
    %v616 = vld [vmem:[%s383] sm:$0xff]
    %618 = vrot.lane.b32.xlu0 %v533, 32
    %v619 = vpop.permute.xlu0 %618
    %v621 = vsel %vm231, %v616, %v619
    %v622 = vpack.c.bf16 %v621, %v621
    %v624 = vsel %vm459, %v622, 0
    %626 = vmatprep.subr.bf16.mxu0 0
    %627 = vmatpush1.bf16.msra.mxu0 0
    %628 = vmatprep.subr.bf16.mxu0 0
    %629 = vmatpush1.bf16.msra.mxu0 0
    %630 = vmatprep.subr.bf16.mxu0 %v446
    %631 = vmatpush1.bf16.msra.mxu0 %v445
    %632 = vmatprep.subr.bf16.mxu0 %v444
    %633 = vmatpush1.bf16.msra.mxu0 %v443
    %634 = vmatprep.subr.bf16.mxu0 %v442
    %635 = vmatpush1.bf16.msra.mxu0 %v441
    %636 = vmatprep.subr.bf16.mxu0 %v440
    %637 = vmatpush1.bf16.msra.mxu0 %v439
    %638 = vmatprep.subr.bf16.mxu0 %v438
    %639 = vmatpush1.bf16.msra.mxu0 %v437
    %640 = vmatprep.subr.bf16.mxu0 %v436
    %641 = vmatpush1.bf16.msra.mxu0 %v435
    %642 = vmatprep.subr.bf16.mxu0 0
    %643 = vmatpush2.bf16.msra.mxu0 0
    %644 = vmatprep.subr.bf16.mxu0 0
    %645 = vmatpush2.bf16.msra.mxu0 0
    %646 = vmatprep.subr.bf16.mxu0 0
    %647 = vmatpush2.bf16.msra.mxu0 0
    %648 = vmatprep.subr.bf16.mxu0 0
    %649 = vmatpush2.bf16.msra.mxu0 0
    %650 = vmatprep.subr.bf16.mxu0 0
    %651 = vmatpush2.bf16.msra.mxu0 0
    %652 = vmatprep.subr.bf16.mxu0 0
    %653 = vmatpush2.bf16.msra.mxu0 0
    %654 = vmatprep.subr.bf16.mxu0 0
    %655 = vmatpush2.bf16.msra.mxu0 0
    %656 = vmatprep.subr.bf16.mxu0 0
    %657 = vmatpush2.bf16.msra.mxu0 0
    %658 = vmatprep.mubr.bf16.mxu0 0
    %659 = vmatmul.mubr.bf16.gmra.mxu0 %v624
    %v660 = vpop.f32.mrf.mxu0
    %v661 = vadd.f32 %v392, %v660
    %v662 = vpop.f32.mrf.mxu0
    %v663 = vadd.f32 %v396, %v662
    %v664 = vpop.f32.mrf.mxu0
    %v665 = vpop.f32.mrf.mxu0
    %666 = vdwg.mxu0
    %v667 = vxor.u32 %v661, 2147483648
    %v668 = vxor.u32 %v663, 2147483648
    %v669 = vmul.f32 %v667, 1.442695
    %v670 = vpow.pop %v669
    %v671 = vmul.f32 %v668, 1.442695
    %v672 = vpow.pop %v671
    %v673 = vadd.f32 %v670, 1.0
    %v674 = vadd.f32 %v672, 1.0
    %v675 = vrcp.pop %v673
    %v676 = vmul.f32 1.0, %v675
    %v677 = vrcp.pop %v674
    %v678 = vmul.f32 1.0, %v677
    %v679 = vtanh.pop %v663
    %v680 = vmul.f32 %v676, %v527
    %682 = vrot.lane.b32.xlu0 %v679, 64
    %v683 = vpop.permute.xlu0 %682
    %v685 = vmul.f32 %v676, %v683
    %687 = vrot.lane.b32.xlu0 %v685, 64
    %v688 = vpop.permute.xlu0 %687
    %v690 = vadd.f32 %v680, %v688
    %v691 = vtanh.pop %v690
    %693 = vrot.lane.b32.xlu0 %v691, 64
    %v694 = vpop.permute.xlu0 %693
    %v696 = vmul.f32 %v678, %v694
    %s697 = scalar_lea.vmem [#allocation4], 8
    %698 = vst.msk [vmem:[%s697] sm:$0xff] %vm534, %v696
    %v699 = vld [vmem:[#allocation4] sm:$0xff]
    %v700 = vsel %vm534, %v699, 0.0
    %v701 = vpack.c.bf16 %v700, %v700
    %v702 = vlaneseq
    %v703 = vshrl.u32 %v702, 7
    %v704 = vsub.s32 0, %v703
    %v705 = vrot.slane %v92, %v704
    %v718 = vunpack.c.l.b16 %v73
    %v719 = vunpack.c.l.b16 %v74
    %v720 = vunpack.c.l.b16 %v75
    %v721 = vunpack.c.l.b16 %v76
    %v722 = vunpack.c.l.b16 %v77
    %v723 = vunpack.c.l.b16 %v78
    %v724 = vunpack.c.l.b16 %v79
    %v725 = vunpack.c.l.b16 %v80
    %v726 = vunpack.c.l.b16 %v81
    %v727 = vunpack.c.l.b16 %v82
    %v728 = vunpack.c.l.b16 %v83
    %v729 = vunpack.c.l.b16 %v84
    %v730 = vpack.c.b16 %v719, %v718
    %v731 = vpack.c.b16 %v721, %v720
    %v732 = vpack.c.b16 %v723, %v722
    %v733 = vpack.c.b16 %v725, %v724
    %v734 = vpack.c.b16 %v727, %v726
    %v735 = vpack.c.b16 %v729, %v728
    %v743 = vsel %vm459, %v701, 0
    %745 = vmatprep.subr.bf16.mxu0 0
    %746 = vmatpush1.bf16.msra.mxu0 0
    %747 = vmatprep.subr.bf16.mxu0 0
    %748 = vmatpush1.bf16.msra.mxu0 0
    %749 = vmatprep.subr.bf16.mxu0 0
    %750 = vmatpush1.bf16.msra.mxu0 %v735
    %751 = vmatprep.subr.bf16.mxu0 0
    %752 = vmatpush1.bf16.msra.mxu0 %v734
    %753 = vmatprep.subr.bf16.mxu0 0
    %754 = vmatpush1.bf16.msra.mxu0 %v733
    %755 = vmatprep.subr.bf16.mxu0 0
    %756 = vmatpush1.bf16.msra.mxu0 %v732
    %757 = vmatprep.subr.bf16.mxu0 0
    %758 = vmatpush1.bf16.msra.mxu0 %v731
    %759 = vmatprep.subr.bf16.mxu0 0
    %760 = vmatpush1.bf16.msra.mxu0 %v730
    %761 = vmatprep.subr.bf16.mxu0 0
    %762 = vmatpush2.bf16.msra.mxu0 0
    %763 = vmatprep.subr.bf16.mxu0 0
    %764 = vmatpush2.bf16.msra.mxu0 0
    %765 = vmatprep.subr.bf16.mxu0 0
    %766 = vmatpush2.bf16.msra.mxu0 0
    %767 = vmatprep.subr.bf16.mxu0 0
    %768 = vmatpush2.bf16.msra.mxu0 0
    %769 = vmatprep.subr.bf16.mxu0 0
    %770 = vmatpush2.bf16.msra.mxu0 0
    %771 = vmatprep.subr.bf16.mxu0 0
    %772 = vmatpush2.bf16.msra.mxu0 0
    %773 = vmatprep.subr.bf16.mxu0 0
    %774 = vmatpush2.bf16.msra.mxu0 0
    %775 = vmatprep.subr.bf16.mxu0 0
    %776 = vmatpush2.bf16.msra.mxu0 0
    %777 = vmatprep.mubr.bf16.mxu0 0
    %778 = vmatmul.mubr.bf16.gmra.mxu0 %v743
    %v779 = vpop.f32.mrf.mxu0
    %v780 = vadd.f32 %v705, %v779
    %v781 = vpop.f32.mrf.mxu0
    %v782 = vpop.f32.mrf.mxu0
    %v783 = vpop.f32.mrf.mxu0
    %784 = vdwg.mxu0
    %v785 = vxor.u32 %v780, 2147483648
    %v786 = vmul.f32 %v785, 1.442695
    %v787 = vpow.pop %v786
    %v788 = vadd.f32 %v787, 1.0
    %v789 = vrcp.pop %v788
    %v790 = vmul.f32 1.0, %v789
    %v791 = vtanh.pop %v780
    %v792 = vmul.f32 %v790, 0.0
    %794 = vrot.lane.b32.xlu0 %v791, 32
    %v795 = vpop.permute.xlu0 %794
    %v797 = vmul.f32 %v790, %v795
    %799 = vrot.lane.b32.xlu0 %v797, 32
    %v800 = vpop.permute.xlu0 %799
    %v802 = vadd.f32 %v792, %v800
    %v803 = vtanh.pop %v802
    %805 = vrot.lane.b32.xlu0 %v803, 32
    %v806 = vpop.permute.xlu0 %805
    %v808 = vmul.f32 %v790, %v806
    %810 = vrot.lane.b32.xlu0 %v808, 64
    %v811 = vpop.permute.xlu0 %810
    %813 = vst.msk [vmem:[#allocation5] sm:$0xff] %vm231, %v811
    %s814 = scalar_lea.vmem [#allocation2], 24
    %v815 = vld [vmem:[%s814] sm:$0xff]
    %v816 = vpack.c.bf16 %v609, %v609
    %818 = vrot.lane.b32.xlu0 %v816, 64
    %v819 = vpop.permute.xlu0 %818
    %v821 = vsel %vm231, %v819, 0
    %823 = vmatprep.subr.bf16.mxu0 0
    %824 = vmatpush1.bf16.msra.mxu0 0
    %825 = vmatprep.subr.bf16.mxu0 0
    %826 = vmatpush1.bf16.msra.mxu0 0
    %827 = vmatprep.subr.bf16.mxu0 0
    %828 = vmatpush1.bf16.msra.mxu0 0
    %829 = vmatprep.subr.bf16.mxu0 0
    %830 = vmatpush1.bf16.msra.mxu0 0
    %831 = vmatprep.subr.bf16.mxu0 0
    %832 = vmatpush1.bf16.msra.mxu0 0
    %833 = vmatprep.subr.bf16.mxu0 0
    %834 = vmatpush1.bf16.msra.mxu0 0
    %835 = vmatprep.subr.bf16.mxu0 0
    %836 = vmatpush1.bf16.msra.mxu0 %v228
    %837 = vmatprep.subr.bf16.mxu0 0
    %838 = vmatpush1.bf16.msra.mxu0 %v227
    %839 = vmatprep.subr.bf16.mxu0 0
    %840 = vmatpush2.bf16.msra.mxu0 0
    %841 = vmatprep.subr.bf16.mxu0 0
    %842 = vmatpush2.bf16.msra.mxu0 0
    %843 = vmatprep.subr.bf16.mxu0 0
    %844 = vmatpush2.bf16.msra.mxu0 0
    %845 = vmatprep.subr.bf16.mxu0 0
    %846 = vmatpush2.bf16.msra.mxu0 0
    %847 = vmatprep.subr.bf16.mxu0 0
    %848 = vmatpush2.bf16.msra.mxu0 0
    %849 = vmatprep.subr.bf16.mxu0 0
    %850 = vmatpush2.bf16.msra.mxu0 0
    %851 = vmatprep.subr.bf16.mxu0 0
    %852 = vmatpush2.bf16.msra.mxu0 0
    %853 = vmatprep.subr.bf16.mxu0 0
    %854 = vmatpush2.bf16.msra.mxu0 0
    %855 = vmatprep.mubr.bf16.mxu0 0
    %856 = vmatmul.mubr.bf16.gmra.mxu0 %v821
    %v857 = vpop.f32.mrf.mxu0
    %v858 = vadd.f32 0.0, %v857
    %v859 = vpop.f32.mrf.mxu0
    %v860 = vpop.f32.mrf.mxu0
    %v861 = vpop.f32.mrf.mxu0
    %862 = vdwg.mxu0
    %v863 = vadd.f32 %v815, %v858
    %v864 = vxor.u32 %v863, 2147483648
    %v865 = vmul.f32 %v864, 1.442695
    %v866 = vpow.pop %v865
    %v867 = vadd.f32 %v866, 1.0
    %v868 = vrcp.pop %v867
    %v869 = vmul.f32 1.0, %v868
    %v870 = vtanh.pop %v863
    %v871 = vmul.f32 %v869, %v603
    %873 = vrot.lane.b32.xlu0 %v870, 32
    %v874 = vpop.permute.xlu0 %873
    %v876 = vmul.f32 %v869, %v874
    %878 = vrot.lane.b32.xlu0 %v876, 32
    %v879 = vpop.permute.xlu0 %878
    %v881 = vadd.f32 %v871, %v879
    %v882 = vtanh.pop %v881
    %884 = vrot.lane.b32.xlu0 %v882, 32
    %v885 = vpop.permute.xlu0 %884
    %v887 = vmul.f32 %v869, %v885
    %889 = vrot.lane.b32.xlu0 %v887, 64
    %v890 = vpop.permute.xlu0 %889
    %s892 = scalar_lea.vmem [#allocation3], 24
    %893 = vst.msk [vmem:[%s892] sm:$0xff] %vm231, %v890
    %v894 = vld [vmem:[%s614] sm:$0xff]
    %896 = vrot.lane.b32.xlu0 %v696, 32
    %v897 = vpop.permute.xlu0 %896
    %v899 = vsel %vm231, %v894, %v897
    %v900 = vpack.c.bf16 %v899, %v899
    %v902 = vsel %vm459, %v900, 0
    %904 = vmatprep.subr.bf16.mxu0 0
    %905 = vmatpush1.bf16.msra.mxu0 0
    %906 = vmatprep.subr.bf16.mxu0 0
    %907 = vmatpush1.bf16.msra.mxu0 0
    %908 = vmatprep.subr.bf16.mxu0 %v446
    %909 = vmatpush1.bf16.msra.mxu0 %v445
    %910 = vmatprep.subr.bf16.mxu0 %v444
    %911 = vmatpush1.bf16.msra.mxu0 %v443
    %912 = vmatprep.subr.bf16.mxu0 %v442
    %913 = vmatpush1.bf16.msra.mxu0 %v441
    %914 = vmatprep.subr.bf16.mxu0 %v440
    %915 = vmatpush1.bf16.msra.mxu0 %v439
    %916 = vmatprep.subr.bf16.mxu0 %v438
    %917 = vmatpush1.bf16.msra.mxu0 %v437
    %918 = vmatprep.subr.bf16.mxu0 %v436
    %919 = vmatpush1.bf16.msra.mxu0 %v435
    %920 = vmatprep.subr.bf16.mxu0 0
    %921 = vmatpush2.bf16.msra.mxu0 0
    %922 = vmatprep.subr.bf16.mxu0 0
    %923 = vmatpush2.bf16.msra.mxu0 0
    %924 = vmatprep.subr.bf16.mxu0 0
    %925 = vmatpush2.bf16.msra.mxu0 0
    %926 = vmatprep.subr.bf16.mxu0 0
    %927 = vmatpush2.bf16.msra.mxu0 0
    %928 = vmatprep.subr.bf16.mxu0 0
    %929 = vmatpush2.bf16.msra.mxu0 0
    %930 = vmatprep.subr.bf16.mxu0 0
    %931 = vmatpush2.bf16.msra.mxu0 0
    %932 = vmatprep.subr.bf16.mxu0 0
    %933 = vmatpush2.bf16.msra.mxu0 0
    %934 = vmatprep.subr.bf16.mxu0 0
    %935 = vmatpush2.bf16.msra.mxu0 0
    %936 = vmatprep.mubr.bf16.mxu0 0
    %937 = vmatmul.mubr.bf16.gmra.mxu0 %v902
    %v938 = vpop.f32.mrf.mxu0
    %v939 = vadd.f32 %v392, %v938
    %v940 = vpop.f32.mrf.mxu0
    %v941 = vadd.f32 %v396, %v940
    %v942 = vpop.f32.mrf.mxu0
    %v943 = vpop.f32.mrf.mxu0
    %944 = vdwg.mxu0
    %v945 = vxor.u32 %v939, 2147483648
    %v946 = vxor.u32 %v941, 2147483648
    %v947 = vmul.f32 %v945, 1.442695
    %v948 = vpow.pop %v947
    %v949 = vmul.f32 %v946, 1.442695
    %v950 = vpow.pop %v949
    %v951 = vadd.f32 %v948, 1.0
    %v952 = vadd.f32 %v950, 1.0
    %v953 = vrcp.pop %v951
    %v954 = vmul.f32 1.0, %v953
    %v955 = vrcp.pop %v952
    %v956 = vmul.f32 1.0, %v955
    %v957 = vtanh.pop %v941
    %v958 = vmul.f32 %v954, %v690
    %960 = vrot.lane.b32.xlu0 %v957, 64
    %v961 = vpop.permute.xlu0 %960
    %v963 = vmul.f32 %v954, %v961
    %965 = vrot.lane.b32.xlu0 %v963, 64
    %v966 = vpop.permute.xlu0 %965
    %v968 = vadd.f32 %v958, %v966
    %v969 = vtanh.pop %v968
    %971 = vrot.lane.b32.xlu0 %v969, 64
    %v972 = vpop.permute.xlu0 %971
    %v974 = vmul.f32 %v956, %v972
    %s975 = scalar_lea.vmem [#allocation4], 16
    %976 = vst.msk [vmem:[%s975] sm:$0xff] %vm534, %v974
    %v977 = vld [vmem:[%s697] sm:$0xff]
    %v978 = vsel %vm534, %v977, %v808
    %v979 = vpack.c.bf16 %v978, %v978
    %v981 = vsel %vm459, %v979, 0
    %983 = vmatprep.subr.bf16.mxu0 0
    %984 = vmatpush1.bf16.msra.mxu0 0
    %985 = vmatprep.subr.bf16.mxu0 0
    %986 = vmatpush1.bf16.msra.mxu0 0
    %987 = vmatprep.subr.bf16.mxu0 0
    %988 = vmatpush1.bf16.msra.mxu0 %v735
    %989 = vmatprep.subr.bf16.mxu0 0
    %990 = vmatpush1.bf16.msra.mxu0 %v734
    %991 = vmatprep.subr.bf16.mxu0 0
    %992 = vmatpush1.bf16.msra.mxu0 %v733
    %993 = vmatprep.subr.bf16.mxu0 0
    %994 = vmatpush1.bf16.msra.mxu0 %v732
    %995 = vmatprep.subr.bf16.mxu0 0
    %996 = vmatpush1.bf16.msra.mxu0 %v731
    %997 = vmatprep.subr.bf16.mxu0 0
    %998 = vmatpush1.bf16.msra.mxu0 %v730
    %999 = vmatprep.subr.bf16.mxu0 0
    %1000 = vmatpush2.bf16.msra.mxu0 0
    %1001 = vmatprep.subr.bf16.mxu0 0
    %1002 = vmatpush2.bf16.msra.mxu0 0
    %1003 = vmatprep.subr.bf16.mxu0 0
    %1004 = vmatpush2.bf16.msra.mxu0 0
    %1005 = vmatprep.subr.bf16.mxu0 0
    %1006 = vmatpush2.bf16.msra.mxu0 0
    %1007 = vmatprep.subr.bf16.mxu0 0
    %1008 = vmatpush2.bf16.msra.mxu0 0
    %1009 = vmatprep.subr.bf16.mxu0 0
    %1010 = vmatpush2.bf16.msra.mxu0 0
    %1011 = vmatprep.subr.bf16.mxu0 0
    %1012 = vmatpush2.bf16.msra.mxu0 0
    %1013 = vmatprep.subr.bf16.mxu0 0
    %1014 = vmatpush2.bf16.msra.mxu0 0
    %1015 = vmatprep.mubr.bf16.mxu0 0
    %1016 = vmatmul.mubr.bf16.gmra.mxu0 %v981
    %v1017 = vpop.f32.mrf.mxu0
    %v1018 = vadd.f32 %v705, %v1017
    %v1019 = vpop.f32.mrf.mxu0
    %v1020 = vpop.f32.mrf.mxu0
    %v1021 = vpop.f32.mrf.mxu0
    %1022 = vdwg.mxu0
    %v1023 = vxor.u32 %v1018, 2147483648
    %v1024 = vmul.f32 %v1023, 1.442695
    %v1025 = vpow.pop %v1024
    %v1026 = vadd.f32 %v1025, 1.0
    %v1027 = vrcp.pop %v1026
    %v1028 = vmul.f32 1.0, %v1027
    %v1029 = vtanh.pop %v1018
    %v1030 = vmul.f32 %v1028, %v802
    %1032 = vrot.lane.b32.xlu0 %v1029, 32
    %v1033 = vpop.permute.xlu0 %1032
    %v1035 = vmul.f32 %v1028, %v1033
    %1037 = vrot.lane.b32.xlu0 %v1035, 32
    %v1038 = vpop.permute.xlu0 %1037
    %v1040 = vadd.f32 %v1030, %v1038
    %v1041 = vtanh.pop %v1040
    %1043 = vrot.lane.b32.xlu0 %v1041, 32
    %v1044 = vpop.permute.xlu0 %1043
    %v1046 = vmul.f32 %v1028, %v1044
    %1048 = vrot.lane.b32.xlu0 %v1046, 64
    %v1049 = vpop.permute.xlu0 %1048
    %s1051 = scalar_lea.vmem [#allocation5], 8
    %1052 = vst.msk [vmem:[%s1051] sm:$0xff] %vm231, %v1049
    %s1053 = scalar_lea.vmem [#allocation2], 32
    %v1054 = vld [vmem:[%s1053] sm:$0xff]
    %v1055 = vpack.c.bf16 %v887, %v887
    %1057 = vrot.lane.b32.xlu0 %v1055, 64
    %v1058 = vpop.permute.xlu0 %1057
    %v1060 = vsel %vm231, %v1058, 0
    %1062 = vmatprep.subr.bf16.mxu0 0
    %1063 = vmatpush1.bf16.msra.mxu0 0
    %1064 = vmatprep.subr.bf16.mxu0 0
    %1065 = vmatpush1.bf16.msra.mxu0 0
    %1066 = vmatprep.subr.bf16.mxu0 0
    %1067 = vmatpush1.bf16.msra.mxu0 0
    %1068 = vmatprep.subr.bf16.mxu0 0
    %1069 = vmatpush1.bf16.msra.mxu0 0
    %1070 = vmatprep.subr.bf16.mxu0 0
    %1071 = vmatpush1.bf16.msra.mxu0 0
    %1072 = vmatprep.subr.bf16.mxu0 0
    %1073 = vmatpush1.bf16.msra.mxu0 0
    %1074 = vmatprep.subr.bf16.mxu0 0
    %1075 = vmatpush1.bf16.msra.mxu0 %v228
    %1076 = vmatprep.subr.bf16.mxu0 0
    %1077 = vmatpush1.bf16.msra.mxu0 %v227
    %1078 = vmatprep.subr.bf16.mxu0 0
    %1079 = vmatpush2.bf16.msra.mxu0 0
    %1080 = vmatprep.subr.bf16.mxu0 0
    %1081 = vmatpush2.bf16.msra.mxu0 0
    %1082 = vmatprep.subr.bf16.mxu0 0
    %1083 = vmatpush2.bf16.msra.mxu0 0
    %1084 = vmatprep.subr.bf16.mxu0 0
    %1085 = vmatpush2.bf16.msra.mxu0 0
    %1086 = vmatprep.subr.bf16.mxu0 0
    %1087 = vmatpush2.bf16.msra.mxu0 0
    %1088 = vmatprep.subr.bf16.mxu0 0
    %1089 = vmatpush2.bf16.msra.mxu0 0
    %1090 = vmatprep.subr.bf16.mxu0 0
    %1091 = vmatpush2.bf16.msra.mxu0 0
    %1092 = vmatprep.subr.bf16.mxu0 0
    %1093 = vmatpush2.bf16.msra.mxu0 0
    %1094 = vmatprep.mubr.bf16.mxu0 0
    %1095 = vmatmul.mubr.bf16.gmra.mxu0 %v1060
    %v1096 = vpop.f32.mrf.mxu0
    %v1097 = vadd.f32 0.0, %v1096
    %v1098 = vpop.f32.mrf.mxu0
    %v1099 = vpop.f32.mrf.mxu0
    %v1100 = vpop.f32.mrf.mxu0
    %1101 = vdwg.mxu0
    %v1102 = vadd.f32 %v1054, %v1097
    %v1103 = vxor.u32 %v1102, 2147483648
    %v1104 = vmul.f32 %v1103, 1.442695
    %v1105 = vpow.pop %v1104
    %v1106 = vadd.f32 %v1105, 1.0
    %v1107 = vrcp.pop %v1106
    %v1108 = vmul.f32 1.0, %v1107
    %v1109 = vtanh.pop %v1102
    %v1110 = vmul.f32 %v1108, %v881
    %1112 = vrot.lane.b32.xlu0 %v1109, 32
    %v1113 = vpop.permute.xlu0 %1112
    %v1115 = vmul.f32 %v1108, %v1113
    %1117 = vrot.lane.b32.xlu0 %v1115, 32
    %v1118 = vpop.permute.xlu0 %1117
    %v1120 = vadd.f32 %v1110, %v1118
    %v1121 = vtanh.pop %v1120
    %1123 = vrot.lane.b32.xlu0 %v1121, 32
    %v1124 = vpop.permute.xlu0 %1123
    %v1126 = vmul.f32 %v1108, %v1124
    %1128 = vrot.lane.b32.xlu0 %v1126, 64
    %v1129 = vpop.permute.xlu0 %1128
    %s1131 = scalar_lea.vmem [#allocation3], 32
    %1132 = vst.msk [vmem:[%s1131] sm:$0xff] %vm231, %v1129
    %v1133 = vld [vmem:[%s892] sm:$0xff]
    %1135 = vrot.lane.b32.xlu0 %v974, 32
    %v1136 = vpop.permute.xlu0 %1135
    %v1138 = vsel %vm231, %v1133, %v1136
    %v1139 = vpack.c.bf16 %v1138, %v1138
    %v1141 = vsel %vm459, %v1139, 0
    %1143 = vmatprep.subr.bf16.mxu0 0
    %1144 = vmatpush1.bf16.msra.mxu0 0
    %1145 = vmatprep.subr.bf16.mxu0 0
    %1146 = vmatpush1.bf16.msra.mxu0 0
    %1147 = vmatprep.subr.bf16.mxu0 %v446
    %1148 = vmatpush1.bf16.msra.mxu0 %v445
    %1149 = vmatprep.subr.bf16.mxu0 %v444
    %1150 = vmatpush1.bf16.msra.mxu0 %v443
    %1151 = vmatprep.subr.bf16.mxu0 %v442
    %1152 = vmatpush1.bf16.msra.mxu0 %v441
    %1153 = vmatprep.subr.bf16.mxu0 %v440
    %1154 = vmatpush1.bf16.msra.mxu0 %v439
    %1155 = vmatprep.subr.bf16.mxu0 %v438
    %1156 = vmatpush1.bf16.msra.mxu0 %v437
    %1157 = vmatprep.subr.bf16.mxu0 %v436
    %1158 = vmatpush1.bf16.msra.mxu0 %v435
    %1159 = vmatprep.subr.bf16.mxu0 0
    %1160 = vmatpush2.bf16.msra.mxu0 0
    %1161 = vmatprep.subr.bf16.mxu0 0
    %1162 = vmatpush2.bf16.msra.mxu0 0
    %1163 = vmatprep.subr.bf16.mxu0 0
    %1164 = vmatpush2.bf16.msra.mxu0 0
    %1165 = vmatprep.subr.bf16.mxu0 0
    %1166 = vmatpush2.bf16.msra.mxu0 0
    %1167 = vmatprep.subr.bf16.mxu0 0
    %1168 = vmatpush2.bf16.msra.mxu0 0
    %1169 = vmatprep.subr.bf16.mxu0 0
    %1170 = vmatpush2.bf16.msra.mxu0 0
    %1171 = vmatprep.subr.bf16.mxu0 0
    %1172 = vmatpush2.bf16.msra.mxu0 0
    %1173 = vmatprep.subr.bf16.mxu0 0
    %1174 = vmatpush2.bf16.msra.mxu0 0
    %1175 = vmatprep.mubr.bf16.mxu0 0
    %1176 = vmatmul.mubr.bf16.gmra.mxu0 %v1141
    %v1177 = vpop.f32.mrf.mxu0
    %v1178 = vadd.f32 %v392, %v1177
    %v1179 = vpop.f32.mrf.mxu0
    %v1180 = vadd.f32 %v396, %v1179
    %v1181 = vpop.f32.mrf.mxu0
    %v1182 = vpop.f32.mrf.mxu0
    %1183 = vdwg.mxu0
    %v1184 = vxor.u32 %v1178, 2147483648
    %v1185 = vxor.u32 %v1180, 2147483648
    %v1186 = vmul.f32 %v1184, 1.442695
    %v1187 = vpow.pop %v1186
    %v1188 = vmul.f32 %v1185, 1.442695
    %v1189 = vpow.pop %v1188
    %v1190 = vadd.f32 %v1187, 1.0
    %v1191 = vadd.f32 %v1189, 1.0
    %v1192 = vrcp.pop %v1190
    %v1193 = vmul.f32 1.0, %v1192
    %v1194 = vrcp.pop %v1191
    %v1195 = vmul.f32 1.0, %v1194
    %v1196 = vtanh.pop %v1180
    %v1197 = vmul.f32 %v1193, %v968
    %1199 = vrot.lane.b32.xlu0 %v1196, 64
    %v1200 = vpop.permute.xlu0 %1199
    %v1202 = vmul.f32 %v1193, %v1200
    %1204 = vrot.lane.b32.xlu0 %v1202, 64
    %v1205 = vpop.permute.xlu0 %1204
    %v1207 = vadd.f32 %v1197, %v1205
    %v1208 = vtanh.pop %v1207
    %1210 = vrot.lane.b32.xlu0 %v1208, 64
    %v1211 = vpop.permute.xlu0 %1210
    %v1213 = vmul.f32 %v1195, %v1211
    %s1214 = scalar_lea.vmem [#allocation4], 24
    %1215 = vst.msk [vmem:[%s1214] sm:$0xff] %vm534, %v1213
    %v1216 = vld [vmem:[%s975] sm:$0xff]
    %v1217 = vsel %vm534, %v1216, %v1046
    %v1218 = vpack.c.bf16 %v1217, %v1217
    %v1220 = vsel %vm459, %v1218, 0
    %1222 = vmatprep.subr.bf16.mxu0 0
    %1223 = vmatpush1.bf16.msra.mxu0 0
    %1224 = vmatprep.subr.bf16.mxu0 0
    %1225 = vmatpush1.bf16.msra.mxu0 0
    %1226 = vmatprep.subr.bf16.mxu0 0
    %1227 = vmatpush1.bf16.msra.mxu0 %v735
    %1228 = vmatprep.subr.bf16.mxu0 0
    %1229 = vmatpush1.bf16.msra.mxu0 %v734
    %1230 = vmatprep.subr.bf16.mxu0 0
    %1231 = vmatpush1.bf16.msra.mxu0 %v733
    %1232 = vmatprep.subr.bf16.mxu0 0
    %1233 = vmatpush1.bf16.msra.mxu0 %v732
    %1234 = vmatprep.subr.bf16.mxu0 0
    %1235 = vmatpush1.bf16.msra.mxu0 %v731
    %1236 = vmatprep.subr.bf16.mxu0 0
    %1237 = vmatpush1.bf16.msra.mxu0 %v730
    %1238 = vmatprep.subr.bf16.mxu0 0
    %1239 = vmatpush2.bf16.msra.mxu0 0
    %1240 = vmatprep.subr.bf16.mxu0 0
    %1241 = vmatpush2.bf16.msra.mxu0 0
    %1242 = vmatprep.subr.bf16.mxu0 0
    %1243 = vmatpush2.bf16.msra.mxu0 0
    %1244 = vmatprep.subr.bf16.mxu0 0
    %1245 = vmatpush2.bf16.msra.mxu0 0
    %1246 = vmatprep.subr.bf16.mxu0 0
    %1247 = vmatpush2.bf16.msra.mxu0 0
    %1248 = vmatprep.subr.bf16.mxu0 0
    %1249 = vmatpush2.bf16.msra.mxu0 0
    %1250 = vmatprep.subr.bf16.mxu0 0
    %1251 = vmatpush2.bf16.msra.mxu0 0
    %1252 = vmatprep.subr.bf16.mxu0 0
    %1253 = vmatpush2.bf16.msra.mxu0 0
    %1254 = vmatprep.mubr.bf16.mxu0 0
    %1255 = vmatmul.mubr.bf16.gmra.mxu0 %v1220
    %v1256 = vpop.f32.mrf.mxu0
    %v1257 = vadd.f32 %v705, %v1256
    %v1258 = vpop.f32.mrf.mxu0
    %v1259 = vpop.f32.mrf.mxu0
    %v1260 = vpop.f32.mrf.mxu0
    %1261 = vdwg.mxu0
    %v1262 = vxor.u32 %v1257, 2147483648
    %v1263 = vmul.f32 %v1262, 1.442695
    %v1264 = vpow.pop %v1263
    %v1265 = vadd.f32 %v1264, 1.0
    %v1266 = vrcp.pop %v1265
    %v1267 = vmul.f32 1.0, %v1266
    %v1268 = vtanh.pop %v1257
    %v1269 = vmul.f32 %v1267, %v1040
    %1271 = vrot.lane.b32.xlu0 %v1268, 32
    %v1272 = vpop.permute.xlu0 %1271
    %v1274 = vmul.f32 %v1267, %v1272
    %1276 = vrot.lane.b32.xlu0 %v1274, 32
    %v1277 = vpop.permute.xlu0 %1276
    %v1279 = vadd.f32 %v1269, %v1277
    %v1280 = vtanh.pop %v1279
    %1282 = vrot.lane.b32.xlu0 %v1280, 32
    %v1283 = vpop.permute.xlu0 %1282
    %v1285 = vmul.f32 %v1267, %v1283
    %1287 = vrot.lane.b32.xlu0 %v1285, 64
    %v1288 = vpop.permute.xlu0 %1287
    %s1290 = scalar_lea.vmem [#allocation5], 16
    %1291 = vst.msk [vmem:[%s1290] sm:$0xff] %vm231, %v1288
    %s1292 = scalar_lea.vmem [#allocation2], 40
    %v1293 = vld [vmem:[%s1292] sm:$0xff]
    %v1294 = vpack.c.bf16 %v1126, %v1126
    %1296 = vrot.lane.b32.xlu0 %v1294, 64
    %v1297 = vpop.permute.xlu0 %1296
    %v1299 = vsel %vm231, %v1297, 0
    %1301 = vmatprep.subr.bf16.mxu0 0
    %1302 = vmatpush1.bf16.msra.mxu0 0
    %1303 = vmatprep.subr.bf16.mxu0 0
    %1304 = vmatpush1.bf16.msra.mxu0 0
    %1305 = vmatprep.subr.bf16.mxu0 0
    %1306 = vmatpush1.bf16.msra.mxu0 0
    %1307 = vmatprep.subr.bf16.mxu0 0
    %1308 = vmatpush1.bf16.msra.mxu0 0
    %1309 = vmatprep.subr.bf16.mxu0 0
    %1310 = vmatpush1.bf16.msra.mxu0 0
    %1311 = vmatprep.subr.bf16.mxu0 0
    %1312 = vmatpush1.bf16.msra.mxu0 0
    %1313 = vmatprep.subr.bf16.mxu0 0
    %1314 = vmatpush1.bf16.msra.mxu0 %v228
    %1315 = vmatprep.subr.bf16.mxu0 0
    %1316 = vmatpush1.bf16.msra.mxu0 %v227
    %1317 = vmatprep.subr.bf16.mxu0 0
    %1318 = vmatpush2.bf16.msra.mxu0 0
    %1319 = vmatprep.subr.bf16.mxu0 0
    %1320 = vmatpush2.bf16.msra.mxu0 0
    %1321 = vmatprep.subr.bf16.mxu0 0
    %1322 = vmatpush2.bf16.msra.mxu0 0
    %1323 = vmatprep.subr.bf16.mxu0 0
    %1324 = vmatpush2.bf16.msra.mxu0 0
    %1325 = vmatprep.subr.bf16.mxu0 0
    %1326 = vmatpush2.bf16.msra.mxu0 0
    %1327 = vmatprep.subr.bf16.mxu0 0
    %1328 = vmatpush2.bf16.msra.mxu0 0
    %1329 = vmatprep.subr.bf16.mxu0 0
    %1330 = vmatpush2.bf16.msra.mxu0 0
    %1331 = vmatprep.subr.bf16.mxu0 0
    %1332 = vmatpush2.bf16.msra.mxu0 0
    %1333 = vmatprep.mubr.bf16.mxu0 0
    %1334 = vmatmul.mubr.bf16.gmra.mxu0 %v1299
    %v1335 = vpop.f32.mrf.mxu0
    %v1336 = vadd.f32 0.0, %v1335
    %v1337 = vpop.f32.mrf.mxu0
    %v1338 = vpop.f32.mrf.mxu0
    %v1339 = vpop.f32.mrf.mxu0
    %1340 = vdwg.mxu0
    %v1341 = vadd.f32 %v1293, %v1336
    %v1342 = vxor.u32 %v1341, 2147483648
    %v1343 = vmul.f32 %v1342, 1.442695
    %v1344 = vpow.pop %v1343
    %v1345 = vadd.f32 %v1344, 1.0
    %v1346 = vrcp.pop %v1345
    %v1347 = vmul.f32 1.0, %v1346
    %v1348 = vtanh.pop %v1341
    %v1349 = vmul.f32 %v1347, %v1120
    %1351 = vrot.lane.b32.xlu0 %v1348, 32
    %v1352 = vpop.permute.xlu0 %1351
    %v1354 = vmul.f32 %v1347, %v1352
    %1356 = vrot.lane.b32.xlu0 %v1354, 32
    %v1357 = vpop.permute.xlu0 %1356
    %v1359 = vadd.f32 %v1349, %v1357
    %v1360 = vtanh.pop %v1359
    %1362 = vrot.lane.b32.xlu0 %v1360, 32
    %v1363 = vpop.permute.xlu0 %1362
    %v1365 = vmul.f32 %v1347, %v1363
    %1367 = vrot.lane.b32.xlu0 %v1365, 64
    %v1368 = vpop.permute.xlu0 %1367
    %s1370 = scalar_lea.vmem [#allocation3], 40
    %1371 = vst.msk [vmem:[%s1370] sm:$0xff] %vm231, %v1368
    %v1372 = vld [vmem:[%s1131] sm:$0xff]
    %1374 = vrot.lane.b32.xlu0 %v1213, 32
    %v1375 = vpop.permute.xlu0 %1374
    %v1377 = vsel %vm231, %v1372, %v1375
    %v1378 = vpack.c.bf16 %v1377, %v1377
    %v1380 = vsel %vm459, %v1378, 0
    %1382 = vmatprep.subr.bf16.mxu0 0
    %1383 = vmatpush1.bf16.msra.mxu0 0
    %1384 = vmatprep.subr.bf16.mxu0 0
    %1385 = vmatpush1.bf16.msra.mxu0 0
    %1386 = vmatprep.subr.bf16.mxu0 %v446
    %1387 = vmatpush1.bf16.msra.mxu0 %v445
    %1388 = vmatprep.subr.bf16.mxu0 %v444
    %1389 = vmatpush1.bf16.msra.mxu0 %v443
    %1390 = vmatprep.subr.bf16.mxu0 %v442
    %1391 = vmatpush1.bf16.msra.mxu0 %v441
    %1392 = vmatprep.subr.bf16.mxu0 %v440
    %1393 = vmatpush1.bf16.msra.mxu0 %v439
    %1394 = vmatprep.subr.bf16.mxu0 %v438
    %1395 = vmatpush1.bf16.msra.mxu0 %v437
    %1396 = vmatprep.subr.bf16.mxu0 %v436
    %1397 = vmatpush1.bf16.msra.mxu0 %v435
    %1398 = vmatprep.subr.bf16.mxu0 0
    %1399 = vmatpush2.bf16.msra.mxu0 0
    %1400 = vmatprep.subr.bf16.mxu0 0
    %1401 = vmatpush2.bf16.msra.mxu0 0
    %1402 = vmatprep.subr.bf16.mxu0 0
    %1403 = vmatpush2.bf16.msra.mxu0 0
    %1404 = vmatprep.subr.bf16.mxu0 0
    %1405 = vmatpush2.bf16.msra.mxu0 0
    %1406 = vmatprep.subr.bf16.mxu0 0
    %1407 = vmatpush2.bf16.msra.mxu0 0
    %1408 = vmatprep.subr.bf16.mxu0 0
    %1409 = vmatpush2.bf16.msra.mxu0 0
    %1410 = vmatprep.subr.bf16.mxu0 0
    %1411 = vmatpush2.bf16.msra.mxu0 0
    %1412 = vmatprep.subr.bf16.mxu0 0
    %1413 = vmatpush2.bf16.msra.mxu0 0
    %1414 = vmatprep.mubr.bf16.mxu0 0
    %1415 = vmatmul.mubr.bf16.gmra.mxu0 %v1380
    %v1416 = vpop.f32.mrf.mxu0
    %v1417 = vadd.f32 %v392, %v1416
    %v1418 = vpop.f32.mrf.mxu0
    %v1419 = vadd.f32 %v396, %v1418
    %v1420 = vpop.f32.mrf.mxu0
    %v1421 = vpop.f32.mrf.mxu0
    %1422 = vdwg.mxu0
    %v1423 = vxor.u32 %v1417, 2147483648
    %v1424 = vxor.u32 %v1419, 2147483648
    %v1425 = vmul.f32 %v1423, 1.442695
    %v1426 = vpow.pop %v1425
    %v1427 = vmul.f32 %v1424, 1.442695
    %v1428 = vpow.pop %v1427
    %v1429 = vadd.f32 %v1426, 1.0
    %v1430 = vadd.f32 %v1428, 1.0
    %v1431 = vrcp.pop %v1429
    %v1432 = vmul.f32 1.0, %v1431
    %v1433 = vrcp.pop %v1430
    %v1434 = vmul.f32 1.0, %v1433
    %v1435 = vtanh.pop %v1419
    %v1436 = vmul.f32 %v1432, %v1207
    %1438 = vrot.lane.b32.xlu0 %v1435, 64
    %v1439 = vpop.permute.xlu0 %1438
    %v1441 = vmul.f32 %v1432, %v1439
    %1443 = vrot.lane.b32.xlu0 %v1441, 64
    %v1444 = vpop.permute.xlu0 %1443
    %v1446 = vadd.f32 %v1436, %v1444
    %v1447 = vtanh.pop %v1446
    %1449 = vrot.lane.b32.xlu0 %v1447, 64
    %v1450 = vpop.permute.xlu0 %1449
    %v1452 = vmul.f32 %v1434, %v1450
    %s1453 = scalar_lea.vmem [#allocation4], 32
    %1454 = vst.msk [vmem:[%s1453] sm:$0xff] %vm534, %v1452
    %v1455 = vld [vmem:[%s1214] sm:$0xff]
    %v1456 = vsel %vm534, %v1455, %v1285
    %v1457 = vpack.c.bf16 %v1456, %v1456
    %v1459 = vsel %vm459, %v1457, 0
    %1461 = vmatprep.subr.bf16.mxu0 0
    %1462 = vmatpush1.bf16.msra.mxu0 0
    %1463 = vmatprep.subr.bf16.mxu0 0
    %1464 = vmatpush1.bf16.msra.mxu0 0
    %1465 = vmatprep.subr.bf16.mxu0 0
    %1466 = vmatpush1.bf16.msra.mxu0 %v735
    %1467 = vmatprep.subr.bf16.mxu0 0
    %1468 = vmatpush1.bf16.msra.mxu0 %v734
    %1469 = vmatprep.subr.bf16.mxu0 0
    %1470 = vmatpush1.bf16.msra.mxu0 %v733
    %1471 = vmatprep.subr.bf16.mxu0 0
    %1472 = vmatpush1.bf16.msra.mxu0 %v732
    %1473 = vmatprep.subr.bf16.mxu0 0
    %1474 = vmatpush1.bf16.msra.mxu0 %v731
    %1475 = vmatprep.subr.bf16.mxu0 0
    %1476 = vmatpush1.bf16.msra.mxu0 %v730
    %1477 = vmatprep.subr.bf16.mxu0 0
    %1478 = vmatpush2.bf16.msra.mxu0 0
    %1479 = vmatprep.subr.bf16.mxu0 0
    %1480 = vmatpush2.bf16.msra.mxu0 0
    %1481 = vmatprep.subr.bf16.mxu0 0
    %1482 = vmatpush2.bf16.msra.mxu0 0
    %1483 = vmatprep.subr.bf16.mxu0 0
    %1484 = vmatpush2.bf16.msra.mxu0 0
    %1485 = vmatprep.subr.bf16.mxu0 0
    %1486 = vmatpush2.bf16.msra.mxu0 0
    %1487 = vmatprep.subr.bf16.mxu0 0
    %1488 = vmatpush2.bf16.msra.mxu0 0
    %1489 = vmatprep.subr.bf16.mxu0 0
    %1490 = vmatpush2.bf16.msra.mxu0 0
    %1491 = vmatprep.subr.bf16.mxu0 0
    %1492 = vmatpush2.bf16.msra.mxu0 0
    %1493 = vmatprep.mubr.bf16.mxu0 0
    %1494 = vmatmul.mubr.bf16.gmra.mxu0 %v1459
    %v1495 = vpop.f32.mrf.mxu0
    %v1496 = vadd.f32 %v705, %v1495
    %v1497 = vpop.f32.mrf.mxu0
    %v1498 = vpop.f32.mrf.mxu0
    %v1499 = vpop.f32.mrf.mxu0
    %1500 = vdwg.mxu0
    %v1501 = vxor.u32 %v1496, 2147483648
    %v1502 = vmul.f32 %v1501, 1.442695
    %v1503 = vpow.pop %v1502
    %v1504 = vadd.f32 %v1503, 1.0
    %v1505 = vrcp.pop %v1504
    %v1506 = vmul.f32 1.0, %v1505
    %v1507 = vtanh.pop %v1496
    %v1508 = vmul.f32 %v1506, %v1279
    %1510 = vrot.lane.b32.xlu0 %v1507, 32
    %v1511 = vpop.permute.xlu0 %1510
    %v1513 = vmul.f32 %v1506, %v1511
    %1515 = vrot.lane.b32.xlu0 %v1513, 32
    %v1516 = vpop.permute.xlu0 %1515
    %v1518 = vadd.f32 %v1508, %v1516
    %v1519 = vtanh.pop %v1518
    %1521 = vrot.lane.b32.xlu0 %v1519, 32
    %v1522 = vpop.permute.xlu0 %1521
    %v1524 = vmul.f32 %v1506, %v1522
    %1526 = vrot.lane.b32.xlu0 %v1524, 64
    %v1527 = vpop.permute.xlu0 %1526
    %s1529 = scalar_lea.vmem [#allocation5], 24
    %1530 = vst.msk [vmem:[%s1529] sm:$0xff] %vm231, %v1527
    %s1531 = scalar_lea.vmem [#allocation2], 48
    %v1532 = vld [vmem:[%s1531] sm:$0xff]
    %v1533 = vpack.c.bf16 %v1365, %v1365
    %1535 = vrot.lane.b32.xlu0 %v1533, 64
    %v1536 = vpop.permute.xlu0 %1535
    %v1538 = vsel %vm231, %v1536, 0
    %1540 = vmatprep.subr.bf16.mxu0 0
    %1541 = vmatpush1.bf16.msra.mxu0 0
    %1542 = vmatprep.subr.bf16.mxu0 0
    %1543 = vmatpush1.bf16.msra.mxu0 0
    %1544 = vmatprep.subr.bf16.mxu0 0
    %1545 = vmatpush1.bf16.msra.mxu0 0
    %1546 = vmatprep.subr.bf16.mxu0 0
    %1547 = vmatpush1.bf16.msra.mxu0 0
    %1548 = vmatprep.subr.bf16.mxu0 0
    %1549 = vmatpush1.bf16.msra.mxu0 0
    %1550 = vmatprep.subr.bf16.mxu0 0
    %1551 = vmatpush1.bf16.msra.mxu0 0
    %1552 = vmatprep.subr.bf16.mxu0 0
    %1553 = vmatpush1.bf16.msra.mxu0 %v228
    %1554 = vmatprep.subr.bf16.mxu0 0
    %1555 = vmatpush1.bf16.msra.mxu0 %v227
    %1556 = vmatprep.subr.bf16.mxu0 0
    %1557 = vmatpush2.bf16.msra.mxu0 0
    %1558 = vmatprep.subr.bf16.mxu0 0
    %1559 = vmatpush2.bf16.msra.mxu0 0
    %1560 = vmatprep.subr.bf16.mxu0 0
    %1561 = vmatpush2.bf16.msra.mxu0 0
    %1562 = vmatprep.subr.bf16.mxu0 0
    %1563 = vmatpush2.bf16.msra.mxu0 0
    %1564 = vmatprep.subr.bf16.mxu0 0
    %1565 = vmatpush2.bf16.msra.mxu0 0
    %1566 = vmatprep.subr.bf16.mxu0 0
    %1567 = vmatpush2.bf16.msra.mxu0 0
    %1568 = vmatprep.subr.bf16.mxu0 0
    %1569 = vmatpush2.bf16.msra.mxu0 0
    %1570 = vmatprep.subr.bf16.mxu0 0
    %1571 = vmatpush2.bf16.msra.mxu0 0
    %1572 = vmatprep.mubr.bf16.mxu0 0
    %1573 = vmatmul.mubr.bf16.gmra.mxu0 %v1538
    %v1574 = vpop.f32.mrf.mxu0
    %v1575 = vadd.f32 0.0, %v1574
    %v1576 = vpop.f32.mrf.mxu0
    %v1577 = vpop.f32.mrf.mxu0
    %v1578 = vpop.f32.mrf.mxu0
    %1579 = vdwg.mxu0
    %v1580 = vadd.f32 %v1532, %v1575
    %v1581 = vxor.u32 %v1580, 2147483648
    %v1582 = vmul.f32 %v1581, 1.442695
    %v1583 = vpow.pop %v1582
    %v1584 = vadd.f32 %v1583, 1.0
    %v1585 = vrcp.pop %v1584
    %v1586 = vmul.f32 1.0, %v1585
    %v1587 = vtanh.pop %v1580
    %v1588 = vmul.f32 %v1586, %v1359
    %1590 = vrot.lane.b32.xlu0 %v1587, 32
    %v1591 = vpop.permute.xlu0 %1590
    %v1593 = vmul.f32 %v1586, %v1591
    %1595 = vrot.lane.b32.xlu0 %v1593, 32
    %v1596 = vpop.permute.xlu0 %1595
    %v1598 = vadd.f32 %v1588, %v1596
    %v1599 = vtanh.pop %v1598
    %1601 = vrot.lane.b32.xlu0 %v1599, 32
    %v1602 = vpop.permute.xlu0 %1601
    %v1604 = vmul.f32 %v1586, %v1602
    %1606 = vrot.lane.b32.xlu0 %v1604, 64
    %v1607 = vpop.permute.xlu0 %1606
    %s1609 = scalar_lea.vmem [#allocation3], 48
    %1610 = vst.msk [vmem:[%s1609] sm:$0xff] %vm231, %v1607
    %v1611 = vld [vmem:[%s1370] sm:$0xff]
    %1613 = vrot.lane.b32.xlu0 %v1452, 32
    %v1614 = vpop.permute.xlu0 %1613
    %v1616 = vsel %vm231, %v1611, %v1614
    %v1617 = vpack.c.bf16 %v1616, %v1616
    %v1619 = vsel %vm459, %v1617, 0
    %1621 = vmatprep.subr.bf16.mxu0 0
    %1622 = vmatpush1.bf16.msra.mxu0 0
    %1623 = vmatprep.subr.bf16.mxu0 0
    %1624 = vmatpush1.bf16.msra.mxu0 0
    %1625 = vmatprep.subr.bf16.mxu0 %v446
    %1626 = vmatpush1.bf16.msra.mxu0 %v445
    %1627 = vmatprep.subr.bf16.mxu0 %v444
    %1628 = vmatpush1.bf16.msra.mxu0 %v443
    %1629 = vmatprep.subr.bf16.mxu0 %v442
    %1630 = vmatpush1.bf16.msra.mxu0 %v441
    %1631 = vmatprep.subr.bf16.mxu0 %v440
    %1632 = vmatpush1.bf16.msra.mxu0 %v439
    %1633 = vmatprep.subr.bf16.mxu0 %v438
    %1634 = vmatpush1.bf16.msra.mxu0 %v437
    %1635 = vmatprep.subr.bf16.mxu0 %v436
    %1636 = vmatpush1.bf16.msra.mxu0 %v435
    %1637 = vmatprep.subr.bf16.mxu0 0
    %1638 = vmatpush2.bf16.msra.mxu0 0
    %1639 = vmatprep.subr.bf16.mxu0 0
    %1640 = vmatpush2.bf16.msra.mxu0 0
    %1641 = vmatprep.subr.bf16.mxu0 0
    %1642 = vmatpush2.bf16.msra.mxu0 0
    %1643 = vmatprep.subr.bf16.mxu0 0
    %1644 = vmatpush2.bf16.msra.mxu0 0
    %1645 = vmatprep.subr.bf16.mxu0 0
    %1646 = vmatpush2.bf16.msra.mxu0 0
    %1647 = vmatprep.subr.bf16.mxu0 0
    %1648 = vmatpush2.bf16.msra.mxu0 0
    %1649 = vmatprep.subr.bf16.mxu0 0
    %1650 = vmatpush2.bf16.msra.mxu0 0
    %1651 = vmatprep.subr.bf16.mxu0 0
    %1652 = vmatpush2.bf16.msra.mxu0 0
    %1653 = vmatprep.mubr.bf16.mxu0 0
    %1654 = vmatmul.mubr.bf16.gmra.mxu0 %v1619
    %v1655 = vpop.f32.mrf.mxu0
    %v1656 = vadd.f32 %v392, %v1655
    %v1657 = vpop.f32.mrf.mxu0
    %v1658 = vadd.f32 %v396, %v1657
    %v1659 = vpop.f32.mrf.mxu0
    %v1660 = vpop.f32.mrf.mxu0
    %1661 = vdwg.mxu0
    %v1662 = vxor.u32 %v1656, 2147483648
    %v1663 = vxor.u32 %v1658, 2147483648
    %v1664 = vmul.f32 %v1662, 1.442695
    %v1665 = vpow.pop %v1664
    %v1666 = vmul.f32 %v1663, 1.442695
    %v1667 = vpow.pop %v1666
    %v1668 = vadd.f32 %v1665, 1.0
    %v1669 = vadd.f32 %v1667, 1.0
    %v1670 = vrcp.pop %v1668
    %v1671 = vmul.f32 1.0, %v1670
    %v1672 = vrcp.pop %v1669
    %v1673 = vmul.f32 1.0, %v1672
    %v1674 = vtanh.pop %v1658
    %v1675 = vmul.f32 %v1671, %v1446
    %1677 = vrot.lane.b32.xlu0 %v1674, 64
    %v1678 = vpop.permute.xlu0 %1677
    %v1680 = vmul.f32 %v1671, %v1678
    %1682 = vrot.lane.b32.xlu0 %v1680, 64
    %v1683 = vpop.permute.xlu0 %1682
    %v1685 = vadd.f32 %v1675, %v1683
    %v1686 = vtanh.pop %v1685
    %1688 = vrot.lane.b32.xlu0 %v1686, 64
    %v1689 = vpop.permute.xlu0 %1688
    %v1691 = vmul.f32 %v1673, %v1689
    %s1692 = scalar_lea.vmem [#allocation4], 40
    %1693 = vst.msk [vmem:[%s1692] sm:$0xff] %vm534, %v1691
    %v1694 = vld [vmem:[%s1453] sm:$0xff]
    %v1695 = vsel %vm534, %v1694, %v1524
    %v1696 = vpack.c.bf16 %v1695, %v1695
    %v1698 = vsel %vm459, %v1696, 0
    %1700 = vmatprep.subr.bf16.mxu0 0
    %1701 = vmatpush1.bf16.msra.mxu0 0
    %1702 = vmatprep.subr.bf16.mxu0 0
    %1703 = vmatpush1.bf16.msra.mxu0 0
    %1704 = vmatprep.subr.bf16.mxu0 0
    %1705 = vmatpush1.bf16.msra.mxu0 %v735
    %1706 = vmatprep.subr.bf16.mxu0 0
    %1707 = vmatpush1.bf16.msra.mxu0 %v734
    %1708 = vmatprep.subr.bf16.mxu0 0
    %1709 = vmatpush1.bf16.msra.mxu0 %v733
    %1710 = vmatprep.subr.bf16.mxu0 0
    %1711 = vmatpush1.bf16.msra.mxu0 %v732
    %1712 = vmatprep.subr.bf16.mxu0 0
    %1713 = vmatpush1.bf16.msra.mxu0 %v731
    %1714 = vmatprep.subr.bf16.mxu0 0
    %1715 = vmatpush1.bf16.msra.mxu0 %v730
    %1716 = vmatprep.subr.bf16.mxu0 0
    %1717 = vmatpush2.bf16.msra.mxu0 0
    %1718 = vmatprep.subr.bf16.mxu0 0
    %1719 = vmatpush2.bf16.msra.mxu0 0
    %1720 = vmatprep.subr.bf16.mxu0 0
    %1721 = vmatpush2.bf16.msra.mxu0 0
    %1722 = vmatprep.subr.bf16.mxu0 0
    %1723 = vmatpush2.bf16.msra.mxu0 0
    %1724 = vmatprep.subr.bf16.mxu0 0
    %1725 = vmatpush2.bf16.msra.mxu0 0
    %1726 = vmatprep.subr.bf16.mxu0 0
    %1727 = vmatpush2.bf16.msra.mxu0 0
    %1728 = vmatprep.subr.bf16.mxu0 0
    %1729 = vmatpush2.bf16.msra.mxu0 0
    %1730 = vmatprep.subr.bf16.mxu0 0
    %1731 = vmatpush2.bf16.msra.mxu0 0
    %1732 = vmatprep.mubr.bf16.mxu0 0
    %1733 = vmatmul.mubr.bf16.gmra.mxu0 %v1698
    %v1734 = vpop.f32.mrf.mxu0
    %v1735 = vadd.f32 %v705, %v1734
    %v1736 = vpop.f32.mrf.mxu0
    %v1737 = vpop.f32.mrf.mxu0
    %v1738 = vpop.f32.mrf.mxu0
    %1739 = vdwg.mxu0
    %v1740 = vxor.u32 %v1735, 2147483648
    %v1741 = vmul.f32 %v1740, 1.442695
    %v1742 = vpow.pop %v1741
    %v1743 = vadd.f32 %v1742, 1.0
    %v1744 = vrcp.pop %v1743
    %v1745 = vmul.f32 1.0, %v1744
    %v1746 = vtanh.pop %v1735
    %v1747 = vmul.f32 %v1745, %v1518
    %1749 = vrot.lane.b32.xlu0 %v1746, 32
    %v1750 = vpop.permute.xlu0 %1749
    %v1752 = vmul.f32 %v1745, %v1750
    %1754 = vrot.lane.b32.xlu0 %v1752, 32
    %v1755 = vpop.permute.xlu0 %1754
    %v1757 = vadd.f32 %v1747, %v1755
    %v1758 = vtanh.pop %v1757
    %1760 = vrot.lane.b32.xlu0 %v1758, 32
    %v1761 = vpop.permute.xlu0 %1760
    %v1763 = vmul.f32 %v1745, %v1761
    %1765 = vrot.lane.b32.xlu0 %v1763, 64
    %v1766 = vpop.permute.xlu0 %1765
    %s1768 = scalar_lea.vmem [#allocation5], 32
    %1769 = vst.msk [vmem:[%s1768] sm:$0xff] %vm231, %v1766
    %s1770 = scalar_lea.vmem [#allocation2], 56
    %v1771 = vld [vmem:[%s1770] sm:$0xff]
    %v1772 = vpack.c.bf16 %v1604, %v1604
    %1774 = vrot.lane.b32.xlu0 %v1772, 64
    %v1775 = vpop.permute.xlu0 %1774
    %v1777 = vsel %vm231, %v1775, 0
    %1779 = vmatprep.subr.bf16.mxu0 0
    %1780 = vmatpush1.bf16.msra.mxu0 0
    %1781 = vmatprep.subr.bf16.mxu0 0
    %1782 = vmatpush1.bf16.msra.mxu0 0
    %1783 = vmatprep.subr.bf16.mxu0 0
    %1784 = vmatpush1.bf16.msra.mxu0 0
    %1785 = vmatprep.subr.bf16.mxu0 0
    %1786 = vmatpush1.bf16.msra.mxu0 0
    %1787 = vmatprep.subr.bf16.mxu0 0
    %1788 = vmatpush1.bf16.msra.mxu0 0
    %1789 = vmatprep.subr.bf16.mxu0 0
    %1790 = vmatpush1.bf16.msra.mxu0 0
    %1791 = vmatprep.subr.bf16.mxu0 0
    %1792 = vmatpush1.bf16.msra.mxu0 %v228
    %1793 = vmatprep.subr.bf16.mxu0 0
    %1794 = vmatpush1.bf16.msra.mxu0 %v227
    %1795 = vmatprep.subr.bf16.mxu0 0
    %1796 = vmatpush2.bf16.msra.mxu0 0
    %1797 = vmatprep.subr.bf16.mxu0 0
    %1798 = vmatpush2.bf16.msra.mxu0 0
    %1799 = vmatprep.subr.bf16.mxu0 0
    %1800 = vmatpush2.bf16.msra.mxu0 0
    %1801 = vmatprep.subr.bf16.mxu0 0
    %1802 = vmatpush2.bf16.msra.mxu0 0
    %1803 = vmatprep.subr.bf16.mxu0 0
    %1804 = vmatpush2.bf16.msra.mxu0 0
    %1805 = vmatprep.subr.bf16.mxu0 0
    %1806 = vmatpush2.bf16.msra.mxu0 0
    %1807 = vmatprep.subr.bf16.mxu0 0
    %1808 = vmatpush2.bf16.msra.mxu0 0
    %1809 = vmatprep.subr.bf16.mxu0 0
    %1810 = vmatpush2.bf16.msra.mxu0 0
    %1811 = vmatprep.mubr.bf16.mxu0 0
    %1812 = vmatmul.mubr.bf16.gmra.mxu0 %v1777
    %v1813 = vpop.f32.mrf.mxu0
    %v1814 = vadd.f32 0.0, %v1813
    %v1815 = vpop.f32.mrf.mxu0
    %v1816 = vpop.f32.mrf.mxu0
    %v1817 = vpop.f32.mrf.mxu0
    %1818 = vdwg.mxu0
    %v1819 = vadd.f32 %v1771, %v1814
    %v1820 = vxor.u32 %v1819, 2147483648
    %v1821 = vmul.f32 %v1820, 1.442695
    %v1822 = vpow.pop %v1821
    %v1823 = vadd.f32 %v1822, 1.0
    %v1824 = vrcp.pop %v1823
    %v1825 = vmul.f32 1.0, %v1824
    %v1826 = vtanh.pop %v1819
    %v1827 = vmul.f32 %v1825, %v1598
    %1829 = vrot.lane.b32.xlu0 %v1826, 32
    %v1830 = vpop.permute.xlu0 %1829
    %v1832 = vmul.f32 %v1825, %v1830
    %1834 = vrot.lane.b32.xlu0 %v1832, 32
    %v1835 = vpop.permute.xlu0 %1834
    %v1837 = vadd.f32 %v1827, %v1835
    %v1838 = vtanh.pop %v1837
    %1840 = vrot.lane.b32.xlu0 %v1838, 32
    %v1841 = vpop.permute.xlu0 %1840
    %v1843 = vmul.f32 %v1825, %v1841
    %1845 = vrot.lane.b32.xlu0 %v1843, 64
    %v1846 = vpop.permute.xlu0 %1845
    %s1848 = scalar_lea.vmem [#allocation3], 56
    %1849 = vst.msk [vmem:[%s1848] sm:$0xff] %vm231, %v1846
    %v1850 = vld [vmem:[%s1609] sm:$0xff]
    %1852 = vrot.lane.b32.xlu0 %v1691, 32
    %v1853 = vpop.permute.xlu0 %1852
    %v1855 = vsel %vm231, %v1850, %v1853
    %v1856 = vpack.c.bf16 %v1855, %v1855
    %v1858 = vsel %vm459, %v1856, 0
    %1860 = vmatprep.subr.bf16.mxu0 0
    %1861 = vmatpush1.bf16.msra.mxu0 0
    %1862 = vmatprep.subr.bf16.mxu0 0
    %1863 = vmatpush1.bf16.msra.mxu0 0
    %1864 = vmatprep.subr.bf16.mxu0 %v446
    %1865 = vmatpush1.bf16.msra.mxu0 %v445
    %1866 = vmatprep.subr.bf16.mxu0 %v444
    %1867 = vmatpush1.bf16.msra.mxu0 %v443
    %1868 = vmatprep.subr.bf16.mxu0 %v442
    %1869 = vmatpush1.bf16.msra.mxu0 %v441
    %1870 = vmatprep.subr.bf16.mxu0 %v440
    %1871 = vmatpush1.bf16.msra.mxu0 %v439
    %1872 = vmatprep.subr.bf16.mxu0 %v438
    %1873 = vmatpush1.bf16.msra.mxu0 %v437
    %1874 = vmatprep.subr.bf16.mxu0 %v436
    %1875 = vmatpush1.bf16.msra.mxu0 %v435
    %1876 = vmatprep.subr.bf16.mxu0 0
    %1877 = vmatpush2.bf16.msra.mxu0 0
    %1878 = vmatprep.subr.bf16.mxu0 0
    %1879 = vmatpush2.bf16.msra.mxu0 0
    %1880 = vmatprep.subr.bf16.mxu0 0
    %1881 = vmatpush2.bf16.msra.mxu0 0
    %1882 = vmatprep.subr.bf16.mxu0 0
    %1883 = vmatpush2.bf16.msra.mxu0 0
    %1884 = vmatprep.subr.bf16.mxu0 0
    %1885 = vmatpush2.bf16.msra.mxu0 0
    %1886 = vmatprep.subr.bf16.mxu0 0
    %1887 = vmatpush2.bf16.msra.mxu0 0
    %1888 = vmatprep.subr.bf16.mxu0 0
    %1889 = vmatpush2.bf16.msra.mxu0 0
    %1890 = vmatprep.subr.bf16.mxu0 0
    %1891 = vmatpush2.bf16.msra.mxu0 0
    %1892 = vmatprep.mubr.bf16.mxu0 0
    %1893 = vmatmul.mubr.bf16.gmra.mxu0 %v1858
    %v1894 = vpop.f32.mrf.mxu0
    %v1895 = vadd.f32 %v392, %v1894
    %v1896 = vpop.f32.mrf.mxu0
    %v1897 = vadd.f32 %v396, %v1896
    %v1898 = vpop.f32.mrf.mxu0
    %v1899 = vpop.f32.mrf.mxu0
    %1900 = vdwg.mxu0
    %v1901 = vxor.u32 %v1895, 2147483648
    %v1902 = vxor.u32 %v1897, 2147483648
    %v1903 = vmul.f32 %v1901, 1.442695
    %v1904 = vpow.pop %v1903
    %v1905 = vmul.f32 %v1902, 1.442695
    %v1906 = vpow.pop %v1905
    %v1907 = vadd.f32 %v1904, 1.0
    %v1908 = vadd.f32 %v1906, 1.0
    %v1909 = vrcp.pop %v1907
    %v1910 = vmul.f32 1.0, %v1909
    %v1911 = vrcp.pop %v1908
    %v1912 = vmul.f32 1.0, %v1911
    %v1913 = vtanh.pop %v1897
    %v1914 = vmul.f32 %v1910, %v1685
    %1916 = vrot.lane.b32.xlu0 %v1913, 64
    %v1917 = vpop.permute.xlu0 %1916
    %v1919 = vmul.f32 %v1910, %v1917
    %1921 = vrot.lane.b32.xlu0 %v1919, 64
    %v1922 = vpop.permute.xlu0 %1921
    %v1924 = vadd.f32 %v1914, %v1922
    %v1925 = vtanh.pop %v1924
    %1927 = vrot.lane.b32.xlu0 %v1925, 64
    %v1928 = vpop.permute.xlu0 %1927
    %v1930 = vmul.f32 %v1912, %v1928
    %s1931 = scalar_lea.vmem [#allocation4], 48
    %1932 = vst.msk [vmem:[%s1931] sm:$0xff] %vm534, %v1930
    %v1933 = vld [vmem:[%s1692] sm:$0xff]
    %v1934 = vsel %vm534, %v1933, %v1763
    %v1935 = vpack.c.bf16 %v1934, %v1934
    %v1937 = vsel %vm459, %v1935, 0
    %1939 = vmatprep.subr.bf16.mxu0 0
    %1940 = vmatpush1.bf16.msra.mxu0 0
    %1941 = vmatprep.subr.bf16.mxu0 0
    %1942 = vmatpush1.bf16.msra.mxu0 0
    %1943 = vmatprep.subr.bf16.mxu0 0
    %1944 = vmatpush1.bf16.msra.mxu0 %v735
    %1945 = vmatprep.subr.bf16.mxu0 0
    %1946 = vmatpush1.bf16.msra.mxu0 %v734
    %1947 = vmatprep.subr.bf16.mxu0 0
    %1948 = vmatpush1.bf16.msra.mxu0 %v733
    %1949 = vmatprep.subr.bf16.mxu0 0
    %1950 = vmatpush1.bf16.msra.mxu0 %v732
    %1951 = vmatprep.subr.bf16.mxu0 0
    %1952 = vmatpush1.bf16.msra.mxu0 %v731
    %1953 = vmatprep.subr.bf16.mxu0 0
    %1954 = vmatpush1.bf16.msra.mxu0 %v730
    %1955 = vmatprep.subr.bf16.mxu0 0
    %1956 = vmatpush2.bf16.msra.mxu0 0
    %1957 = vmatprep.subr.bf16.mxu0 0
    %1958 = vmatpush2.bf16.msra.mxu0 0
    %1959 = vmatprep.subr.bf16.mxu0 0
    %1960 = vmatpush2.bf16.msra.mxu0 0
    %1961 = vmatprep.subr.bf16.mxu0 0
    %1962 = vmatpush2.bf16.msra.mxu0 0
    %1963 = vmatprep.subr.bf16.mxu0 0
    %1964 = vmatpush2.bf16.msra.mxu0 0
    %1965 = vmatprep.subr.bf16.mxu0 0
    %1966 = vmatpush2.bf16.msra.mxu0 0
    %1967 = vmatprep.subr.bf16.mxu0 0
    %1968 = vmatpush2.bf16.msra.mxu0 0
    %1969 = vmatprep.subr.bf16.mxu0 0
    %1970 = vmatpush2.bf16.msra.mxu0 0
    %1971 = vmatprep.mubr.bf16.mxu0 0
    %1972 = vmatmul.mubr.bf16.gmra.mxu0 %v1937
    %v1973 = vpop.f32.mrf.mxu0
    %v1974 = vadd.f32 %v705, %v1973
    %v1975 = vpop.f32.mrf.mxu0
    %v1976 = vpop.f32.mrf.mxu0
    %v1977 = vpop.f32.mrf.mxu0
    %1978 = vdwg.mxu0
    %v1979 = vxor.u32 %v1974, 2147483648
    %v1980 = vmul.f32 %v1979, 1.442695
    %v1981 = vpow.pop %v1980
    %v1982 = vadd.f32 %v1981, 1.0
    %v1983 = vrcp.pop %v1982
    %v1984 = vmul.f32 1.0, %v1983
    %v1985 = vtanh.pop %v1974
    %v1986 = vmul.f32 %v1984, %v1757
    %1988 = vrot.lane.b32.xlu0 %v1985, 32
    %v1989 = vpop.permute.xlu0 %1988
    %v1991 = vmul.f32 %v1984, %v1989
    %1993 = vrot.lane.b32.xlu0 %v1991, 32
    %v1994 = vpop.permute.xlu0 %1993
    %v1996 = vadd.f32 %v1986, %v1994
    %v1997 = vtanh.pop %v1996
    %1999 = vrot.lane.b32.xlu0 %v1997, 32
    %v2000 = vpop.permute.xlu0 %1999
    %v2002 = vmul.f32 %v1984, %v2000
    %2004 = vrot.lane.b32.xlu0 %v2002, 64
    %v2005 = vpop.permute.xlu0 %2004
    %s2007 = scalar_lea.vmem [#allocation5], 40
    %2008 = vst.msk [vmem:[%s2007] sm:$0xff] %vm231, %v2005
    %v2009 = vld [vmem:[%s1848] sm:$0xff]
    %2011 = vrot.lane.b32.xlu0 %v1930, 32
    %v2012 = vpop.permute.xlu0 %2011
    %v2014 = vsel %vm231, %v2009, %v2012
    %v2015 = vpack.c.bf16 %v2014, %v2014
    %v2017 = vsel %vm459, %v2015, 0
    %2019 = vmatprep.subr.bf16.mxu0 0
    %2020 = vmatpush1.bf16.msra.mxu0 0
    %2021 = vmatprep.subr.bf16.mxu0 0
    %2022 = vmatpush1.bf16.msra.mxu0 0
    %2023 = vmatprep.subr.bf16.mxu0 %v446
    %2024 = vmatpush1.bf16.msra.mxu0 %v445
    %2025 = vmatprep.subr.bf16.mxu0 %v444
    %2026 = vmatpush1.bf16.msra.mxu0 %v443
    %2027 = vmatprep.subr.bf16.mxu0 %v442
    %2028 = vmatpush1.bf16.msra.mxu0 %v441
    %2029 = vmatprep.subr.bf16.mxu0 %v440
    %2030 = vmatpush1.bf16.msra.mxu0 %v439
    %2031 = vmatprep.subr.bf16.mxu0 %v438
    %2032 = vmatpush1.bf16.msra.mxu0 %v437
    %2033 = vmatprep.subr.bf16.mxu0 %v436
    %2034 = vmatpush1.bf16.msra.mxu0 %v435
    %2035 = vmatprep.subr.bf16.mxu0 0
    %2036 = vmatpush2.bf16.msra.mxu0 0
    %2037 = vmatprep.subr.bf16.mxu0 0
    %2038 = vmatpush2.bf16.msra.mxu0 0
    %2039 = vmatprep.subr.bf16.mxu0 0
    %2040 = vmatpush2.bf16.msra.mxu0 0
    %2041 = vmatprep.subr.bf16.mxu0 0
    %2042 = vmatpush2.bf16.msra.mxu0 0
    %2043 = vmatprep.subr.bf16.mxu0 0
    %2044 = vmatpush2.bf16.msra.mxu0 0
    %2045 = vmatprep.subr.bf16.mxu0 0
    %2046 = vmatpush2.bf16.msra.mxu0 0
    %2047 = vmatprep.subr.bf16.mxu0 0
    %2048 = vmatpush2.bf16.msra.mxu0 0
    %2049 = vmatprep.subr.bf16.mxu0 0
    %2050 = vmatpush2.bf16.msra.mxu0 0
    %2051 = vmatprep.mubr.bf16.mxu0 0
    %2052 = vmatmul.mubr.bf16.gmra.mxu0 %v2017
    %v2053 = vpop.f32.mrf.mxu0
    %v2054 = vadd.f32 %v392, %v2053
    %v2055 = vpop.f32.mrf.mxu0
    %v2056 = vadd.f32 %v396, %v2055
    %v2057 = vpop.f32.mrf.mxu0
    %v2058 = vpop.f32.mrf.mxu0
    %2059 = vdwg.mxu0
    %v2060 = vxor.u32 %v2054, 2147483648
    %v2061 = vxor.u32 %v2056, 2147483648
    %v2062 = vmul.f32 %v2060, 1.442695
    %v2063 = vpow.pop %v2062
    %v2064 = vmul.f32 %v2061, 1.442695
    %v2065 = vpow.pop %v2064
    %v2066 = vadd.f32 %v2063, 1.0
    %v2067 = vadd.f32 %v2065, 1.0
    %v2068 = vrcp.pop %v2066
    %v2069 = vmul.f32 1.0, %v2068
    %v2070 = vrcp.pop %v2067
    %v2071 = vmul.f32 1.0, %v2070
    %v2072 = vtanh.pop %v2056
    %v2073 = vmul.f32 %v2069, %v1924
    %2075 = vrot.lane.b32.xlu0 %v2072, 64
    %v2076 = vpop.permute.xlu0 %2075
    %v2078 = vmul.f32 %v2069, %v2076
    %2080 = vrot.lane.b32.xlu0 %v2078, 64
    %v2081 = vpop.permute.xlu0 %2080
    %v2083 = vadd.f32 %v2073, %v2081
    %v2084 = vtanh.pop %v2083
    %2086 = vrot.lane.b32.xlu0 %v2084, 64
    %v2087 = vpop.permute.xlu0 %2086
    %v2089 = vmul.f32 %v2071, %v2087
    %s2090 = scalar_lea.vmem [#allocation4], 56
    %2091 = vst.msk [vmem:[%s2090] sm:$0xff] %vm534, %v2089
    %v2092 = vld [vmem:[%s1931] sm:$0xff]
    %v2093 = vsel %vm534, %v2092, %v2002
    %v2094 = vpack.c.bf16 %v2093, %v2093
    %v2096 = vsel %vm459, %v2094, 0
    %2098 = vmatprep.subr.bf16.mxu0 0
    %2099 = vmatpush1.bf16.msra.mxu0 0
    %2100 = vmatprep.subr.bf16.mxu0 0
    %2101 = vmatpush1.bf16.msra.mxu0 0
    %2102 = vmatprep.subr.bf16.mxu0 0
    %2103 = vmatpush1.bf16.msra.mxu0 %v735
    %2104 = vmatprep.subr.bf16.mxu0 0
    %2105 = vmatpush1.bf16.msra.mxu0 %v734
    %2106 = vmatprep.subr.bf16.mxu0 0
    %2107 = vmatpush1.bf16.msra.mxu0 %v733
    %2108 = vmatprep.subr.bf16.mxu0 0
    %2109 = vmatpush1.bf16.msra.mxu0 %v732
    %2110 = vmatprep.subr.bf16.mxu0 0
    %2111 = vmatpush1.bf16.msra.mxu0 %v731
    %2112 = vmatprep.subr.bf16.mxu0 0
    %2113 = vmatpush1.bf16.msra.mxu0 %v730
    %2114 = vmatprep.subr.bf16.mxu0 0
    %2115 = vmatpush2.bf16.msra.mxu0 0
    %2116 = vmatprep.subr.bf16.mxu0 0
    %2117 = vmatpush2.bf16.msra.mxu0 0
    %2118 = vmatprep.subr.bf16.mxu0 0
    %2119 = vmatpush2.bf16.msra.mxu0 0
    %2120 = vmatprep.subr.bf16.mxu0 0
    %2121 = vmatpush2.bf16.msra.mxu0 0
    %2122 = vmatprep.subr.bf16.mxu0 0
    %2123 = vmatpush2.bf16.msra.mxu0 0
    %2124 = vmatprep.subr.bf16.mxu0 0
    %2125 = vmatpush2.bf16.msra.mxu0 0
    %2126 = vmatprep.subr.bf16.mxu0 0
    %2127 = vmatpush2.bf16.msra.mxu0 0
    %2128 = vmatprep.subr.bf16.mxu0 0
    %2129 = vmatpush2.bf16.msra.mxu0 0
    %2130 = vmatprep.mubr.bf16.mxu0 0
    %2131 = vmatmul.mubr.bf16.gmra.mxu0 %v2096
    %v2132 = vpop.f32.mrf.mxu0
    %v2133 = vadd.f32 %v705, %v2132
    %v2134 = vpop.f32.mrf.mxu0
    %v2135 = vpop.f32.mrf.mxu0
    %v2136 = vpop.f32.mrf.mxu0
    %2137 = vdwg.mxu0
    %v2138 = vxor.u32 %v2133, 2147483648
    %v2139 = vmul.f32 %v2138, 1.442695
    %v2140 = vpow.pop %v2139
    %v2141 = vadd.f32 %v2140, 1.0
    %v2142 = vrcp.pop %v2141
    %v2143 = vmul.f32 1.0, %v2142
    %v2144 = vtanh.pop %v2133
    %v2145 = vmul.f32 %v2143, %v1996
    %2147 = vrot.lane.b32.xlu0 %v2144, 32
    %v2148 = vpop.permute.xlu0 %2147
    %v2150 = vmul.f32 %v2143, %v2148
    %2152 = vrot.lane.b32.xlu0 %v2150, 32
    %v2153 = vpop.permute.xlu0 %2152
    %v2155 = vadd.f32 %v2145, %v2153
    %v2156 = vtanh.pop %v2155
    %2158 = vrot.lane.b32.xlu0 %v2156, 32
    %v2159 = vpop.permute.xlu0 %2158
    %v2161 = vmul.f32 %v2143, %v2159
    %2163 = vrot.lane.b32.xlu0 %v2161, 64
    %v2164 = vpop.permute.xlu0 %2163
    %s2166 = scalar_lea.vmem [#allocation5], 48
    %2167 = vst.msk [vmem:[%s2166] sm:$0xff] %vm231, %v2164
    %v2168 = vld [vmem:[%s2090] sm:$0xff]
    %v2169 = vsel %vm534, %v2168, %v2161
    %v2170 = vpack.c.bf16 %v2169, %v2169
    %v2172 = vsel %vm459, %v2170, 0
    %2174 = vmatprep.subr.bf16.mxu0 0
    %2175 = vmatpush1.bf16.msra.mxu0 0
    %2176 = vmatprep.subr.bf16.mxu0 0
    %2177 = vmatpush1.bf16.msra.mxu0 0
    %2178 = vmatprep.subr.bf16.mxu0 0
    %2179 = vmatpush1.bf16.msra.mxu0 %v735
    %2180 = vmatprep.subr.bf16.mxu0 0
    %2181 = vmatpush1.bf16.msra.mxu0 %v734
    %2182 = vmatprep.subr.bf16.mxu0 0
    %2183 = vmatpush1.bf16.msra.mxu0 %v733
    %2184 = vmatprep.subr.bf16.mxu0 0
    %2185 = vmatpush1.bf16.msra.mxu0 %v732
    %2186 = vmatprep.subr.bf16.mxu0 0
    %2187 = vmatpush1.bf16.msra.mxu0 %v731
    %2188 = vmatprep.subr.bf16.mxu0 0
    %2189 = vmatpush1.bf16.msra.mxu0 %v730
    %2190 = vmatprep.subr.bf16.mxu0 0
    %2191 = vmatpush2.bf16.msra.mxu0 0
    %2192 = vmatprep.subr.bf16.mxu0 0
    %2193 = vmatpush2.bf16.msra.mxu0 0
    %2194 = vmatprep.subr.bf16.mxu0 0
    %2195 = vmatpush2.bf16.msra.mxu0 0
    %2196 = vmatprep.subr.bf16.mxu0 0
    %2197 = vmatpush2.bf16.msra.mxu0 0
    %2198 = vmatprep.subr.bf16.mxu0 0
    %2199 = vmatpush2.bf16.msra.mxu0 0
    %2200 = vmatprep.subr.bf16.mxu0 0
    %2201 = vmatpush2.bf16.msra.mxu0 0
    %2202 = vmatprep.subr.bf16.mxu0 0
    %2203 = vmatpush2.bf16.msra.mxu0 0
    %2204 = vmatprep.subr.bf16.mxu0 0
    %2205 = vmatpush2.bf16.msra.mxu0 0
    %2206 = vmatprep.mubr.bf16.mxu0 0
    %2207 = vmatmul.mubr.bf16.gmra.mxu0 %v2172
    %v2208 = vpop.f32.mrf.mxu0
    %v2209 = vadd.f32 %v705, %v2208
    %v2210 = vpop.f32.mrf.mxu0
    %v2211 = vpop.f32.mrf.mxu0
    %v2212 = vpop.f32.mrf.mxu0
    %2213 = vdwg.mxu0
    %v2214 = vxor.u32 %v2209, 2147483648
    %v2215 = vmul.f32 %v2214, 1.442695
    %v2216 = vpow.pop %v2215
    %v2217 = vadd.f32 %v2216, 1.0
    %v2218 = vrcp.pop %v2217
    %v2219 = vmul.f32 1.0, %v2218
    %v2220 = vtanh.pop %v2209
    %v2221 = vmul.f32 %v2219, %v2155
    %2223 = vrot.lane.b32.xlu0 %v2220, 32
    %v2224 = vpop.permute.xlu0 %2223
    %v2226 = vmul.f32 %v2219, %v2224
    %2228 = vrot.lane.b32.xlu0 %v2226, 32
    %v2229 = vpop.permute.xlu0 %2228
    %v2231 = vadd.f32 %v2221, %v2229
    %v2232 = vtanh.pop %v2231
    %2234 = vrot.lane.b32.xlu0 %v2232, 32
    %v2235 = vpop.permute.xlu0 %2234
    %v2237 = vmul.f32 %v2219, %v2235
    %2239 = vrot.lane.b32.xlu0 %v2237, 64
    %v2240 = vpop.permute.xlu0 %2239
    %s2242 = scalar_lea.vmem [#allocation5], 56
    %2243 = vst.msk [vmem:[%s2242] sm:$0xff] %vm231, %v2240
    %v2244 = vld [vmem:[#allocation5] sm:$0xff]
    %v2245 = vld [vmem:[#allocation5 + $0x8] sm:$0xff]
    %v2246 = vld [vmem:[#allocation5 + $0x10] sm:$0xff]
    %v2247 = vld [vmem:[#allocation5 + $0x18] sm:$0xff]
    %v2248 = vld [vmem:[#allocation5 + $0x20] sm:$0xff]
    %v2249 = vld [vmem:[#allocation5 + $0x28] sm:$0xff]
    %v2250 = vld [vmem:[#allocation5 + $0x30] sm:$0xff]
    %v2251 = vld [vmem:[#allocation5 + $0x38] sm:$0xff]
    %v2252 = vpack.c.bf16 %v2245, %v2244
    %v2253 = vpack.c.bf16 %v2247, %v2246
    %v2254 = vpack.c.bf16 %v2249, %v2248
    %v2255 = vpack.c.bf16 %v2251, %v2250
    %v2256 = vlaneseq
    %v2257 = vshrl.u32 %v2256, 7
    %v2258 = vsub.s32 0, %v2257
    %v2259 = vrot.slane %v93, %v2258
    %v2264 = vunpack.c.l.b16 %v85
    %v2265 = vunpack.c.l.b16 %v86
    %v2266 = vunpack.c.l.b16 %v87
    %v2267 = vunpack.c.l.b16 %v88
    %v2268 = vpack.c.b16 %v2265, %v2264
    %v2269 = vpack.c.b16 %v2267, %v2266
    %v2273 = vsel %vm231, %v2252, 0
    %v2276 = vsel %vm231, %v2253, 0
    %v2279 = vsel %vm231, %v2254, 0
    %v2282 = vsel %vm231, %v2255, 0
    %2284 = vmatprep.subr.bf16.mxu0 0
    %2285 = vmatpush1.bf16.msra.mxu0 0
    %2286 = vmatprep.subr.bf16.mxu0 0
    %2287 = vmatpush1.bf16.msra.mxu0 0
    %2288 = vmatprep.subr.bf16.mxu0 0
    %2289 = vmatpush1.bf16.msra.mxu0 0
    %2290 = vmatprep.subr.bf16.mxu0 0
    %2291 = vmatpush1.bf16.msra.mxu0 0
    %2292 = vmatprep.subr.bf16.mxu0 0
    %2293 = vmatpush1.bf16.msra.mxu0 0
    %2294 = vmatprep.subr.bf16.mxu0 0
    %2295 = vmatpush1.bf16.msra.mxu0 0
    %2296 = vmatprep.subr.bf16.mxu0 0
    %2297 = vmatpush1.bf16.msra.mxu0 %v2269
    %2298 = vmatprep.subr.bf16.mxu0 0
    %2299 = vmatpush1.bf16.msra.mxu0 %v2268
    %2300 = vmatprep.subr.bf16.mxu0 0
    %2301 = vmatpush2.bf16.msra.mxu0 0
    %2302 = vmatprep.subr.bf16.mxu0 0
    %2303 = vmatpush2.bf16.msra.mxu0 0
    %2304 = vmatprep.subr.bf16.mxu0 0
    %2305 = vmatpush2.bf16.msra.mxu0 0
    %2306 = vmatprep.subr.bf16.mxu0 0
    %2307 = vmatpush2.bf16.msra.mxu0 0
    %2308 = vmatprep.subr.bf16.mxu0 0
    %2309 = vmatpush2.bf16.msra.mxu0 0
    %2310 = vmatprep.subr.bf16.mxu0 0
    %2311 = vmatpush2.bf16.msra.mxu0 0
    %2312 = vmatprep.subr.bf16.mxu0 0
    %2313 = vmatpush2.bf16.msra.mxu0 0
    %2314 = vmatprep.subr.bf16.mxu0 0
    %2315 = vmatpush2.bf16.msra.mxu0 0
    %2316 = vmatprep.mubr.bf16.mxu0 0
    %2317 = vmatmul.mubr.bf16.gmra.mxu0 %v2273
    %v2318 = vpop.f32.mrf.mxu0
    %v2319 = vadd.f32 %v2259, %v2318
    %v2320 = vpop.f32.mrf.mxu0
    %v2321 = vpop.f32.mrf.mxu0
    %v2322 = vadd.f32 %v2259, %v2321
    %v2323 = vpop.f32.mrf.mxu0
    %2324 = vmatprep.mubr.bf16.mxu0 0
    %2325 = vmatmul.mubr.bf16.gmra.mxu0 %v2276
    %v2326 = vpop.f32.mrf.mxu0
    %v2327 = vadd.f32 %v2259, %v2326
    %v2328 = vpop.f32.mrf.mxu0
    %v2329 = vpop.f32.mrf.mxu0
    %v2330 = vadd.f32 %v2259, %v2329
    %v2331 = vpop.f32.mrf.mxu0
    %2332 = vmatprep.mubr.bf16.mxu0 0
    %2333 = vmatmul.mubr.bf16.gmra.mxu0 %v2279
    %v2334 = vpop.f32.mrf.mxu0
    %v2335 = vadd.f32 %v2259, %v2334
    %v2336 = vpop.f32.mrf.mxu0
    %v2337 = vpop.f32.mrf.mxu0
    %v2338 = vadd.f32 %v2259, %v2337
    %v2339 = vpop.f32.mrf.mxu0
    %2340 = vmatprep.mubr.bf16.mxu0 0
    %2341 = vmatmul.mubr.bf16.gmra.mxu0 %v2282
    %v2342 = vpop.f32.mrf.mxu0
    %v2343 = vadd.f32 %v2259, %v2342
    %v2344 = vpop.f32.mrf.mxu0
    %v2345 = vpop.f32.mrf.mxu0
    %v2346 = vadd.f32 %v2259, %v2345
    %v2347 = vpop.f32.mrf.mxu0
    %2348 = vdwg.mxu0
    %2349 = vst [vmem:[#allocation12] sm:$0xff] %v2319
    %2350 = vst [vmem:[#allocation12 + $0x8] sm:$0xff] %v2322
    %2351 = vst [vmem:[#allocation12 + $0x10] sm:$0xff] %v2327
    %2352 = vst [vmem:[#allocation12 + $0x18] sm:$0xff] %v2330
    %2353 = vst [vmem:[#allocation12 + $0x20] sm:$0xff] %v2335
    %2354 = vst [vmem:[#allocation12 + $0x28] sm:$0xff] %v2338
    %2355 = vst [vmem:[#allocation12 + $0x30] sm:$0xff] %v2343
    %2356 = vst [vmem:[#allocation12 + $0x38] sm:$0xff] %v2346
    // Predicated region
    $region26: #{tpu_custom_call.1} parent=1 // pred_check
      _
    $region27: #{tpu_custom_call.1} parent=1 // pred_check_branch
      %2358 = sbr.rel (0) target = $region29
    $region28: #{tpu_custom_call.1} parent=1 // pred_region
      %s2360 = ssub.s32 1024, 1024
      %2361 = vsyncadd [#allocation8], %s2360
      %s2362 = sshll.u32 [#allocation12], 4
      %s2363 = int_to_ptr.vmem [resolvable:$true] %s2362
      %2368 = dma.vmem_to_hbm [thread:$0]  %s2363, 1024, %s3, [#allocation8], 128, 128, 8
    $region29: #{tpu_custom_call.1} parent=1 // pred_fallthru
      _
    // Predicated region
    $region30: #{tpu_custom_call.1} parent=1 // pred_check
      _
    $region31: #{tpu_custom_call.1} parent=1 // pred_check_branch
      %2370 = sbr.rel (0) target = $region33
    $region32: #{tpu_custom_call.1} parent=1 // pred_region
      %2371 = dma.done [#allocation8], 1024
    $region33: #{tpu_custom_call.1} parent=1 // pred_fallthru
      _
    %2372 = vsyncpa [#allocation7], 1
    %2373 = vsyncpa [#allocation10], 1
    %2374 = vsyncpa [#allocation8], 1

</llo_original>
